<compile_context>
chip_gen: v7x
topology: tpu7x:2x2x1
jax: 0.10.0
libtpu: 0.0.40
codegen_flags: <defaults>
</compile_context>

<pallas_src>
import functools
import math

import jax
import jax.numpy as jnp
from jax.experimental import pallas as pl
from jax.experimental.pallas import tpu as pltpu


# ---------------------------------------------------------------------------
# Fused Pallas kernel: 3 LSTM layers (wavefront) + Linear head + softmax
# ---------------------------------------------------------------------------
def _fused_lstm_kernel(x_ref, w_ref, b_ref, lw_ref, lb_ref, out_ref, xg_ref,
                       *, L, H, Np, in_dim):
    f32 = jnp.float32
    dot = functools.partial(jnp.dot, preferred_element_type=f32)

    # Packed weight slab rows: [W1_ih | W1_hh | W2_ih | W2_hh | W3_ih | W3_hh]
    # (all offsets are multiples of 8 -> sublane-aligned static slices).
    r = in_dim
    w1i = w_ref[0:in_dim, :]
    w1h = w_ref[r:r + H, :]; r += H
    w2i = w_ref[r:r + H, :]; r += H
    w2h = w_ref[r:r + H, :]; r += H
    w3i = w_ref[r:r + H, :]; r += H
    w3h = w_ref[r:r + H, :]

    # Biases pre-broadcast to full Np-row tiles -> exact-shape adds, no broadcast.
    b1 = b_ref[0 * Np:1 * Np, :]
    b2 = b_ref[1 * Np:2 * Np, :]
    b3 = b_ref[2 * Np:3 * Np, :]

    # Hoisted non-recurrent input projection for layer 1: ONE MXU matmul over the
    # whole sequence, staged in VMEM scratch (keeps it out of vregs for the loop).
    xg_ref[...] = dot(x_ref[...], w1i)

    def cell(gates, c):
        # Gate columns pre-permuted to (i, f, o, g): one sigmoid over 3H, one tanh.
        sig = jax.nn.sigmoid(gates[:, :3 * H])
        g = jnp.tanh(gates[:, 3 * H:])
        i = sig[:, 0 * H:1 * H]
        f = sig[:, 1 * H:2 * H]
        o = sig[:, 2 * H:3 * H]
        c_new = f * c + i * g
        h_new = o * jnp.tanh(c_new)
        return h_new, c_new

    z = jnp.zeros((Np, H), f32)
    h1, c1, h2, c2, h3, c3 = z, z, z, z, z, z

    # Layer-wavefront recurrence, statically unrolled (L+2 steps).  At step s the
    # three active cells are mutually independent (layer2/3 consume the *previous*
    # step's h1/h2), so their matmuls/activations pipeline through MXU/EUP.
    for s in range(L + 2):
        g1 = g2 = g3 = None
        if s < L:                         # layer 1, time t = s
            g1 = xg_ref[s * Np:(s + 1) * Np, :] + b1 + dot(h1, w1h)
        if 1 <= s <= L:                   # layer 2, time t = s - 1 (uses old h1)
            g2 = b2 + dot(h1, w2i) + dot(h2, w2h)
        if 2 <= s:                        # layer 3, time t = s - 2 (uses old h2)
            g3 = b3 + dot(h2, w3i) + dot(h3, w3h)
        if g1 is not None:
            h1, c1 = cell(g1, c1)
        if g2 is not None:
            h2, c2 = cell(g2, c2)
        if g3 is not None:
            h3, c3 = cell(g3, c3)

    # Fused head: Linear(H -> out_dim) + numerically stable softmax, last step only.
    logits = dot(h3, lw_ref[...]) + lb_ref[...]
    m = jnp.max(logits, axis=-1, keepdims=True)
    e = jnp.exp(logits - m)
    out_ref[...] = e / jnp.sum(e, axis=-1, keepdims=True)


# ---------------------------------------------------------------------------
# One-time weight packing (hoisted out of the per-call jitted path)
# ---------------------------------------------------------------------------
def _reorder_gates(w):
    """Permute gate columns from torch order (i, f, g, o) to kernel order (i, f, o, g)."""
    i, f, g, o = jnp.split(w, 4, axis=-1)
    return jnp.concatenate([i, f, o, g], axis=-1)


def pack_params(params, hidden_dim, batch_rows=8):
    """Pack the 11 raw operands into 4 lane-aligned slabs; called ONCE, outside jit."""
    H = hidden_dim
    w_rows, b_rows = [], []
    for layer in ("lstm1", "lstm2", "lstm3"):
        wih, whh, b = params[layer]
        w_rows += [_reorder_gates(wih), _reorder_gates(whh)]
        b_rows.append(jnp.broadcast_to(_reorder_gates(b), (batch_rows, 4 * H)))
    return {
        "wcat": jnp.concatenate(w_rows, axis=0),   # (in_dim + 5H, 4H)
        "bcat": jnp.concatenate(b_rows, axis=0),   # (3*batch_rows, 4H)
        "lw": params["linear_w"],                  # (H, out_dim)
        "lb": params["linear_b"],                  # (1, out_dim)
    }


# ---------------------------------------------------------------------------
# Wrapper (per-call path: only x relayout + one pallas_call)
# ---------------------------------------------------------------------------
def my_lstm_forward(x, packed, in_dim, hidden_dim, out_dim=2):
    """x: (N, ...) with numel = N * L * in_dim (PyTorch batch-first).
    Returns (N, out_dim) softmax probs at the last timestep."""
    N = x.shape[0]
    L = x.size // (N * in_dim)
    H = hidden_dim

    z = x.reshape(N, L, in_dim).astype(jnp.float32)
    Np = max(8, ((N + 7) // 8) * 8)               # pad batch to a full sublane tile
    if Np != N:
        z = jnp.pad(z, ((0, Np - N), (0, 0), (0, 0)))
    # Time-major rows (row = t*Np + n): every per-step slice inside the kernel is a
    # contiguous, sublane-aligned 8-row block.  This tiny relayout folds into jit.
    z = jnp.transpose(z, (1, 0, 2)).reshape(L * Np, in_dim)

    assert packed["bcat"].shape[0] == 3 * Np, "packed params built for different padded batch"

    out = pl.pallas_call(
        functools.partial(_fused_lstm_kernel, L=L, H=H, Np=Np, in_dim=in_dim),
        out_shape=jax.ShapeDtypeStruct((Np, out_dim), jnp.float32),
        in_specs=[pl.BlockSpec(memory_space=pltpu.MemorySpace.VMEM)] * 5,
        out_specs=pl.BlockSpec(memory_space=pltpu.MemorySpace.VMEM),
        scratch_shapes=[pltpu.VMEM((L * Np, 4 * H), jnp.float32)],
    )(z, packed["wcat"], packed["bcat"], packed["lw"], packed["lb"])
    return out[:N]


def init_params(key, in_dim, hidden_dim, out_dim):
    """Deterministic init mirroring torch LSTM/Linear shapes.
    Stored pre-transposed for right-multiplication (canonical gate order i,f,g,o)."""
    params = {}
    dims = [in_dim, hidden_dim, hidden_dim]
    k = 1.0 / math.sqrt(hidden_dim)
    keys = jax.random.split(key, 3 * 4 + 2)
    ki = 0
    for layer, d in enumerate(dims, start=1):
        wih = jax.random.uniform(keys[ki], (d, 4 * hidden_dim), jnp.float32, -k, k); ki += 1
        whh = jax.random.uniform(keys[ki], (hidden_dim, 4 * hidden_dim), jnp.float32, -k, k); ki += 1
        bih = jax.random.uniform(keys[ki], (1, 4 * hidden_dim), jnp.float32, -k, k); ki += 1
        bhh = jax.random.uniform(keys[ki], (1, 4 * hidden_dim), jnp.float32, -k, k); ki += 1
        params[f"lstm{layer}"] = (wih, whh, bih + bhh)   # biases add, fold them
    kl = 1.0 / math.sqrt(hidden_dim)
    params["linear_w"] = jax.random.uniform(keys[ki], (hidden_dim, out_dim), jnp.float32, -kl, kl); ki += 1
    params["linear_b"] = jax.random.uniform(keys[ki], (1, out_dim), jnp.float32, -kl, kl)
    return params


# ---------------------------------------------------------------------------
# Pure-JAX reference (correctness check only; canonical torch gate order)
# ---------------------------------------------------------------------------
def _ref_forward(x, params, in_dim, hidden_dim):
    N = x.shape[0]
    L = x.size // (N * in_dim)
    z = x.reshape(N, L, in_dim).astype(jnp.float32)

    def run_layer(z_nld, wih, whh, b):
        H = hidden_dim

        def step(carry, xt):
            h, c = carry
            gates = xt @ wih + h @ whh + b
            i = jax.nn.sigmoid(gates[:, :H])
            f = jax.nn.sigmoid(gates[:, H:2 * H])
            g = jnp.tanh(gates[:, 2 * H:3 * H])
            o = jax.nn.sigmoid(gates[:, 3 * H:])
            c = f * c + i * g
            h = o * jnp.tanh(c)
            return (h, c), h

        init = (jnp.zeros((N, H), jnp.float32), jnp.zeros((N, H), jnp.float32))
        _, hs = jax.lax.scan(step, init, jnp.transpose(z_nld, (1, 0, 2)))
        return jnp.transpose(hs, (1, 0, 2))

    for layer in ("lstm1", "lstm2", "lstm3"):
        wih, whh, b = params[layer]
        z = run_layer(z, wih, whh, b)
    logits = z[:, -1] @ params["linear_w"] + params["linear_b"]
    return jax.nn.softmax(logits, axis=-1)


# ---------------------------------------------------------------------------
if __name__ == "__main__":
    # MyLSTM(in_shape=(16,), hidden_dim=32), input x: (N=2, L=8, in_dim=16)
    IN_DIM, HIDDEN, OUT_DIM = 16, 32, 2
    N, L = 2, 8
    NP = max(8, ((N + 7) // 8) * 8)

    key = jax.random.PRNGKey(0)
    kx, kp = jax.random.split(key)
    x = jax.random.normal(kx, (N, L, IN_DIM), dtype=jnp.float32)
    params = init_params(kp, IN_DIM, HIDDEN, OUT_DIM)

    # One-time weight prep, hoisted out of the per-call jitted path.
    packed = pack_params(params, HIDDEN, batch_rows=NP)

    fwd = jax.jit(functools.partial(my_lstm_forward, in_dim=IN_DIM,
                                    hidden_dim=HIDDEN, out_dim=OUT_DIM))
    out = jax.block_until_ready(fwd(x, packed))

    ref = _ref_forward(x, params, IN_DIM, HIDDEN)
    assert out.shape == (N, OUT_DIM), out.shape
    assert jnp.allclose(out, ref, atol=1e-5, rtol=1e-5), (out, ref)
    print("KERNEL_OK")
</pallas_src>

<mosaic_0001>
module attributes {stable_mosaic.version = 11 : i64} {
  func.func @_fused_lstm_kernel(%arg0: memref<64x16xf32, #tpu.memory_space<vmem>>, %arg1: memref<176x128xf32, #tpu.memory_space<vmem>>, %arg2: memref<24x128xf32, #tpu.memory_space<vmem>>, %arg3: memref<32x2xf32, #tpu.memory_space<vmem>>, %arg4: memref<1x2xf32, #tpu.memory_space<vmem>>, %arg5: memref<8x2xf32, #tpu.memory_space<vmem>>, %arg6: memref<64x128xf32, #tpu.memory_space<vmem>>) attributes {dimension_semantics = [], scalar_prefetch = 0 : i64, scratch_operands = 1 : i64, tpu.core_type = #tpu.core_type<tc>} {
    %c0 = arith.constant 0 : index
    %c0_0 = arith.constant 0 : index
    %0 = vector.load %arg1[%c0, %c0_0] : memref<176x128xf32, #tpu.memory_space<vmem>>, vector<16x128xf32>
    %c16 = arith.constant 16 : index
    %c0_1 = arith.constant 0 : index
    %1 = vector.load %arg1[%c16, %c0_1] : memref<176x128xf32, #tpu.memory_space<vmem>>, vector<32x128xf32>
    %c48 = arith.constant 48 : index
    %c0_2 = arith.constant 0 : index
    %2 = vector.load %arg1[%c48, %c0_2] : memref<176x128xf32, #tpu.memory_space<vmem>>, vector<32x128xf32>
    %c80 = arith.constant 80 : index
    %c0_3 = arith.constant 0 : index
    %3 = vector.load %arg1[%c80, %c0_3] : memref<176x128xf32, #tpu.memory_space<vmem>>, vector<32x128xf32>
    %c112 = arith.constant 112 : index
    %c0_4 = arith.constant 0 : index
    %4 = vector.load %arg1[%c112, %c0_4] : memref<176x128xf32, #tpu.memory_space<vmem>>, vector<32x128xf32>
    %c144 = arith.constant 144 : index
    %c0_5 = arith.constant 0 : index
    %5 = vector.load %arg1[%c144, %c0_5] : memref<176x128xf32, #tpu.memory_space<vmem>>, vector<32x128xf32>
    %c0_6 = arith.constant 0 : index
    %c0_7 = arith.constant 0 : index
    %6 = vector.load %arg2[%c0_6, %c0_7] : memref<24x128xf32, #tpu.memory_space<vmem>>, vector<8x128xf32>
    %c8 = arith.constant 8 : index
    %c0_8 = arith.constant 0 : index
    %7 = vector.load %arg2[%c8, %c0_8] : memref<24x128xf32, #tpu.memory_space<vmem>>, vector<8x128xf32>
    %c16_9 = arith.constant 16 : index
    %c0_10 = arith.constant 0 : index
    %8 = vector.load %arg2[%c16_9, %c0_10] : memref<24x128xf32, #tpu.memory_space<vmem>>, vector<8x128xf32>
    %c0_11 = arith.constant 0 : index
    %c0_12 = arith.constant 0 : index
    %9 = vector.load %arg0[%c0_11, %c0_12] : memref<64x16xf32, #tpu.memory_space<vmem>>, vector<64x16xf32>
    %cst = arith.constant dense<0.000000e+00> : vector<64x128xf32>
    %10 = tpu.matmul %9, %0, %cst {dimension_numbers = #tpu.dot_dimension_numbers<[1], [0], [0], [1], [0, 0, 1, 1], [], []>} : vector<64x16xf32>, vector<16x128xf32>, vector<64x128xf32> -> vector<64x128xf32>
    %c0_13 = arith.constant 0 : index
    %c0_14 = arith.constant 0 : index
    %11 = vector.load %arg6[%c0_13, %c0_14] : memref<64x128xf32, #tpu.memory_space<vmem>>, vector<64x128xf32>
    tpu.vector_store %arg6[%c0_13, %c0_14], %10 {strides = array<i32>} : memref<64x128xf32, #tpu.memory_space<vmem>>, vector<64x128xf32>,
    %cst_15 = arith.constant 0.000000e+00 : f32
    %12 = vector.broadcast %cst_15 : f32 to vector<8x32xf32>
    %c0_16 = arith.constant 0 : index
    %c0_17 = arith.constant 0 : index
    %13 = vector.load %arg6[%c0_16, %c0_17] : memref<64x128xf32, #tpu.memory_space<vmem>>, vector<8x128xf32>
    %14 = arith.addf %13, %6 : vector<8x128xf32>
    %cst_18 = arith.constant dense<0.000000e+00> : vector<8x128xf32>
    %15 = tpu.matmul %12, %1, %cst_18 {dimension_numbers = #tpu.dot_dimension_numbers<[1], [0], [0], [1], [0, 0, 1, 1], [], []>} : vector<8x32xf32>, vector<32x128xf32>, vector<8x128xf32> -> vector<8x128xf32>
    %16 = arith.addf %14, %15 : vector<8x128xf32>
    %17 = vector.extract_strided_slice %16 {offsets = [0, 0], sizes = [8, 96], strides = [1, 1]} : vector<8x128xf32> to vector<8x96xf32>
    %18 = arith.negf %17 : vector<8x96xf32>
    %19 = math.exp %18 : vector<8x96xf32>
    %cst_19 = arith.constant 1.000000e+00 : f32
    %20 = vector.broadcast %cst_19 : f32 to vector<8x96xf32>
    %21 = arith.addf %20, %19 : vector<8x96xf32>
    %22 = arith.divf %20, %21 : vector<8x96xf32>
    %23 = vector.extract_strided_slice %16 {offsets = [0, 96], sizes = [8, 32], strides = [1, 1]} : vector<8x128xf32> to vector<8x32xf32>
    %24 = math.tanh %23 : vector<8x32xf32>
    %25 = vector.extract_strided_slice %22 {offsets = [0, 0], sizes = [8, 32], strides = [1, 1]} : vector<8x96xf32> to vector<8x32xf32>
    %26 = vector.extract_strided_slice %22 {offsets = [0, 32], sizes = [8, 32], strides = [1, 1]} : vector<8x96xf32> to vector<8x32xf32>
    %27 = vector.extract_strided_slice %22 {offsets = [0, 64], sizes = [8, 32], strides = [1, 1]} : vector<8x96xf32> to vector<8x32xf32>
    %28 = arith.mulf %26, %12 : vector<8x32xf32>
    %29 = arith.mulf %25, %24 : vector<8x32xf32>
    %30 = arith.addf %28, %29 : vector<8x32xf32>
    %31 = math.tanh %30 : vector<8x32xf32>
    %32 = arith.mulf %27, %31 : vector<8x32xf32>
    %c8_20 = arith.constant 8 : index
    %c0_21 = arith.constant 0 : index
    %33 = vector.load %arg6[%c8_20, %c0_21] : memref<64x128xf32, #tpu.memory_space<vmem>>, vector<8x128xf32>
    %34 = arith.addf %33, %6 : vector<8x128xf32>
    %cst_22 = arith.constant dense<0.000000e+00> : vector<8x128xf32>
    %35 = tpu.matmul %32, %1, %cst_22 {dimension_numbers = #tpu.dot_dimension_numbers<[1], [0], [0], [1], [0, 0, 1, 1], [], []>} : vector<8x32xf32>, vector<32x128xf32>, vector<8x128xf32> -> vector<8x128xf32>
    %36 = arith.addf %34, %35 : vector<8x128xf32>
    %cst_23 = arith.constant dense<0.000000e+00> : vector<8x128xf32>
    %37 = tpu.matmul %32, %2, %cst_23 {dimension_numbers = #tpu.dot_dimension_numbers<[1], [0], [0], [1], [0, 0, 1, 1], [], []>} : vector<8x32xf32>, vector<32x128xf32>, vector<8x128xf32> -> vector<8x128xf32>
    %38 = arith.addf %7, %37 : vector<8x128xf32>
    %cst_24 = arith.constant dense<0.000000e+00> : vector<8x128xf32>
    %39 = tpu.matmul %12, %3, %cst_24 {dimension_numbers = #tpu.dot_dimension_numbers<[1], [0], [0], [1], [0, 0, 1, 1], [], []>} : vector<8x32xf32>, vector<32x128xf32>, vector<8x128xf32> -> vector<8x128xf32>
    %40 = arith.addf %38, %39 : vector<8x128xf32>
    %41 = vector.extract_strided_slice %36 {offsets = [0, 0], sizes = [8, 96], strides = [1, 1]} : vector<8x128xf32> to vector<8x96xf32>
    %42 = arith.negf %41 : vector<8x96xf32>
    %43 = math.exp %42 : vector<8x96xf32>
    %cst_25 = arith.constant 1.000000e+00 : f32
    %44 = vector.broadcast %cst_25 : f32 to vector<8x96xf32>
    %45 = arith.addf %44, %43 : vector<8x96xf32>
    %46 = arith.divf %44, %45 : vector<8x96xf32>
    %47 = vector.extract_strided_slice %36 {offsets = [0, 96], sizes = [8, 32], strides = [1, 1]} : vector<8x128xf32> to vector<8x32xf32>
    %48 = math.tanh %47 : vector<8x32xf32>
    %49 = vector.extract_strided_slice %46 {offsets = [0, 0], sizes = [8, 32], strides = [1, 1]} : vector<8x96xf32> to vector<8x32xf32>
    %50 = vector.extract_strided_slice %46 {offsets = [0, 32], sizes = [8, 32], strides = [1, 1]} : vector<8x96xf32> to vector<8x32xf32>
    %51 = vector.extract_strided_slice %46 {offsets = [0, 64], sizes = [8, 32], strides = [1, 1]} : vector<8x96xf32> to vector<8x32xf32>
    %52 = arith.mulf %50, %30 : vector<8x32xf32>
    %53 = arith.mulf %49, %48 : vector<8x32xf32>
    %54 = arith.addf %52, %53 : vector<8x32xf32>
    %55 = math.tanh %54 : vector<8x32xf32>
    %56 = arith.mulf %51, %55 : vector<8x32xf32>
    %57 = vector.extract_strided_slice %40 {offsets = [0, 0], sizes = [8, 96], strides = [1, 1]} : vector<8x128xf32> to vector<8x96xf32>
    %58 = arith.negf %57 : vector<8x96xf32>
    %59 = math.exp %58 : vector<8x96xf32>
    %cst_26 = arith.constant 1.000000e+00 : f32
    %60 = vector.broadcast %cst_26 : f32 to vector<8x96xf32>
    %61 = arith.addf %60, %59 : vector<8x96xf32>
    %62 = arith.divf %60, %61 : vector<8x96xf32>
    %63 = vector.extract_strided_slice %40 {offsets = [0, 96], sizes = [8, 32], strides = [1, 1]} : vector<8x128xf32> to vector<8x32xf32>
    %64 = math.tanh %63 : vector<8x32xf32>
    %65 = vector.extract_strided_slice %62 {offsets = [0, 0], sizes = [8, 32], strides = [1, 1]} : vector<8x96xf32> to vector<8x32xf32>
    %66 = vector.extract_strided_slice %62 {offsets = [0, 32], sizes = [8, 32], strides = [1, 1]} : vector<8x96xf32> to vector<8x32xf32>
    %67 = vector.extract_strided_slice %62 {offsets = [0, 64], sizes = [8, 32], strides = [1, 1]} : vector<8x96xf32> to vector<8x32xf32>
    %68 = arith.mulf %66, %12 : vector<8x32xf32>
    %69 = arith.mulf %65, %64 : vector<8x32xf32>
    %70 = arith.addf %68, %69 : vector<8x32xf32>
    %71 = math.tanh %70 : vector<8x32xf32>
    %72 = arith.mulf %67, %71 : vector<8x32xf32>
    %c16_27 = arith.constant 16 : index
    %c0_28 = arith.constant 0 : index
    %73 = vector.load %arg6[%c16_27, %c0_28] : memref<64x128xf32, #tpu.memory_space<vmem>>, vector<8x128xf32>
    %74 = arith.addf %73, %6 : vector<8x128xf32>
    %cst_29 = arith.constant dense<0.000000e+00> : vector<8x128xf32>
    %75 = tpu.matmul %56, %1, %cst_29 {dimension_numbers = #tpu.dot_dimension_numbers<[1], [0], [0], [1], [0, 0, 1, 1], [], []>} : vector<8x32xf32>, vector<32x128xf32>, vector<8x128xf32> -> vector<8x128xf32>
    %76 = arith.addf %74, %75 : vector<8x128xf32>
    %cst_30 = arith.constant dense<0.000000e+00> : vector<8x128xf32>
    %77 = tpu.matmul %56, %2, %cst_30 {dimension_numbers = #tpu.dot_dimension_numbers<[1], [0], [0], [1], [0, 0, 1, 1], [], []>} : vector<8x32xf32>, vector<32x128xf32>, vector<8x128xf32> -> vector<8x128xf32>
    %78 = arith.addf %7, %77 : vector<8x128xf32>
    %cst_31 = arith.constant dense<0.000000e+00> : vector<8x128xf32>
    %79 = tpu.matmul %72, %3, %cst_31 {dimension_numbers = #tpu.dot_dimension_numbers<[1], [0], [0], [1], [0, 0, 1, 1], [], []>} : vector<8x32xf32>, vector<32x128xf32>, vector<8x128xf32> -> vector<8x128xf32>
    %80 = arith.addf %78, %79 : vector<8x128xf32>
    %cst_32 = arith.constant dense<0.000000e+00> : vector<8x128xf32>
    %81 = tpu.matmul %72, %4, %cst_32 {dimension_numbers = #tpu.dot_dimension_numbers<[1], [0], [0], [1], [0, 0, 1, 1], [], []>} : vector<8x32xf32>, vector<32x128xf32>, vector<8x128xf32> -> vector<8x128xf32>
    %82 = arith.addf %8, %81 : vector<8x128xf32>
    %cst_33 = arith.constant dense<0.000000e+00> : vector<8x128xf32>
    %83 = tpu.matmul %12, %5, %cst_33 {dimension_numbers = #tpu.dot_dimension_numbers<[1], [0], [0], [1], [0, 0, 1, 1], [], []>} : vector<8x32xf32>, vector<32x128xf32>, vector<8x128xf32> -> vector<8x128xf32>
    %84 = arith.addf %82, %83 : vector<8x128xf32>
    %85 = vector.extract_strided_slice %76 {offsets = [0, 0], sizes = [8, 96], strides = [1, 1]} : vector<8x128xf32> to vector<8x96xf32>
    %86 = arith.negf %85 : vector<8x96xf32>
    %87 = math.exp %86 : vector<8x96xf32>
    %cst_34 = arith.constant 1.000000e+00 : f32
    %88 = vector.broadcast %cst_34 : f32 to vector<8x96xf32>
    %89 = arith.addf %88, %87 : vector<8x96xf32>
    %90 = arith.divf %88, %89 : vector<8x96xf32>
    %91 = vector.extract_strided_slice %76 {offsets = [0, 96], sizes = [8, 32], strides = [1, 1]} : vector<8x128xf32> to vector<8x32xf32>
    %92 = math.tanh %91 : vector<8x32xf32>
    %93 = vector.extract_strided_slice %90 {offsets = [0, 0], sizes = [8, 32], strides = [1, 1]} : vector<8x96xf32> to vector<8x32xf32>
    %94 = vector.extract_strided_slice %90 {offsets = [0, 32], sizes = [8, 32], strides = [1, 1]} : vector<8x96xf32> to vector<8x32xf32>
    %95 = vector.extract_strided_slice %90 {offsets = [0, 64], sizes = [8, 32], strides = [1, 1]} : vector<8x96xf32> to vector<8x32xf32>
    %96 = arith.mulf %94, %54 : vector<8x32xf32>
    %97 = arith.mulf %93, %92 : vector<8x32xf32>
    %98 = arith.addf %96, %97 : vector<8x32xf32>
    %99 = math.tanh %98 : vector<8x32xf32>
    %100 = arith.mulf %95, %99 : vector<8x32xf32>
    %101 = vector.extract_strided_slice %80 {offsets = [0, 0], sizes = [8, 96], strides = [1, 1]} : vector<8x128xf32> to vector<8x96xf32>
    %102 = arith.negf %101 : vector<8x96xf32>
    %103 = math.exp %102 : vector<8x96xf32>
    %cst_35 = arith.constant 1.000000e+00 : f32
    %104 = vector.broadcast %cst_35 : f32 to vector<8x96xf32>
    %105 = arith.addf %104, %103 : vector<8x96xf32>
    %106 = arith.divf %104, %105 : vector<8x96xf32>
    %107 = vector.extract_strided_slice %80 {offsets = [0, 96], sizes = [8, 32], strides = [1, 1]} : vector<8x128xf32> to vector<8x32xf32>
    %108 = math.tanh %107 : vector<8x32xf32>
    %109 = vector.extract_strided_slice %106 {offsets = [0, 0], sizes = [8, 32], strides = [1, 1]} : vector<8x96xf32> to vector<8x32xf32>
    %110 = vector.extract_strided_slice %106 {offsets = [0, 32], sizes = [8, 32], strides = [1, 1]} : vector<8x96xf32> to vector<8x32xf32>
    %111 = vector.extract_strided_slice %106 {offsets = [0, 64], sizes = [8, 32], strides = [1, 1]} : vector<8x96xf32> to vector<8x32xf32>
    %112 = arith.mulf %110, %70 : vector<8x32xf32>
    %113 = arith.mulf %109, %108 : vector<8x32xf32>
    %114 = arith.addf %112, %113 : vector<8x32xf32>
    %115 = math.tanh %114 : vector<8x32xf32>
    %116 = arith.mulf %111, %115 : vector<8x32xf32>
    %117 = vector.extract_strided_slice %84 {offsets = [0, 0], sizes = [8, 96], strides = [1, 1]} : vector<8x128xf32> to vector<8x96xf32>
    %118 = arith.negf %117 : vector<8x96xf32>
    %119 = math.exp %118 : vector<8x96xf32>
    %cst_36 = arith.constant 1.000000e+00 : f32
    %120 = vector.broadcast %cst_36 : f32 to vector<8x96xf32>
    %121 = arith.addf %120, %119 : vector<8x96xf32>
    %122 = arith.divf %120, %121 : vector<8x96xf32>
    %123 = vector.extract_strided_slice %84 {offsets = [0, 96], sizes = [8, 32], strides = [1, 1]} : vector<8x128xf32> to vector<8x32xf32>
    %124 = math.tanh %123 : vector<8x32xf32>
    %125 = vector.extract_strided_slice %122 {offsets = [0, 0], sizes = [8, 32], strides = [1, 1]} : vector<8x96xf32> to vector<8x32xf32>
    %126 = vector.extract_strided_slice %122 {offsets = [0, 32], sizes = [8, 32], strides = [1, 1]} : vector<8x96xf32> to vector<8x32xf32>
    %127 = vector.extract_strided_slice %122 {offsets = [0, 64], sizes = [8, 32], strides = [1, 1]} : vector<8x96xf32> to vector<8x32xf32>
    %128 = arith.mulf %126, %12 : vector<8x32xf32>
    %129 = arith.mulf %125, %124 : vector<8x32xf32>
    %130 = arith.addf %128, %129 : vector<8x32xf32>
    %131 = math.tanh %130 : vector<8x32xf32>
    %132 = arith.mulf %127, %131 : vector<8x32xf32>
    %c24 = arith.constant 24 : index
    %c0_37 = arith.constant 0 : index
    %133 = vector.load %arg6[%c24, %c0_37] : memref<64x128xf32, #tpu.memory_space<vmem>>, vector<8x128xf32>
    %134 = arith.addf %133, %6 : vector<8x128xf32>
    %cst_38 = arith.constant dense<0.000000e+00> : vector<8x128xf32>
    %135 = tpu.matmul %100, %1, %cst_38 {dimension_numbers = #tpu.dot_dimension_numbers<[1], [0], [0], [1], [0, 0, 1, 1], [], []>} : vector<8x32xf32>, vector<32x128xf32>, vector<8x128xf32> -> vector<8x128xf32>
    %136 = arith.addf %134, %135 : vector<8x128xf32>
    %cst_39 = arith.constant dense<0.000000e+00> : vector<8x128xf32>
    %137 = tpu.matmul %100, %2, %cst_39 {dimension_numbers = #tpu.dot_dimension_numbers<[1], [0], [0], [1], [0, 0, 1, 1], [], []>} : vector<8x32xf32>, vector<32x128xf32>, vector<8x128xf32> -> vector<8x128xf32>
    %138 = arith.addf %7, %137 : vector<8x128xf32>
    %cst_40 = arith.constant dense<0.000000e+00> : vector<8x128xf32>
    %139 = tpu.matmul %116, %3, %cst_40 {dimension_numbers = #tpu.dot_dimension_numbers<[1], [0], [0], [1], [0, 0, 1, 1], [], []>} : vector<8x32xf32>, vector<32x128xf32>, vector<8x128xf32> -> vector<8x128xf32>
    %140 = arith.addf %138, %139 : vector<8x128xf32>
    %cst_41 = arith.constant dense<0.000000e+00> : vector<8x128xf32>
    %141 = tpu.matmul %116, %4, %cst_41 {dimension_numbers = #tpu.dot_dimension_numbers<[1], [0], [0], [1], [0, 0, 1, 1], [], []>} : vector<8x32xf32>, vector<32x128xf32>, vector<8x128xf32> -> vector<8x128xf32>
    %142 = arith.addf %8, %141 : vector<8x128xf32>
    %cst_42 = arith.constant dense<0.000000e+00> : vector<8x128xf32>
    %143 = tpu.matmul %132, %5, %cst_42 {dimension_numbers = #tpu.dot_dimension_numbers<[1], [0], [0], [1], [0, 0, 1, 1], [], []>} : vector<8x32xf32>, vector<32x128xf32>, vector<8x128xf32> -> vector<8x128xf32>
    %144 = arith.addf %142, %143 : vector<8x128xf32>
    %145 = vector.extract_strided_slice %136 {offsets = [0, 0], sizes = [8, 96], strides = [1, 1]} : vector<8x128xf32> to vector<8x96xf32>
    %146 = arith.negf %145 : vector<8x96xf32>
    %147 = math.exp %146 : vector<8x96xf32>
    %cst_43 = arith.constant 1.000000e+00 : f32
    %148 = vector.broadcast %cst_43 : f32 to vector<8x96xf32>
    %149 = arith.addf %148, %147 : vector<8x96xf32>
    %150 = arith.divf %148, %149 : vector<8x96xf32>
    %151 = vector.extract_strided_slice %136 {offsets = [0, 96], sizes = [8, 32], strides = [1, 1]} : vector<8x128xf32> to vector<8x32xf32>
    %152 = math.tanh %151 : vector<8x32xf32>
    %153 = vector.extract_strided_slice %150 {offsets = [0, 0], sizes = [8, 32], strides = [1, 1]} : vector<8x96xf32> to vector<8x32xf32>
    %154 = vector.extract_strided_slice %150 {offsets = [0, 32], sizes = [8, 32], strides = [1, 1]} : vector<8x96xf32> to vector<8x32xf32>
    %155 = vector.extract_strided_slice %150 {offsets = [0, 64], sizes = [8, 32], strides = [1, 1]} : vector<8x96xf32> to vector<8x32xf32>
    %156 = arith.mulf %154, %98 : vector<8x32xf32>
    %157 = arith.mulf %153, %152 : vector<8x32xf32>
    %158 = arith.addf %156, %157 : vector<8x32xf32>
    %159 = math.tanh %158 : vector<8x32xf32>
    %160 = arith.mulf %155, %159 : vector<8x32xf32>
    %161 = vector.extract_strided_slice %140 {offsets = [0, 0], sizes = [8, 96], strides = [1, 1]} : vector<8x128xf32> to vector<8x96xf32>
    %162 = arith.negf %161 : vector<8x96xf32>
    %163 = math.exp %162 : vector<8x96xf32>
    %cst_44 = arith.constant 1.000000e+00 : f32
    %164 = vector.broadcast %cst_44 : f32 to vector<8x96xf32>
    %165 = arith.addf %164, %163 : vector<8x96xf32>
    %166 = arith.divf %164, %165 : vector<8x96xf32>
    %167 = vector.extract_strided_slice %140 {offsets = [0, 96], sizes = [8, 32], strides = [1, 1]} : vector<8x128xf32> to vector<8x32xf32>
    %168 = math.tanh %167 : vector<8x32xf32>
    %169 = vector.extract_strided_slice %166 {offsets = [0, 0], sizes = [8, 32], strides = [1, 1]} : vector<8x96xf32> to vector<8x32xf32>
    %170 = vector.extract_strided_slice %166 {offsets = [0, 32], sizes = [8, 32], strides = [1, 1]} : vector<8x96xf32> to vector<8x32xf32>
    %171 = vector.extract_strided_slice %166 {offsets = [0, 64], sizes = [8, 32], strides = [1, 1]} : vector<8x96xf32> to vector<8x32xf32>
    %172 = arith.mulf %170, %114 : vector<8x32xf32>
    %173 = arith.mulf %169, %168 : vector<8x32xf32>
    %174 = arith.addf %172, %173 : vector<8x32xf32>
    %175 = math.tanh %174 : vector<8x32xf32>
    %176 = arith.mulf %171, %175 : vector<8x32xf32>
    %177 = vector.extract_strided_slice %144 {offsets = [0, 0], sizes = [8, 96], strides = [1, 1]} : vector<8x128xf32> to vector<8x96xf32>
    %178 = arith.negf %177 : vector<8x96xf32>
    %179 = math.exp %178 : vector<8x96xf32>
    %cst_45 = arith.constant 1.000000e+00 : f32
    %180 = vector.broadcast %cst_45 : f32 to vector<8x96xf32>
    %181 = arith.addf %180, %179 : vector<8x96xf32>
    %182 = arith.divf %180, %181 : vector<8x96xf32>
    %183 = vector.extract_strided_slice %144 {offsets = [0, 96], sizes = [8, 32], strides = [1, 1]} : vector<8x128xf32> to vector<8x32xf32>
    %184 = math.tanh %183 : vector<8x32xf32>
    %185 = vector.extract_strided_slice %182 {offsets = [0, 0], sizes = [8, 32], strides = [1, 1]} : vector<8x96xf32> to vector<8x32xf32>
    %186 = vector.extract_strided_slice %182 {offsets = [0, 32], sizes = [8, 32], strides = [1, 1]} : vector<8x96xf32> to vector<8x32xf32>
    %187 = vector.extract_strided_slice %182 {offsets = [0, 64], sizes = [8, 32], strides = [1, 1]} : vector<8x96xf32> to vector<8x32xf32>
    %188 = arith.mulf %186, %130 : vector<8x32xf32>
    %189 = arith.mulf %185, %184 : vector<8x32xf32>
    %190 = arith.addf %188, %189 : vector<8x32xf32>
    %191 = math.tanh %190 : vector<8x32xf32>
    %192 = arith.mulf %187, %191 : vector<8x32xf32>
    %c32 = arith.constant 32 : index
    %c0_46 = arith.constant 0 : index
    %193 = vector.load %arg6[%c32, %c0_46] : memref<64x128xf32, #tpu.memory_space<vmem>>, vector<8x128xf32>
    %194 = arith.addf %193, %6 : vector<8x128xf32>
    %cst_47 = arith.constant dense<0.000000e+00> : vector<8x128xf32>
    %195 = tpu.matmul %160, %1, %cst_47 {dimension_numbers = #tpu.dot_dimension_numbers<[1], [0], [0], [1], [0, 0, 1, 1], [], []>} : vector<8x32xf32>, vector<32x128xf32>, vector<8x128xf32> -> vector<8x128xf32>
    %196 = arith.addf %194, %195 : vector<8x128xf32>
    %cst_48 = arith.constant dense<0.000000e+00> : vector<8x128xf32>
    %197 = tpu.matmul %160, %2, %cst_48 {dimension_numbers = #tpu.dot_dimension_numbers<[1], [0], [0], [1], [0, 0, 1, 1], [], []>} : vector<8x32xf32>, vector<32x128xf32>, vector<8x128xf32> -> vector<8x128xf32>
    %198 = arith.addf %7, %197 : vector<8x128xf32>
    %cst_49 = arith.constant dense<0.000000e+00> : vector<8x128xf32>
    %199 = tpu.matmul %176, %3, %cst_49 {dimension_numbers = #tpu.dot_dimension_numbers<[1], [0], [0], [1], [0, 0, 1, 1], [], []>} : vector<8x32xf32>, vector<32x128xf32>, vector<8x128xf32> -> vector<8x128xf32>
    %200 = arith.addf %198, %199 : vector<8x128xf32>
    %cst_50 = arith.constant dense<0.000000e+00> : vector<8x128xf32>
    %201 = tpu.matmul %176, %4, %cst_50 {dimension_numbers = #tpu.dot_dimension_numbers<[1], [0], [0], [1], [0, 0, 1, 1], [], []>} : vector<8x32xf32>, vector<32x128xf32>, vector<8x128xf32> -> vector<8x128xf32>
    %202 = arith.addf %8, %201 : vector<8x128xf32>
    %cst_51 = arith.constant dense<0.000000e+00> : vector<8x128xf32>
    %203 = tpu.matmul %192, %5, %cst_51 {dimension_numbers = #tpu.dot_dimension_numbers<[1], [0], [0], [1], [0, 0, 1, 1], [], []>} : vector<8x32xf32>, vector<32x128xf32>, vector<8x128xf32> -> vector<8x128xf32>
    %204 = arith.addf %202, %203 : vector<8x128xf32>
    %205 = vector.extract_strided_slice %196 {offsets = [0, 0], sizes = [8, 96], strides = [1, 1]} : vector<8x128xf32> to vector<8x96xf32>
    %206 = arith.negf %205 : vector<8x96xf32>
    %207 = math.exp %206 : vector<8x96xf32>
    %cst_52 = arith.constant 1.000000e+00 : f32
    %208 = vector.broadcast %cst_52 : f32 to vector<8x96xf32>
    %209 = arith.addf %208, %207 : vector<8x96xf32>
    %210 = arith.divf %208, %209 : vector<8x96xf32>
    %211 = vector.extract_strided_slice %196 {offsets = [0, 96], sizes = [8, 32], strides = [1, 1]} : vector<8x128xf32> to vector<8x32xf32>
    %212 = math.tanh %211 : vector<8x32xf32>
    %213 = vector.extract_strided_slice %210 {offsets = [0, 0], sizes = [8, 32], strides = [1, 1]} : vector<8x96xf32> to vector<8x32xf32>
    %214 = vector.extract_strided_slice %210 {offsets = [0, 32], sizes = [8, 32], strides = [1, 1]} : vector<8x96xf32> to vector<8x32xf32>
    %215 = vector.extract_strided_slice %210 {offsets = [0, 64], sizes = [8, 32], strides = [1, 1]} : vector<8x96xf32> to vector<8x32xf32>
    %216 = arith.mulf %214, %158 : vector<8x32xf32>
    %217 = arith.mulf %213, %212 : vector<8x32xf32>
    %218 = arith.addf %216, %217 : vector<8x32xf32>
    %219 = math.tanh %218 : vector<8x32xf32>
    %220 = arith.mulf %215, %219 : vector<8x32xf32>
    %221 = vector.extract_strided_slice %200 {offsets = [0, 0], sizes = [8, 96], strides = [1, 1]} : vector<8x128xf32> to vector<8x96xf32>
    %222 = arith.negf %221 : vector<8x96xf32>
    %223 = math.exp %222 : vector<8x96xf32>
    %cst_53 = arith.constant 1.000000e+00 : f32
    %224 = vector.broadcast %cst_53 : f32 to vector<8x96xf32>
    %225 = arith.addf %224, %223 : vector<8x96xf32>
    %226 = arith.divf %224, %225 : vector<8x96xf32>
    %227 = vector.extract_strided_slice %200 {offsets = [0, 96], sizes = [8, 32], strides = [1, 1]} : vector<8x128xf32> to vector<8x32xf32>
    %228 = math.tanh %227 : vector<8x32xf32>
    %229 = vector.extract_strided_slice %226 {offsets = [0, 0], sizes = [8, 32], strides = [1, 1]} : vector<8x96xf32> to vector<8x32xf32>
    %230 = vector.extract_strided_slice %226 {offsets = [0, 32], sizes = [8, 32], strides = [1, 1]} : vector<8x96xf32> to vector<8x32xf32>
    %231 = vector.extract_strided_slice %226 {offsets = [0, 64], sizes = [8, 32], strides = [1, 1]} : vector<8x96xf32> to vector<8x32xf32>
    %232 = arith.mulf %230, %174 : vector<8x32xf32>
    %233 = arith.mulf %229, %228 : vector<8x32xf32>
    %234 = arith.addf %232, %233 : vector<8x32xf32>
    %235 = math.tanh %234 : vector<8x32xf32>
    %236 = arith.mulf %231, %235 : vector<8x32xf32>
    %237 = vector.extract_strided_slice %204 {offsets = [0, 0], sizes = [8, 96], strides = [1, 1]} : vector<8x128xf32> to vector<8x96xf32>
    %238 = arith.negf %237 : vector<8x96xf32>
    %239 = math.exp %238 : vector<8x96xf32>
    %cst_54 = arith.constant 1.000000e+00 : f32
    %240 = vector.broadcast %cst_54 : f32 to vector<8x96xf32>
    %241 = arith.addf %240, %239 : vector<8x96xf32>
    %242 = arith.divf %240, %241 : vector<8x96xf32>
    %243 = vector.extract_strided_slice %204 {offsets = [0, 96], sizes = [8, 32], strides = [1, 1]} : vector<8x128xf32> to vector<8x32xf32>
    %244 = math.tanh %243 : vector<8x32xf32>
    %245 = vector.extract_strided_slice %242 {offsets = [0, 0], sizes = [8, 32], strides = [1, 1]} : vector<8x96xf32> to vector<8x32xf32>
    %246 = vector.extract_strided_slice %242 {offsets = [0, 32], sizes = [8, 32], strides = [1, 1]} : vector<8x96xf32> to vector<8x32xf32>
    %247 = vector.extract_strided_slice %242 {offsets = [0, 64], sizes = [8, 32], strides = [1, 1]} : vector<8x96xf32> to vector<8x32xf32>
    %248 = arith.mulf %246, %190 : vector<8x32xf32>
    %249 = arith.mulf %245, %244 : vector<8x32xf32>
    %250 = arith.addf %248, %249 : vector<8x32xf32>
    %251 = math.tanh %250 : vector<8x32xf32>
    %252 = arith.mulf %247, %251 : vector<8x32xf32>
    %c40 = arith.constant 40 : index
    %c0_55 = arith.constant 0 : index
    %253 = vector.load %arg6[%c40, %c0_55] : memref<64x128xf32, #tpu.memory_space<vmem>>, vector<8x128xf32>
    %254 = arith.addf %253, %6 : vector<8x128xf32>
    %cst_56 = arith.constant dense<0.000000e+00> : vector<8x128xf32>
    %255 = tpu.matmul %220, %1, %cst_56 {dimension_numbers = #tpu.dot_dimension_numbers<[1], [0], [0], [1], [0, 0, 1, 1], [], []>} : vector<8x32xf32>, vector<32x128xf32>, vector<8x128xf32> -> vector<8x128xf32>
    %256 = arith.addf %254, %255 : vector<8x128xf32>
    %cst_57 = arith.constant dense<0.000000e+00> : vector<8x128xf32>
    %257 = tpu.matmul %220, %2, %cst_57 {dimension_numbers = #tpu.dot_dimension_numbers<[1], [0], [0], [1], [0, 0, 1, 1], [], []>} : vector<8x32xf32>, vector<32x128xf32>, vector<8x128xf32> -> vector<8x128xf32>
    %258 = arith.addf %7, %257 : vector<8x128xf32>
    %cst_58 = arith.constant dense<0.000000e+00> : vector<8x128xf32>
    %259 = tpu.matmul %236, %3, %cst_58 {dimension_numbers = #tpu.dot_dimension_numbers<[1], [0], [0], [1], [0, 0, 1, 1], [], []>} : vector<8x32xf32>, vector<32x128xf32>, vector<8x128xf32> -> vector<8x128xf32>
    %260 = arith.addf %258, %259 : vector<8x128xf32>
    %cst_59 = arith.constant dense<0.000000e+00> : vector<8x128xf32>
    %261 = tpu.matmul %236, %4, %cst_59 {dimension_numbers = #tpu.dot_dimension_numbers<[1], [0], [0], [1], [0, 0, 1, 1], [], []>} : vector<8x32xf32>, vector<32x128xf32>, vector<8x128xf32> -> vector<8x128xf32>
    %262 = arith.addf %8, %261 : vector<8x128xf32>
    %cst_60 = arith.constant dense<0.000000e+00> : vector<8x128xf32>
    %263 = tpu.matmul %252, %5, %cst_60 {dimension_numbers = #tpu.dot_dimension_numbers<[1], [0], [0], [1], [0, 0, 1, 1], [], []>} : vector<8x32xf32>, vector<32x128xf32>, vector<8x128xf32> -> vector<8x128xf32>
    %264 = arith.addf %262, %263 : vector<8x128xf32>
    %265 = vector.extract_strided_slice %256 {offsets = [0, 0], sizes = [8, 96], strides = [1, 1]} : vector<8x128xf32> to vector<8x96xf32>
    %266 = arith.negf %265 : vector<8x96xf32>
    %267 = math.exp %266 : vector<8x96xf32>
    %cst_61 = arith.constant 1.000000e+00 : f32
    %268 = vector.broadcast %cst_61 : f32 to vector<8x96xf32>
    %269 = arith.addf %268, %267 : vector<8x96xf32>
    %270 = arith.divf %268, %269 : vector<8x96xf32>
    %271 = vector.extract_strided_slice %256 {offsets = [0, 96], sizes = [8, 32], strides = [1, 1]} : vector<8x128xf32> to vector<8x32xf32>
    %272 = math.tanh %271 : vector<8x32xf32>
    %273 = vector.extract_strided_slice %270 {offsets = [0, 0], sizes = [8, 32], strides = [1, 1]} : vector<8x96xf32> to vector<8x32xf32>
    %274 = vector.extract_strided_slice %270 {offsets = [0, 32], sizes = [8, 32], strides = [1, 1]} : vector<8x96xf32> to vector<8x32xf32>
    %275 = vector.extract_strided_slice %270 {offsets = [0, 64], sizes = [8, 32], strides = [1, 1]} : vector<8x96xf32> to vector<8x32xf32>
    %276 = arith.mulf %274, %218 : vector<8x32xf32>
    %277 = arith.mulf %273, %272 : vector<8x32xf32>
    %278 = arith.addf %276, %277 : vector<8x32xf32>
    %279 = math.tanh %278 : vector<8x32xf32>
    %280 = arith.mulf %275, %279 : vector<8x32xf32>
    %281 = vector.extract_strided_slice %260 {offsets = [0, 0], sizes = [8, 96], strides = [1, 1]} : vector<8x128xf32> to vector<8x96xf32>
    %282 = arith.negf %281 : vector<8x96xf32>
    %283 = math.exp %282 : vector<8x96xf32>
    %cst_62 = arith.constant 1.000000e+00 : f32
    %284 = vector.broadcast %cst_62 : f32 to vector<8x96xf32>
    %285 = arith.addf %284, %283 : vector<8x96xf32>
    %286 = arith.divf %284, %285 : vector<8x96xf32>
    %287 = vector.extract_strided_slice %260 {offsets = [0, 96], sizes = [8, 32], strides = [1, 1]} : vector<8x128xf32> to vector<8x32xf32>
    %288 = math.tanh %287 : vector<8x32xf32>
    %289 = vector.extract_strided_slice %286 {offsets = [0, 0], sizes = [8, 32], strides = [1, 1]} : vector<8x96xf32> to vector<8x32xf32>
    %290 = vector.extract_strided_slice %286 {offsets = [0, 32], sizes = [8, 32], strides = [1, 1]} : vector<8x96xf32> to vector<8x32xf32>
    %291 = vector.extract_strided_slice %286 {offsets = [0, 64], sizes = [8, 32], strides = [1, 1]} : vector<8x96xf32> to vector<8x32xf32>
    %292 = arith.mulf %290, %234 : vector<8x32xf32>
    %293 = arith.mulf %289, %288 : vector<8x32xf32>
    %294 = arith.addf %292, %293 : vector<8x32xf32>
    %295 = math.tanh %294 : vector<8x32xf32>
    %296 = arith.mulf %291, %295 : vector<8x32xf32>
    %297 = vector.extract_strided_slice %264 {offsets = [0, 0], sizes = [8, 96], strides = [1, 1]} : vector<8x128xf32> to vector<8x96xf32>
    %298 = arith.negf %297 : vector<8x96xf32>
    %299 = math.exp %298 : vector<8x96xf32>
    %cst_63 = arith.constant 1.000000e+00 : f32
    %300 = vector.broadcast %cst_63 : f32 to vector<8x96xf32>
    %301 = arith.addf %300, %299 : vector<8x96xf32>
    %302 = arith.divf %300, %301 : vector<8x96xf32>
    %303 = vector.extract_strided_slice %264 {offsets = [0, 96], sizes = [8, 32], strides = [1, 1]} : vector<8x128xf32> to vector<8x32xf32>
    %304 = math.tanh %303 : vector<8x32xf32>
    %305 = vector.extract_strided_slice %302 {offsets = [0, 0], sizes = [8, 32], strides = [1, 1]} : vector<8x96xf32> to vector<8x32xf32>
    %306 = vector.extract_strided_slice %302 {offsets = [0, 32], sizes = [8, 32], strides = [1, 1]} : vector<8x96xf32> to vector<8x32xf32>
    %307 = vector.extract_strided_slice %302 {offsets = [0, 64], sizes = [8, 32], strides = [1, 1]} : vector<8x96xf32> to vector<8x32xf32>
    %308 = arith.mulf %306, %250 : vector<8x32xf32>
    %309 = arith.mulf %305, %304 : vector<8x32xf32>
    %310 = arith.addf %308, %309 : vector<8x32xf32>
    %311 = math.tanh %310 : vector<8x32xf32>
    %312 = arith.mulf %307, %311 : vector<8x32xf32>
    %c48_64 = arith.constant 48 : index
    %c0_65 = arith.constant 0 : index
    %313 = vector.load %arg6[%c48_64, %c0_65] : memref<64x128xf32, #tpu.memory_space<vmem>>, vector<8x128xf32>
    %314 = arith.addf %313, %6 : vector<8x128xf32>
    %cst_66 = arith.constant dense<0.000000e+00> : vector<8x128xf32>
    %315 = tpu.matmul %280, %1, %cst_66 {dimension_numbers = #tpu.dot_dimension_numbers<[1], [0], [0], [1], [0, 0, 1, 1], [], []>} : vector<8x32xf32>, vector<32x128xf32>, vector<8x128xf32> -> vector<8x128xf32>
    %316 = arith.addf %314, %315 : vector<8x128xf32>
    %cst_67 = arith.constant dense<0.000000e+00> : vector<8x128xf32>
    %317 = tpu.matmul %280, %2, %cst_67 {dimension_numbers = #tpu.dot_dimension_numbers<[1], [0], [0], [1], [0, 0, 1, 1], [], []>} : vector<8x32xf32>, vector<32x128xf32>, vector<8x128xf32> -> vector<8x128xf32>
    %318 = arith.addf %7, %317 : vector<8x128xf32>
    %cst_68 = arith.constant dense<0.000000e+00> : vector<8x128xf32>
    %319 = tpu.matmul %296, %3, %cst_68 {dimension_numbers = #tpu.dot_dimension_numbers<[1], [0], [0], [1], [0, 0, 1, 1], [], []>} : vector<8x32xf32>, vector<32x128xf32>, vector<8x128xf32> -> vector<8x128xf32>
    %320 = arith.addf %318, %319 : vector<8x128xf32>
    %cst_69 = arith.constant dense<0.000000e+00> : vector<8x128xf32>
    %321 = tpu.matmul %296, %4, %cst_69 {dimension_numbers = #tpu.dot_dimension_numbers<[1], [0], [0], [1], [0, 0, 1, 1], [], []>} : vector<8x32xf32>, vector<32x128xf32>, vector<8x128xf32> -> vector<8x128xf32>
    %322 = arith.addf %8, %321 : vector<8x128xf32>
    %cst_70 = arith.constant dense<0.000000e+00> : vector<8x128xf32>
    %323 = tpu.matmul %312, %5, %cst_70 {dimension_numbers = #tpu.dot_dimension_numbers<[1], [0], [0], [1], [0, 0, 1, 1], [], []>} : vector<8x32xf32>, vector<32x128xf32>, vector<8x128xf32> -> vector<8x128xf32>
    %324 = arith.addf %322, %323 : vector<8x128xf32>
    %325 = vector.extract_strided_slice %316 {offsets = [0, 0], sizes = [8, 96], strides = [1, 1]} : vector<8x128xf32> to vector<8x96xf32>
    %326 = arith.negf %325 : vector<8x96xf32>
    %327 = math.exp %326 : vector<8x96xf32>
    %cst_71 = arith.constant 1.000000e+00 : f32
    %328 = vector.broadcast %cst_71 : f32 to vector<8x96xf32>
    %329 = arith.addf %328, %327 : vector<8x96xf32>
    %330 = arith.divf %328, %329 : vector<8x96xf32>
    %331 = vector.extract_strided_slice %316 {offsets = [0, 96], sizes = [8, 32], strides = [1, 1]} : vector<8x128xf32> to vector<8x32xf32>
    %332 = math.tanh %331 : vector<8x32xf32>
    %333 = vector.extract_strided_slice %330 {offsets = [0, 0], sizes = [8, 32], strides = [1, 1]} : vector<8x96xf32> to vector<8x32xf32>
    %334 = vector.extract_strided_slice %330 {offsets = [0, 32], sizes = [8, 32], strides = [1, 1]} : vector<8x96xf32> to vector<8x32xf32>
    %335 = vector.extract_strided_slice %330 {offsets = [0, 64], sizes = [8, 32], strides = [1, 1]} : vector<8x96xf32> to vector<8x32xf32>
    %336 = arith.mulf %334, %278 : vector<8x32xf32>
    %337 = arith.mulf %333, %332 : vector<8x32xf32>
    %338 = arith.addf %336, %337 : vector<8x32xf32>
    %339 = math.tanh %338 : vector<8x32xf32>
    %340 = arith.mulf %335, %339 : vector<8x32xf32>
    %341 = vector.extract_strided_slice %320 {offsets = [0, 0], sizes = [8, 96], strides = [1, 1]} : vector<8x128xf32> to vector<8x96xf32>
    %342 = arith.negf %341 : vector<8x96xf32>
    %343 = math.exp %342 : vector<8x96xf32>
    %cst_72 = arith.constant 1.000000e+00 : f32
    %344 = vector.broadcast %cst_72 : f32 to vector<8x96xf32>
    %345 = arith.addf %344, %343 : vector<8x96xf32>
    %346 = arith.divf %344, %345 : vector<8x96xf32>
    %347 = vector.extract_strided_slice %320 {offsets = [0, 96], sizes = [8, 32], strides = [1, 1]} : vector<8x128xf32> to vector<8x32xf32>
    %348 = math.tanh %347 : vector<8x32xf32>
    %349 = vector.extract_strided_slice %346 {offsets = [0, 0], sizes = [8, 32], strides = [1, 1]} : vector<8x96xf32> to vector<8x32xf32>
    %350 = vector.extract_strided_slice %346 {offsets = [0, 32], sizes = [8, 32], strides = [1, 1]} : vector<8x96xf32> to vector<8x32xf32>
    %351 = vector.extract_strided_slice %346 {offsets = [0, 64], sizes = [8, 32], strides = [1, 1]} : vector<8x96xf32> to vector<8x32xf32>
    %352 = arith.mulf %350, %294 : vector<8x32xf32>
    %353 = arith.mulf %349, %348 : vector<8x32xf32>
    %354 = arith.addf %352, %353 : vector<8x32xf32>
    %355 = math.tanh %354 : vector<8x32xf32>
    %356 = arith.mulf %351, %355 : vector<8x32xf32>
    %357 = vector.extract_strided_slice %324 {offsets = [0, 0], sizes = [8, 96], strides = [1, 1]} : vector<8x128xf32> to vector<8x96xf32>
    %358 = arith.negf %357 : vector<8x96xf32>
    %359 = math.exp %358 : vector<8x96xf32>
    %cst_73 = arith.constant 1.000000e+00 : f32
    %360 = vector.broadcast %cst_73 : f32 to vector<8x96xf32>
    %361 = arith.addf %360, %359 : vector<8x96xf32>
    %362 = arith.divf %360, %361 : vector<8x96xf32>
    %363 = vector.extract_strided_slice %324 {offsets = [0, 96], sizes = [8, 32], strides = [1, 1]} : vector<8x128xf32> to vector<8x32xf32>
    %364 = math.tanh %363 : vector<8x32xf32>
    %365 = vector.extract_strided_slice %362 {offsets = [0, 0], sizes = [8, 32], strides = [1, 1]} : vector<8x96xf32> to vector<8x32xf32>
    %366 = vector.extract_strided_slice %362 {offsets = [0, 32], sizes = [8, 32], strides = [1, 1]} : vector<8x96xf32> to vector<8x32xf32>
    %367 = vector.extract_strided_slice %362 {offsets = [0, 64], sizes = [8, 32], strides = [1, 1]} : vector<8x96xf32> to vector<8x32xf32>
    %368 = arith.mulf %366, %310 : vector<8x32xf32>
    %369 = arith.mulf %365, %364 : vector<8x32xf32>
    %370 = arith.addf %368, %369 : vector<8x32xf32>
    %371 = math.tanh %370 : vector<8x32xf32>
    %372 = arith.mulf %367, %371 : vector<8x32xf32>
    %c56 = arith.constant 56 : index
    %c0_74 = arith.constant 0 : index
    %373 = vector.load %arg6[%c56, %c0_74] : memref<64x128xf32, #tpu.memory_space<vmem>>, vector<8x128xf32>
    %374 = arith.addf %373, %6 : vector<8x128xf32>
    %cst_75 = arith.constant dense<0.000000e+00> : vector<8x128xf32>
    %375 = tpu.matmul %340, %1, %cst_75 {dimension_numbers = #tpu.dot_dimension_numbers<[1], [0], [0], [1], [0, 0, 1, 1], [], []>} : vector<8x32xf32>, vector<32x128xf32>, vector<8x128xf32> -> vector<8x128xf32>
    %376 = arith.addf %374, %375 : vector<8x128xf32>
    %cst_76 = arith.constant dense<0.000000e+00> : vector<8x128xf32>
    %377 = tpu.matmul %340, %2, %cst_76 {dimension_numbers = #tpu.dot_dimension_numbers<[1], [0], [0], [1], [0, 0, 1, 1], [], []>} : vector<8x32xf32>, vector<32x128xf32>, vector<8x128xf32> -> vector<8x128xf32>
    %378 = arith.addf %7, %377 : vector<8x128xf32>
    %cst_77 = arith.constant dense<0.000000e+00> : vector<8x128xf32>
    %379 = tpu.matmul %356, %3, %cst_77 {dimension_numbers = #tpu.dot_dimension_numbers<[1], [0], [0], [1], [0, 0, 1, 1], [], []>} : vector<8x32xf32>, vector<32x128xf32>, vector<8x128xf32> -> vector<8x128xf32>
    %380 = arith.addf %378, %379 : vector<8x128xf32>
    %cst_78 = arith.constant dense<0.000000e+00> : vector<8x128xf32>
    %381 = tpu.matmul %356, %4, %cst_78 {dimension_numbers = #tpu.dot_dimension_numbers<[1], [0], [0], [1], [0, 0, 1, 1], [], []>} : vector<8x32xf32>, vector<32x128xf32>, vector<8x128xf32> -> vector<8x128xf32>
    %382 = arith.addf %8, %381 : vector<8x128xf32>
    %cst_79 = arith.constant dense<0.000000e+00> : vector<8x128xf32>
    %383 = tpu.matmul %372, %5, %cst_79 {dimension_numbers = #tpu.dot_dimension_numbers<[1], [0], [0], [1], [0, 0, 1, 1], [], []>} : vector<8x32xf32>, vector<32x128xf32>, vector<8x128xf32> -> vector<8x128xf32>
    %384 = arith.addf %382, %383 : vector<8x128xf32>
    %385 = vector.extract_strided_slice %376 {offsets = [0, 0], sizes = [8, 96], strides = [1, 1]} : vector<8x128xf32> to vector<8x96xf32>
    %386 = arith.negf %385 : vector<8x96xf32>
    %387 = math.exp %386 : vector<8x96xf32>
    %cst_80 = arith.constant 1.000000e+00 : f32
    %388 = vector.broadcast %cst_80 : f32 to vector<8x96xf32>
    %389 = arith.addf %388, %387 : vector<8x96xf32>
    %390 = arith.divf %388, %389 : vector<8x96xf32>
    %391 = vector.extract_strided_slice %376 {offsets = [0, 96], sizes = [8, 32], strides = [1, 1]} : vector<8x128xf32> to vector<8x32xf32>
    %392 = math.tanh %391 : vector<8x32xf32>
    %393 = vector.extract_strided_slice %390 {offsets = [0, 0], sizes = [8, 32], strides = [1, 1]} : vector<8x96xf32> to vector<8x32xf32>
    %394 = vector.extract_strided_slice %390 {offsets = [0, 32], sizes = [8, 32], strides = [1, 1]} : vector<8x96xf32> to vector<8x32xf32>
    %395 = vector.extract_strided_slice %390 {offsets = [0, 64], sizes = [8, 32], strides = [1, 1]} : vector<8x96xf32> to vector<8x32xf32>
    %396 = arith.mulf %394, %338 : vector<8x32xf32>
    %397 = arith.mulf %393, %392 : vector<8x32xf32>
    %398 = arith.addf %396, %397 : vector<8x32xf32>
    %399 = math.tanh %398 : vector<8x32xf32>
    %400 = arith.mulf %395, %399 : vector<8x32xf32>
    %401 = vector.extract_strided_slice %380 {offsets = [0, 0], sizes = [8, 96], strides = [1, 1]} : vector<8x128xf32> to vector<8x96xf32>
    %402 = arith.negf %401 : vector<8x96xf32>
    %403 = math.exp %402 : vector<8x96xf32>
    %cst_81 = arith.constant 1.000000e+00 : f32
    %404 = vector.broadcast %cst_81 : f32 to vector<8x96xf32>
    %405 = arith.addf %404, %403 : vector<8x96xf32>
    %406 = arith.divf %404, %405 : vector<8x96xf32>
    %407 = vector.extract_strided_slice %380 {offsets = [0, 96], sizes = [8, 32], strides = [1, 1]} : vector<8x128xf32> to vector<8x32xf32>
    %408 = math.tanh %407 : vector<8x32xf32>
    %409 = vector.extract_strided_slice %406 {offsets = [0, 0], sizes = [8, 32], strides = [1, 1]} : vector<8x96xf32> to vector<8x32xf32>
    %410 = vector.extract_strided_slice %406 {offsets = [0, 32], sizes = [8, 32], strides = [1, 1]} : vector<8x96xf32> to vector<8x32xf32>
    %411 = vector.extract_strided_slice %406 {offsets = [0, 64], sizes = [8, 32], strides = [1, 1]} : vector<8x96xf32> to vector<8x32xf32>
    %412 = arith.mulf %410, %354 : vector<8x32xf32>
    %413 = arith.mulf %409, %408 : vector<8x32xf32>
    %414 = arith.addf %412, %413 : vector<8x32xf32>
    %415 = math.tanh %414 : vector<8x32xf32>
    %416 = arith.mulf %411, %415 : vector<8x32xf32>
    %417 = vector.extract_strided_slice %384 {offsets = [0, 0], sizes = [8, 96], strides = [1, 1]} : vector<8x128xf32> to vector<8x96xf32>
    %418 = arith.negf %417 : vector<8x96xf32>
    %419 = math.exp %418 : vector<8x96xf32>
    %cst_82 = arith.constant 1.000000e+00 : f32
    %420 = vector.broadcast %cst_82 : f32 to vector<8x96xf32>
    %421 = arith.addf %420, %419 : vector<8x96xf32>
    %422 = arith.divf %420, %421 : vector<8x96xf32>
    %423 = vector.extract_strided_slice %384 {offsets = [0, 96], sizes = [8, 32], strides = [1, 1]} : vector<8x128xf32> to vector<8x32xf32>
    %424 = math.tanh %423 : vector<8x32xf32>
    %425 = vector.extract_strided_slice %422 {offsets = [0, 0], sizes = [8, 32], strides = [1, 1]} : vector<8x96xf32> to vector<8x32xf32>
    %426 = vector.extract_strided_slice %422 {offsets = [0, 32], sizes = [8, 32], strides = [1, 1]} : vector<8x96xf32> to vector<8x32xf32>
    %427 = vector.extract_strided_slice %422 {offsets = [0, 64], sizes = [8, 32], strides = [1, 1]} : vector<8x96xf32> to vector<8x32xf32>
    %428 = arith.mulf %426, %370 : vector<8x32xf32>
    %429 = arith.mulf %425, %424 : vector<8x32xf32>
    %430 = arith.addf %428, %429 : vector<8x32xf32>
    %431 = math.tanh %430 : vector<8x32xf32>
    %432 = arith.mulf %427, %431 : vector<8x32xf32>
    %cst_83 = arith.constant dense<0.000000e+00> : vector<8x128xf32>
    %433 = tpu.matmul %400, %2, %cst_83 {dimension_numbers = #tpu.dot_dimension_numbers<[1], [0], [0], [1], [0, 0, 1, 1], [], []>} : vector<8x32xf32>, vector<32x128xf32>, vector<8x128xf32> -> vector<8x128xf32>
    %434 = arith.addf %7, %433 : vector<8x128xf32>
    %cst_84 = arith.constant dense<0.000000e+00> : vector<8x128xf32>
    %435 = tpu.matmul %416, %3, %cst_84 {dimension_numbers = #tpu.dot_dimension_numbers<[1], [0], [0], [1], [0, 0, 1, 1], [], []>} : vector<8x32xf32>, vector<32x128xf32>, vector<8x128xf32> -> vector<8x128xf32>
    %436 = arith.addf %434, %435 : vector<8x128xf32>
    %cst_85 = arith.constant dense<0.000000e+00> : vector<8x128xf32>
    %437 = tpu.matmul %416, %4, %cst_85 {dimension_numbers = #tpu.dot_dimension_numbers<[1], [0], [0], [1], [0, 0, 1, 1], [], []>} : vector<8x32xf32>, vector<32x128xf32>, vector<8x128xf32> -> vector<8x128xf32>
    %438 = arith.addf %8, %437 : vector<8x128xf32>
    %cst_86 = arith.constant dense<0.000000e+00> : vector<8x128xf32>
    %439 = tpu.matmul %432, %5, %cst_86 {dimension_numbers = #tpu.dot_dimension_numbers<[1], [0], [0], [1], [0, 0, 1, 1], [], []>} : vector<8x32xf32>, vector<32x128xf32>, vector<8x128xf32> -> vector<8x128xf32>
    %440 = arith.addf %438, %439 : vector<8x128xf32>
    %441 = vector.extract_strided_slice %436 {offsets = [0, 0], sizes = [8, 96], strides = [1, 1]} : vector<8x128xf32> to vector<8x96xf32>
    %442 = arith.negf %441 : vector<8x96xf32>
    %443 = math.exp %442 : vector<8x96xf32>
    %cst_87 = arith.constant 1.000000e+00 : f32
    %444 = vector.broadcast %cst_87 : f32 to vector<8x96xf32>
    %445 = arith.addf %444, %443 : vector<8x96xf32>
    %446 = arith.divf %444, %445 : vector<8x96xf32>
    %447 = vector.extract_strided_slice %436 {offsets = [0, 96], sizes = [8, 32], strides = [1, 1]} : vector<8x128xf32> to vector<8x32xf32>
    %448 = math.tanh %447 : vector<8x32xf32>
    %449 = vector.extract_strided_slice %446 {offsets = [0, 0], sizes = [8, 32], strides = [1, 1]} : vector<8x96xf32> to vector<8x32xf32>
    %450 = vector.extract_strided_slice %446 {offsets = [0, 32], sizes = [8, 32], strides = [1, 1]} : vector<8x96xf32> to vector<8x32xf32>
    %451 = vector.extract_strided_slice %446 {offsets = [0, 64], sizes = [8, 32], strides = [1, 1]} : vector<8x96xf32> to vector<8x32xf32>
    %452 = arith.mulf %450, %414 : vector<8x32xf32>
    %453 = arith.mulf %449, %448 : vector<8x32xf32>
    %454 = arith.addf %452, %453 : vector<8x32xf32>
    %455 = math.tanh %454 : vector<8x32xf32>
    %456 = arith.mulf %451, %455 : vector<8x32xf32>
    %457 = vector.extract_strided_slice %440 {offsets = [0, 0], sizes = [8, 96], strides = [1, 1]} : vector<8x128xf32> to vector<8x96xf32>
    %458 = arith.negf %457 : vector<8x96xf32>
    %459 = math.exp %458 : vector<8x96xf32>
    %cst_88 = arith.constant 1.000000e+00 : f32
    %460 = vector.broadcast %cst_88 : f32 to vector<8x96xf32>
    %461 = arith.addf %460, %459 : vector<8x96xf32>
    %462 = arith.divf %460, %461 : vector<8x96xf32>
    %463 = vector.extract_strided_slice %440 {offsets = [0, 96], sizes = [8, 32], strides = [1, 1]} : vector<8x128xf32> to vector<8x32xf32>
    %464 = math.tanh %463 : vector<8x32xf32>
    %465 = vector.extract_strided_slice %462 {offsets = [0, 0], sizes = [8, 32], strides = [1, 1]} : vector<8x96xf32> to vector<8x32xf32>
    %466 = vector.extract_strided_slice %462 {offsets = [0, 32], sizes = [8, 32], strides = [1, 1]} : vector<8x96xf32> to vector<8x32xf32>
    %467 = vector.extract_strided_slice %462 {offsets = [0, 64], sizes = [8, 32], strides = [1, 1]} : vector<8x96xf32> to vector<8x32xf32>
    %468 = arith.mulf %466, %430 : vector<8x32xf32>
    %469 = arith.mulf %465, %464 : vector<8x32xf32>
    %470 = arith.addf %468, %469 : vector<8x32xf32>
    %471 = math.tanh %470 : vector<8x32xf32>
    %472 = arith.mulf %467, %471 : vector<8x32xf32>
    %cst_89 = arith.constant dense<0.000000e+00> : vector<8x128xf32>
    %473 = tpu.matmul %456, %4, %cst_89 {dimension_numbers = #tpu.dot_dimension_numbers<[1], [0], [0], [1], [0, 0, 1, 1], [], []>} : vector<8x32xf32>, vector<32x128xf32>, vector<8x128xf32> -> vector<8x128xf32>
    %474 = arith.addf %8, %473 : vector<8x128xf32>
    %cst_90 = arith.constant dense<0.000000e+00> : vector<8x128xf32>
    %475 = tpu.matmul %472, %5, %cst_90 {dimension_numbers = #tpu.dot_dimension_numbers<[1], [0], [0], [1], [0, 0, 1, 1], [], []>} : vector<8x32xf32>, vector<32x128xf32>, vector<8x128xf32> -> vector<8x128xf32>
    %476 = arith.addf %474, %475 : vector<8x128xf32>
    %477 = vector.extract_strided_slice %476 {offsets = [0, 0], sizes = [8, 96], strides = [1, 1]} : vector<8x128xf32> to vector<8x96xf32>
    %478 = arith.negf %477 : vector<8x96xf32>
    %479 = math.exp %478 : vector<8x96xf32>
    %cst_91 = arith.constant 1.000000e+00 : f32
    %480 = vector.broadcast %cst_91 : f32 to vector<8x96xf32>
    %481 = arith.addf %480, %479 : vector<8x96xf32>
    %482 = arith.divf %480, %481 : vector<8x96xf32>
    %483 = vector.extract_strided_slice %476 {offsets = [0, 96], sizes = [8, 32], strides = [1, 1]} : vector<8x128xf32> to vector<8x32xf32>
    %484 = math.tanh %483 : vector<8x32xf32>
    %485 = vector.extract_strided_slice %482 {offsets = [0, 0], sizes = [8, 32], strides = [1, 1]} : vector<8x96xf32> to vector<8x32xf32>
    %486 = vector.extract_strided_slice %482 {offsets = [0, 32], sizes = [8, 32], strides = [1, 1]} : vector<8x96xf32> to vector<8x32xf32>
    %487 = vector.extract_strided_slice %482 {offsets = [0, 64], sizes = [8, 32], strides = [1, 1]} : vector<8x96xf32> to vector<8x32xf32>
    %488 = arith.mulf %486, %470 : vector<8x32xf32>
    %489 = arith.mulf %485, %484 : vector<8x32xf32>
    %490 = arith.addf %488, %489 : vector<8x32xf32>
    %491 = math.tanh %490 : vector<8x32xf32>
    %492 = arith.mulf %487, %491 : vector<8x32xf32>
    %c0_92 = arith.constant 0 : index
    %c0_93 = arith.constant 0 : index
    %493 = vector.load %arg3[%c0_92, %c0_93] : memref<32x2xf32, #tpu.memory_space<vmem>>, vector<32x2xf32>
    %cst_94 = arith.constant dense<0.000000e+00> : vector<8x2xf32>
    %494 = tpu.matmul %492, %493, %cst_94 {dimension_numbers = #tpu.dot_dimension_numbers<[1], [0], [0], [1], [0, 0, 1, 1], [], []>} : vector<8x32xf32>, vector<32x2xf32>, vector<8x2xf32> -> vector<8x2xf32>
    %c0_95 = arith.constant 0 : index
    %c0_96 = arith.constant 0 : index
    %495 = vector.load %arg4[%c0_95, %c0_96] : memref<1x2xf32, #tpu.memory_space<vmem>>, vector<1x2xf32>
    %496 = vector.broadcast %495 : vector<1x2xf32> to vector<8x2xf32>
    %497 = arith.addf %494, %496 : vector<8x2xf32>
    %cst_97 = arith.constant dense<0xFF800000> : vector<8xf32>
    %498 = vector.multi_reduction <maximumf>, %497, %cst_97 [1] : vector<8x2xf32> to vector<8xf32>
    %499 = vector.shape_cast %498 : vector<8xf32> to vector<8x1xf32>
    %500 = vector.broadcast %499 : vector<8x1xf32> to vector<8x2xf32>
    %501 = arith.subf %497, %500 : vector<8x2xf32>
    %502 = math.exp %501 : vector<8x2xf32>
    %cst_98 = arith.constant dense<0.000000e+00> : vector<8xf32>
    %503 = vector.multi_reduction <add>, %502, %cst_98 [1] : vector<8x2xf32> to vector<8xf32>
    %504 = vector.shape_cast %503 : vector<8xf32> to vector<8x1xf32>
    %505 = vector.broadcast %504 : vector<8x1xf32> to vector<8x2xf32>
    %506 = arith.divf %502, %505 : vector<8x2xf32>
    %c0_99 = arith.constant 0 : index
    %c0_100 = arith.constant 0 : index
    %507 = vector.load %arg5[%c0_99, %c0_100] : memref<8x2xf32, #tpu.memory_space<vmem>>, vector<8x2xf32>
    tpu.vector_store %arg5[%c0_99, %c0_100], %506 {strides = array<i32>} : memref<8x2xf32, #tpu.memory_space<vmem>>, vector<8x2xf32>,
    return
  }
}

</mosaic_0001>

<llo_original>
// kernel: my_lstm_forward.1
$region0: #{my_lstm_forward.1}
  #allocation0 [shape = 'u32[]', space=smem, size = 0x4, offset = 0x4, fixed_abs, tag = 'smem constant byte address 0x4 - core index']
  #allocation1 [shape = 'u32[144,128]{1,0:T(1,128)}', space=vmem, size = 0x12000, scoped, tag = 'internal scratch']
  #allocation2 [shape = 'f32[64,128]{1,0:T(8,128)}', space=vmem, size = 0x8000, scoped, tag = 'scratch operand']
  %s0 = inlined_call_operand.vmem [shape: f32[64,16], index: 0, kind: input, shape index: {}]
  %s1 = inlined_call_operand.vmem [shape: f32[176,128], index: 1, kind: input, shape index: {}]
  %s2 = inlined_call_operand.vmem [shape: f32[24,128], index: 2, kind: input, shape index: {}]
  %s3 = inlined_call_operand.vmem [shape: f32[32,2], index: 3, kind: input, shape index: {}]
  %s4 = inlined_call_operand.vmem [shape: f32[1,2], index: 4, kind: input, shape index: {}]
  %s5 = inlined_call_operand.vmem [shape: f32[8,2], index: 5, kind: output, shape index: {}]
  %s6 = sld [smem:[#allocation0]]
  $region30: #{my_lstm_forward.1} parent=0
    _
  %s8 = ssub.s32 1, %s6
  %s9 = scalar_select 0, %s8, %s6
  // Predicated region
  $region2: #{my_lstm_forward.1} parent=0 // pred_check
    _
  $region3: #{my_lstm_forward.1} parent=0 // pred_check_branch
    %11 = sbr.rel (0) target = $region5
  $region4: #{my_lstm_forward.1} parent=0 // pred_region
    _
  $region5: #{my_lstm_forward.1} parent=0 // pred_fallthru
    _
  // Predicated region
  $region6: #{my_lstm_forward.1} parent=0 // pred_check
    _
  $region7: #{my_lstm_forward.1} parent=0 // pred_check_branch
    %13 = sbr.rel (0) target = $region9
  $region8: #{my_lstm_forward.1} parent=0 // pred_region
    _
  $region9: #{my_lstm_forward.1} parent=0 // pred_fallthru
    _
  // Predicated region
  $region10: #{my_lstm_forward.1} parent=0 // pred_check
    _
  $region11: #{my_lstm_forward.1} parent=0 // pred_check_branch
    %15 = sbr.rel (0) target = $region13
  $region12: #{my_lstm_forward.1} parent=0 // pred_region
    _
  $region13: #{my_lstm_forward.1} parent=0 // pred_fallthru
    _
  // Predicated region
  $region14: #{my_lstm_forward.1} parent=0 // pred_check
    _
  $region15: #{my_lstm_forward.1} parent=0 // pred_check_branch
    %17 = sbr.rel (0) target = $region17
  $region16: #{my_lstm_forward.1} parent=0 // pred_region
    _
  $region17: #{my_lstm_forward.1} parent=0 // pred_fallthru
    _
  // Predicated region
  $region18: #{my_lstm_forward.1} parent=0 // pred_check
    _
  $region19: #{my_lstm_forward.1} parent=0 // pred_check_branch
    %19 = sbr.rel (0) target = $region21
  $region20: #{my_lstm_forward.1} parent=0 // pred_region
    _
  $region21: #{my_lstm_forward.1} parent=0 // pred_fallthru
    _
  %v20 = vld [vmem:[%s1] sm:$0xff]
  %v21 = vld [vmem:[%s1 + $0x8] sm:$0xff]
  %v22 = vld [vmem:[%s1 + $0x10] sm:$0xff]
  %v23 = vld [vmem:[%s1 + $0x18] sm:$0xff]
  %v24 = vld [vmem:[%s1 + $0x20] sm:$0xff]
  %v25 = vld [vmem:[%s1 + $0x28] sm:$0xff]
  %v26 = vld [vmem:[%s1 + $0x30] sm:$0xff]
  %v27 = vld [vmem:[%s1 + $0x38] sm:$0xff]
  %v28 = vld [vmem:[%s1 + $0x40] sm:$0xff]
  %v29 = vld [vmem:[%s1 + $0x48] sm:$0xff]
  %v30 = vld [vmem:[%s1 + $0x50] sm:$0xff]
  %v31 = vld [vmem:[%s1 + $0x58] sm:$0xff]
  %v32 = vld [vmem:[%s1 + $0x60] sm:$0xff]
  %v33 = vld [vmem:[%s1 + $0x68] sm:$0xff]
  %v34 = vld [vmem:[%s1 + $0x70] sm:$0xff]
  %v35 = vld [vmem:[%s1 + $0x78] sm:$0xff]
  %v36 = vld [vmem:[%s1 + $0x80] sm:$0xff]
  %v37 = vld [vmem:[%s1 + $0x88] sm:$0xff]
  %v38 = vld [vmem:[%s1 + $0x90] sm:$0xff]
  %v39 = vld [vmem:[%s1 + $0x98] sm:$0xff]
  %v40 = vld [vmem:[%s1 + $0xa0] sm:$0xff]
  %v41 = vld [vmem:[%s1 + $0xa8] sm:$0xff]
  %v42 = vld [vmem:[%s2] sm:$0xff]
  %v43 = vld [vmem:[%s2 + $0x8] sm:$0xff]
  %v44 = vld [vmem:[%s2 + $0x10] sm:$0xff]
  %v45 = vld [vmem:[%s0] sm:$0xff]
  %v46 = vld [vmem:[%s0 + $0x8] sm:$0xff]
  %v47 = vld [vmem:[%s0 + $0x10] sm:$0xff]
  %v48 = vld [vmem:[%s0 + $0x18] sm:$0xff]
  %v49 = vld [vmem:[%s0 + $0x20] sm:$0xff]
  %v50 = vld [vmem:[%s0 + $0x28] sm:$0xff]
  %v51 = vld [vmem:[%s0 + $0x30] sm:$0xff]
  %v52 = vld [vmem:[%s0 + $0x38] sm:$0xff]
  %vm53 = vcmask 130048
  %v55 = vsel %vm53, %v45, 0
  %v58 = vsel %vm53, %v46, 0
  %v61 = vsel %vm53, %v47, 0
  %v64 = vsel %vm53, %v48, 0
  %v67 = vsel %vm53, %v49, 0
  %v70 = vsel %vm53, %v50, 0
  %v73 = vsel %vm53, %v51, 0
  %v76 = vsel %vm53, %v52, 0
  %78 = vmatprep.subr.mxu0 0.0
  %79 = vmatpush1.msra.mxu0 %v20
  %80 = vmatprep.subr.mxu0 0.0
  %81 = vmatpush1.msra.mxu0 %v21
  %82 = vmatprep.subr.mxu0 0.0
  %83 = vmatpush1.msra.mxu0 0.0
  %84 = vmatprep.subr.mxu0 0.0
  %85 = vmatpush1.msra.mxu0 0.0
  %86 = vmatprep.subr.mxu0 0.0
  %87 = vmatpush1.msra.mxu0 0.0
  %88 = vmatprep.subr.mxu0 0.0
  %89 = vmatpush1.msra.mxu0 0.0
  %90 = vmatprep.subr.mxu0 0.0
  %91 = vmatpush1.msra.mxu0 0.0
  %92 = vmatprep.subr.mxu0 0.0
  %93 = vmatpush1.msra.mxu0 0.0
  %94 = vmatprep.subr.mxu0 0.0
  %95 = vmatpush1.msra.mxu0 0.0
  %96 = vmatprep.subr.mxu0 0.0
  %97 = vmatpush1.msra.mxu0 0.0
  %98 = vmatprep.subr.mxu0 0.0
  %99 = vmatpush1.msra.mxu0 0.0
  %100 = vmatprep.subr.mxu0 0.0
  %101 = vmatpush1.msra.mxu0 0.0
  %102 = vmatprep.subr.mxu0 0.0
  %103 = vmatpush1.msra.mxu0 0.0
  %104 = vmatprep.subr.mxu0 0.0
  %105 = vmatpush1.msra.mxu0 0.0
  %106 = vmatprep.subr.mxu0 0.0
  %107 = vmatpush1.msra.mxu0 0.0
  %108 = vmatprep.subr.mxu0 0.0
  %109 = vmatpush1.msra.mxu0 0.0
  %110 = vmatprep.subr.mxu0 0.0
  %111 = vmatpush1.msra.mxu0 0.0
  %112 = vmatprep.subr.mxu0 0.0
  %113 = vmatpush1.msra.mxu0 0.0
  %114 = vmatprep.subr.mxu0 0.0
  %115 = vmatpush1.msra.mxu0 0.0
  %116 = vmatprep.subr.mxu0 0.0
  %117 = vmatpush1.msra.mxu0 0.0
  %118 = vmatprep.subr.mxu0 0.0
  %119 = vmatpush1.msra.mxu0 0.0
  %120 = vmatprep.subr.mxu0 0.0
  %121 = vmatpush1.msra.mxu0 0.0
  %122 = vmatprep.subr.mxu0 0.0
  %123 = vmatpush1.msra.mxu0 0.0
  %124 = vmatprep.subr.mxu0 0.0
  %125 = vmatpush1.msra.mxu0 0.0
  %126 = vmatprep.subr.mxu0 0.0
  %127 = vmatpush1.msra.mxu0 0.0
  %128 = vmatprep.subr.mxu0 0.0
  %129 = vmatpush1.msra.mxu0 0.0
  %130 = vmatprep.subr.mxu0 0.0
  %131 = vmatpush1.msra.mxu0 0.0
  %132 = vmatprep.subr.mxu0 0.0
  %133 = vmatpush1.msra.mxu0 0.0
  %134 = vmatprep.subr.mxu0 0.0
  %135 = vmatpush1.msra.mxu0 0.0
  %136 = vmatprep.subr.mxu0 0.0
  %137 = vmatpush1.msra.mxu0 0.0
  %138 = vmatprep.subr.mxu0 0.0
  %139 = vmatpush1.msra.mxu0 0.0
  %140 = vmatprep.subr.mxu0 0.0
  %141 = vmatpush1.msra.mxu0 0.0
  %142 = vmatprep.mubr.f32.mxu0 0.0
  %143 = vmatmul.mubr.f32.gmra.mrb[0].mxu0 %v55
  %v144 = vpop.f32.mrb[0].mxu0
  %v145 = vadd.f32 0.0, %v144
  %v146 = vpop.f32.mrb[0].mxu0
  %147 = vmatprep.mubr.f32.mxu0 0.0
  %148 = vmatmul.mubr.f32.gmra.mrb[0].mxu0 %v58
  %v149 = vpop.f32.mrb[0].mxu0
  %v150 = vadd.f32 0.0, %v149
  %v151 = vpop.f32.mrb[0].mxu0
  %152 = vmatprep.mubr.f32.mxu0 0.0
  %153 = vmatmul.mubr.f32.gmra.mrb[0].mxu0 %v61
  %v154 = vpop.f32.mrb[0].mxu0
  %v155 = vadd.f32 0.0, %v154
  %v156 = vpop.f32.mrb[0].mxu0
  %157 = vmatprep.mubr.f32.mxu0 0.0
  %158 = vmatmul.mubr.f32.gmra.mrb[0].mxu0 %v64
  %v159 = vpop.f32.mrb[0].mxu0
  %v160 = vadd.f32 0.0, %v159
  %v161 = vpop.f32.mrb[0].mxu0
  %162 = vmatprep.mubr.f32.mxu0 0.0
  %163 = vmatmul.mubr.f32.gmra.mrb[0].mxu0 %v67
  %v164 = vpop.f32.mrb[0].mxu0
  %v165 = vadd.f32 0.0, %v164
  %v166 = vpop.f32.mrb[0].mxu0
  %167 = vmatprep.mubr.f32.mxu0 0.0
  %168 = vmatmul.mubr.f32.gmra.mrb[0].mxu0 %v70
  %v169 = vpop.f32.mrb[0].mxu0
  %v170 = vadd.f32 0.0, %v169
  %v171 = vpop.f32.mrb[0].mxu0
  %172 = vmatprep.mubr.f32.mxu0 0.0
  %173 = vmatmul.mubr.f32.gmra.mrb[0].mxu0 %v73
  %v174 = vpop.f32.mrb[0].mxu0
  %v175 = vadd.f32 0.0, %v174
  %v176 = vpop.f32.mrb[0].mxu0
  %177 = vmatprep.mubr.f32.mxu0 0.0
  %178 = vmatmul.mubr.f32.gmra.mrb[0].mxu0 %v76
  %v179 = vpop.f32.mrb[0].mxu0
  %v180 = vadd.f32 0.0, %v179
  %v181 = vpop.f32.mrb[0].mxu0
  %182 = vdwg.mxu0
  %183 = vst [vmem:[#allocation2] sm:$0xff] %v145
  %184 = vst [vmem:[#allocation2 + $0x8] sm:$0xff] %v150
  %185 = vst [vmem:[#allocation2 + $0x10] sm:$0xff] %v155
  %186 = vst [vmem:[#allocation2 + $0x18] sm:$0xff] %v160
  %187 = vst [vmem:[#allocation2 + $0x20] sm:$0xff] %v165
  %188 = vst [vmem:[#allocation2 + $0x28] sm:$0xff] %v170
  %189 = vst [vmem:[#allocation2 + $0x30] sm:$0xff] %v175
  %190 = vst [vmem:[#allocation2 + $0x38] sm:$0xff] %v180
  %v191 = vld [vmem:[#allocation2] sm:$0xff]
  %v192 = vadd.f32 %v191, %v42
  %vm193 = vcmask 261120
  %v195 = vsel %vm193, 0.0, 0
  %197 = vmatprep.subr.mxu0 0.0
  %198 = vmatpush1.msra.mxu0 %v22
  %199 = vmatprep.subr.mxu0 0.0
  %200 = vmatpush1.msra.mxu0 %v23
  %201 = vmatprep.subr.mxu0 0.0
  %202 = vmatpush1.msra.mxu0 %v24
  %203 = vmatprep.subr.mxu0 0.0
  %204 = vmatpush1.msra.mxu0 %v25
  %205 = vmatprep.subr.mxu0 0.0
  %206 = vmatpush1.msra.mxu0 0.0
  %207 = vmatprep.subr.mxu0 0.0
  %208 = vmatpush1.msra.mxu0 0.0
  %209 = vmatprep.subr.mxu0 0.0
  %210 = vmatpush1.msra.mxu0 0.0
  %211 = vmatprep.subr.mxu0 0.0
  %212 = vmatpush1.msra.mxu0 0.0
  %213 = vmatprep.subr.mxu0 0.0
  %214 = vmatpush1.msra.mxu0 0.0
  %215 = vmatprep.subr.mxu0 0.0
  %216 = vmatpush1.msra.mxu0 0.0
  %217 = vmatprep.subr.mxu0 0.0
  %218 = vmatpush1.msra.mxu0 0.0
  %219 = vmatprep.subr.mxu0 0.0
  %220 = vmatpush1.msra.mxu0 0.0
  %221 = vmatprep.subr.mxu0 0.0
  %222 = vmatpush1.msra.mxu0 0.0
  %223 = vmatprep.subr.mxu0 0.0
  %224 = vmatpush1.msra.mxu0 0.0
  %225 = vmatprep.subr.mxu0 0.0
  %226 = vmatpush1.msra.mxu0 0.0
  %227 = vmatprep.subr.mxu0 0.0
  %228 = vmatpush1.msra.mxu0 0.0
  %229 = vmatprep.subr.mxu0 0.0
  %230 = vmatpush1.msra.mxu0 0.0
  %231 = vmatprep.subr.mxu0 0.0
  %232 = vmatpush1.msra.mxu0 0.0
  %233 = vmatprep.subr.mxu0 0.0
  %234 = vmatpush1.msra.mxu0 0.0
  %235 = vmatprep.subr.mxu0 0.0
  %236 = vmatpush1.msra.mxu0 0.0
  %237 = vmatprep.subr.mxu0 0.0
  %238 = vmatpush1.msra.mxu0 0.0
  %239 = vmatprep.subr.mxu0 0.0
  %240 = vmatpush1.msra.mxu0 0.0
  %241 = vmatprep.subr.mxu0 0.0
  %242 = vmatpush1.msra.mxu0 0.0
  %243 = vmatprep.subr.mxu0 0.0
  %244 = vmatpush1.msra.mxu0 0.0
  %245 = vmatprep.subr.mxu0 0.0
  %246 = vmatpush1.msra.mxu0 0.0
  %247 = vmatprep.subr.mxu0 0.0
  %248 = vmatpush1.msra.mxu0 0.0
  %249 = vmatprep.subr.mxu0 0.0
  %250 = vmatpush1.msra.mxu0 0.0
  %251 = vmatprep.subr.mxu0 0.0
  %252 = vmatpush1.msra.mxu0 0.0
  %253 = vmatprep.subr.mxu0 0.0
  %254 = vmatpush1.msra.mxu0 0.0
  %255 = vmatprep.subr.mxu0 0.0
  %256 = vmatpush1.msra.mxu0 0.0
  %257 = vmatprep.subr.mxu0 0.0
  %258 = vmatpush1.msra.mxu0 0.0
  %259 = vmatprep.subr.mxu0 0.0
  %260 = vmatpush1.msra.mxu0 0.0
  %261 = vmatprep.mubr.f32.mxu0 0.0
  %262 = vmatmul.mubr.f32.gmra.mrb[0].mxu0 %v195
  %v263 = vpop.f32.mrb[0].mxu0
  %v264 = vadd.f32 0.0, %v263
  %v265 = vpop.f32.mrb[0].mxu0
  %266 = vdwg.mxu0
  %v267 = vadd.f32 %v192, %v264
  %v268 = vxor.u32 %v267, 2147483648
  %v269 = vmul.f32 %v268, 1.442695
  %v270 = vpow.pop %v269
  %v271 = vadd.f32 %v270, 1.0
  %v272 = vrcp.pop %v271
  %v273 = vmul.f32 1.0, %v272
  %v274 = vtanh.pop %v267
  %v275 = vmul.f32 %v273, 0.0
  %277 = vrot.lane.b32.xlu0 %v274, 32
  %v278 = vpop.permute.xlu0 %277
  %v280 = vmul.f32 %v273, %v278
  %282 = vrot.lane.b32.xlu0 %v280, 32
  %v283 = vpop.permute.xlu0 %282
  %v285 = vadd.f32 %v275, %v283
  %v286 = vtanh.pop %v285
  %288 = vrot.lane.b32.xlu0 %v286, 32
  %v289 = vpop.permute.xlu0 %288
  %v291 = vmul.f32 %v273, %v289
  %v292 = vld [vmem:[#allocation2 + $0x8] sm:$0xff]
  %v293 = vadd.f32 %v292, %v42
  %295 = vrot.lane.b32.xlu0 %v291, 64
  %v296 = vpop.permute.xlu0 %295
  %v297 = vsel %vm193, %v296, 0
  %299 = vmatprep.subr.mxu0 0.0
  %300 = vmatpush1.msra.mxu0 %v22
  %301 = vmatprep.subr.mxu0 0.0
  %302 = vmatpush1.msra.mxu0 %v23
  %303 = vmatprep.subr.mxu0 0.0
  %304 = vmatpush1.msra.mxu0 %v24
  %305 = vmatprep.subr.mxu0 0.0
  %306 = vmatpush1.msra.mxu0 %v25
  %307 = vmatprep.subr.mxu0 0.0
  %308 = vmatpush1.msra.mxu0 0.0
  %309 = vmatprep.subr.mxu0 0.0
  %310 = vmatpush1.msra.mxu0 0.0
  %311 = vmatprep.subr.mxu0 0.0
  %312 = vmatpush1.msra.mxu0 0.0
  %313 = vmatprep.subr.mxu0 0.0
  %314 = vmatpush1.msra.mxu0 0.0
  %315 = vmatprep.subr.mxu0 0.0
  %316 = vmatpush1.msra.mxu0 0.0
  %317 = vmatprep.subr.mxu0 0.0
  %318 = vmatpush1.msra.mxu0 0.0
  %319 = vmatprep.subr.mxu0 0.0
  %320 = vmatpush1.msra.mxu0 0.0
  %321 = vmatprep.subr.mxu0 0.0
  %322 = vmatpush1.msra.mxu0 0.0
  %323 = vmatprep.subr.mxu0 0.0
  %324 = vmatpush1.msra.mxu0 0.0
  %325 = vmatprep.subr.mxu0 0.0
  %326 = vmatpush1.msra.mxu0 0.0
  %327 = vmatprep.subr.mxu0 0.0
  %328 = vmatpush1.msra.mxu0 0.0
  %329 = vmatprep.subr.mxu0 0.0
  %330 = vmatpush1.msra.mxu0 0.0
  %331 = vmatprep.subr.mxu0 0.0
  %332 = vmatpush1.msra.mxu0 0.0
  %333 = vmatprep.subr.mxu0 0.0
  %334 = vmatpush1.msra.mxu0 0.0
  %335 = vmatprep.subr.mxu0 0.0
  %336 = vmatpush1.msra.mxu0 0.0
  %337 = vmatprep.subr.mxu0 0.0
  %338 = vmatpush1.msra.mxu0 0.0
  %339 = vmatprep.subr.mxu0 0.0
  %340 = vmatpush1.msra.mxu0 0.0
  %341 = vmatprep.subr.mxu0 0.0
  %342 = vmatpush1.msra.mxu0 0.0
  %343 = vmatprep.subr.mxu0 0.0
  %344 = vmatpush1.msra.mxu0 0.0
  %345 = vmatprep.subr.mxu0 0.0
  %346 = vmatpush1.msra.mxu0 0.0
  %347 = vmatprep.subr.mxu0 0.0
  %348 = vmatpush1.msra.mxu0 0.0
  %349 = vmatprep.subr.mxu0 0.0
  %350 = vmatpush1.msra.mxu0 0.0
  %351 = vmatprep.subr.mxu0 0.0
  %352 = vmatpush1.msra.mxu0 0.0
  %353 = vmatprep.subr.mxu0 0.0
  %354 = vmatpush1.msra.mxu0 0.0
  %355 = vmatprep.subr.mxu0 0.0
  %356 = vmatpush1.msra.mxu0 0.0
  %357 = vmatprep.subr.mxu0 0.0
  %358 = vmatpush1.msra.mxu0 0.0
  %359 = vmatprep.subr.mxu0 0.0
  %360 = vmatpush1.msra.mxu0 0.0
  %361 = vmatprep.subr.mxu0 0.0
  %362 = vmatpush1.msra.mxu0 0.0
  %363 = vmatprep.mubr.f32.mxu0 0.0
  %364 = vmatmul.mubr.f32.gmra.mrb[0].mxu0 %v297
  %v365 = vpop.f32.mrb[0].mxu0
  %v366 = vadd.f32 0.0, %v365
  %v367 = vpop.f32.mrb[0].mxu0
  %368 = vdwg.mxu0
  %v369 = vadd.f32 %v293, %v366
  %370 = vmatprep.subr.mxu0 0.0
  %371 = vmatpush1.msra.mxu0 %v26
  %372 = vmatprep.subr.mxu0 0.0
  %373 = vmatpush1.msra.mxu0 %v27
  %374 = vmatprep.subr.mxu0 0.0
  %375 = vmatpush1.msra.mxu0 %v28
  %376 = vmatprep.subr.mxu0 0.0
  %377 = vmatpush1.msra.mxu0 %v29
  %378 = vmatprep.subr.mxu0 0.0
  %379 = vmatpush1.msra.mxu0 0.0
  %380 = vmatprep.subr.mxu0 0.0
  %381 = vmatpush1.msra.mxu0 0.0
  %382 = vmatprep.subr.mxu0 0.0
  %383 = vmatpush1.msra.mxu0 0.0
  %384 = vmatprep.subr.mxu0 0.0
  %385 = vmatpush1.msra.mxu0 0.0
  %386 = vmatprep.subr.mxu0 0.0
  %387 = vmatpush1.msra.mxu0 0.0
  %388 = vmatprep.subr.mxu0 0.0
  %389 = vmatpush1.msra.mxu0 0.0
  %390 = vmatprep.subr.mxu0 0.0
  %391 = vmatpush1.msra.mxu0 0.0
  %392 = vmatprep.subr.mxu0 0.0
  %393 = vmatpush1.msra.mxu0 0.0
  %394 = vmatprep.subr.mxu0 0.0
  %395 = vmatpush1.msra.mxu0 0.0
  %396 = vmatprep.subr.mxu0 0.0
  %397 = vmatpush1.msra.mxu0 0.0
  %398 = vmatprep.subr.mxu0 0.0
  %399 = vmatpush1.msra.mxu0 0.0
  %400 = vmatprep.subr.mxu0 0.0
  %401 = vmatpush1.msra.mxu0 0.0
  %402 = vmatprep.subr.mxu0 0.0
  %403 = vmatpush1.msra.mxu0 0.0
  %404 = vmatprep.subr.mxu0 0.0
  %405 = vmatpush1.msra.mxu0 0.0
  %406 = vmatprep.subr.mxu0 0.0
  %407 = vmatpush1.msra.mxu0 0.0
  %408 = vmatprep.subr.mxu0 0.0
  %409 = vmatpush1.msra.mxu0 0.0
  %410 = vmatprep.subr.mxu0 0.0
  %411 = vmatpush1.msra.mxu0 0.0
  %412 = vmatprep.subr.mxu0 0.0
  %413 = vmatpush1.msra.mxu0 0.0
  %414 = vmatprep.subr.mxu0 0.0
  %415 = vmatpush1.msra.mxu0 0.0
  %416 = vmatprep.subr.mxu0 0.0
  %417 = vmatpush1.msra.mxu0 0.0
  %418 = vmatprep.subr.mxu0 0.0
  %419 = vmatpush1.msra.mxu0 0.0
  %420 = vmatprep.subr.mxu0 0.0
  %421 = vmatpush1.msra.mxu0 0.0
  %422 = vmatprep.subr.mxu0 0.0
  %423 = vmatpush1.msra.mxu0 0.0
  %424 = vmatprep.subr.mxu0 0.0
  %425 = vmatpush1.msra.mxu0 0.0
  %426 = vmatprep.subr.mxu0 0.0
  %427 = vmatpush1.msra.mxu0 0.0
  %428 = vmatprep.subr.mxu0 0.0
  %429 = vmatpush1.msra.mxu0 0.0
  %430 = vmatprep.subr.mxu0 0.0
  %431 = vmatpush1.msra.mxu0 0.0
  %432 = vmatprep.subr.mxu0 0.0
  %433 = vmatpush1.msra.mxu0 0.0
  %434 = vmatprep.mubr.f32.mxu0 0.0
  %435 = vmatmul.mubr.f32.gmra.mrb[0].mxu0 %v297
  %v436 = vpop.f32.mrb[0].mxu0
  %v437 = vadd.f32 0.0, %v436
  %v438 = vpop.f32.mrb[0].mxu0
  %439 = vdwg.mxu0
  %v440 = vadd.f32 %v43, %v437
  %441 = vmatprep.subr.mxu0 0.0
  %442 = vmatpush1.msra.mxu0 %v30
  %443 = vmatprep.subr.mxu0 0.0
  %444 = vmatpush1.msra.mxu0 %v31
  %445 = vmatprep.subr.mxu0 0.0
  %446 = vmatpush1.msra.mxu0 %v32
  %447 = vmatprep.subr.mxu0 0.0
  %448 = vmatpush1.msra.mxu0 %v33
  %449 = vmatprep.subr.mxu0 0.0
  %450 = vmatpush1.msra.mxu0 0.0
  %451 = vmatprep.subr.mxu0 0.0
  %452 = vmatpush1.msra.mxu0 0.0
  %453 = vmatprep.subr.mxu0 0.0
  %454 = vmatpush1.msra.mxu0 0.0
  %455 = vmatprep.subr.mxu0 0.0
  %456 = vmatpush1.msra.mxu0 0.0
  %457 = vmatprep.subr.mxu0 0.0
  %458 = vmatpush1.msra.mxu0 0.0
  %459 = vmatprep.subr.mxu0 0.0
  %460 = vmatpush1.msra.mxu0 0.0
  %461 = vmatprep.subr.mxu0 0.0
  %462 = vmatpush1.msra.mxu0 0.0
  %463 = vmatprep.subr.mxu0 0.0
  %464 = vmatpush1.msra.mxu0 0.0
  %465 = vmatprep.subr.mxu0 0.0
  %466 = vmatpush1.msra.mxu0 0.0
  %467 = vmatprep.subr.mxu0 0.0
  %468 = vmatpush1.msra.mxu0 0.0
  %469 = vmatprep.subr.mxu0 0.0
  %470 = vmatpush1.msra.mxu0 0.0
  %471 = vmatprep.subr.mxu0 0.0
  %472 = vmatpush1.msra.mxu0 0.0
  %473 = vmatprep.subr.mxu0 0.0
  %474 = vmatpush1.msra.mxu0 0.0
  %475 = vmatprep.subr.mxu0 0.0
  %476 = vmatpush1.msra.mxu0 0.0
  %477 = vmatprep.subr.mxu0 0.0
  %478 = vmatpush1.msra.mxu0 0.0
  %479 = vmatprep.subr.mxu0 0.0
  %480 = vmatpush1.msra.mxu0 0.0
  %481 = vmatprep.subr.mxu0 0.0
  %482 = vmatpush1.msra.mxu0 0.0
  %483 = vmatprep.subr.mxu0 0.0
  %484 = vmatpush1.msra.mxu0 0.0
  %485 = vmatprep.subr.mxu0 0.0
  %486 = vmatpush1.msra.mxu0 0.0
  %487 = vmatprep.subr.mxu0 0.0
  %488 = vmatpush1.msra.mxu0 0.0
  %489 = vmatprep.subr.mxu0 0.0
  %490 = vmatpush1.msra.mxu0 0.0
  %491 = vmatprep.subr.mxu0 0.0
  %492 = vmatpush1.msra.mxu0 0.0
  %493 = vmatprep.subr.mxu0 0.0
  %494 = vmatpush1.msra.mxu0 0.0
  %495 = vmatprep.subr.mxu0 0.0
  %496 = vmatpush1.msra.mxu0 0.0
  %497 = vmatprep.subr.mxu0 0.0
  %498 = vmatpush1.msra.mxu0 0.0
  %499 = vmatprep.subr.mxu0 0.0
  %500 = vmatpush1.msra.mxu0 0.0
  %501 = vmatprep.subr.mxu0 0.0
  %502 = vmatpush1.msra.mxu0 0.0
  %503 = vmatprep.subr.mxu0 0.0
  %504 = vmatpush1.msra.mxu0 0.0
  %505 = vmatprep.mubr.f32.mxu0 0.0
  %506 = vmatmul.mubr.f32.gmra.mrb[0].mxu0 %v195
  %v507 = vpop.f32.mrb[0].mxu0
  %v508 = vadd.f32 0.0, %v507
  %v509 = vpop.f32.mrb[0].mxu0
  %510 = vdwg.mxu0
  %v511 = vadd.f32 %v440, %v508
  %v512 = vxor.u32 %v369, 2147483648
  %v513 = vmul.f32 %v512, 1.442695
  %v514 = vpow.pop %v513
  %v515 = vadd.f32 %v514, 1.0
  %v516 = vrcp.pop %v515
  %v517 = vmul.f32 1.0, %v516
  %v518 = vtanh.pop %v369
  %v519 = vmul.f32 %v517, %v285
  %521 = vrot.lane.b32.xlu0 %v518, 32
  %v522 = vpop.permute.xlu0 %521
  %v524 = vmul.f32 %v517, %v522
  %526 = vrot.lane.b32.xlu0 %v524, 32
  %v527 = vpop.permute.xlu0 %526
  %v529 = vadd.f32 %v519, %v527
  %v530 = vtanh.pop %v529
  %532 = vrot.lane.b32.xlu0 %v530, 32
  %v533 = vpop.permute.xlu0 %532
  %v535 = vmul.f32 %v517, %v533
  %v536 = vxor.u32 %v511, 2147483648
  %v537 = vmul.f32 %v536, 1.442695
  %v538 = vpow.pop %v537
  %v539 = vadd.f32 %v538, 1.0
  %v540 = vrcp.pop %v539
  %v541 = vmul.f32 1.0, %v540
  %v542 = vtanh.pop %v511
  %v543 = vmul.f32 %v541, 0.0
  %545 = vrot.lane.b32.xlu0 %v542, 32
  %v546 = vpop.permute.xlu0 %545
  %v548 = vmul.f32 %v541, %v546
  %550 = vrot.lane.b32.xlu0 %v548, 32
  %v551 = vpop.permute.xlu0 %550
  %v553 = vadd.f32 %v543, %v551
  %v554 = vtanh.pop %v553
  %556 = vrot.lane.b32.xlu0 %v554, 32
  %v557 = vpop.permute.xlu0 %556
  %v559 = vmul.f32 %v541, %v557
  %v560 = vld [vmem:[#allocation2 + $0x10] sm:$0xff]
  %v561 = vadd.f32 %v560, %v42
  %563 = vrot.lane.b32.xlu0 %v535, 64
  %v564 = vpop.permute.xlu0 %563
  %v565 = vsel %vm193, %v564, 0
  %567 = vmatprep.subr.mxu0 0.0
  %568 = vmatpush1.msra.mxu0 %v22
  %569 = vmatprep.subr.mxu0 0.0
  %570 = vmatpush1.msra.mxu0 %v23
  %571 = vmatprep.subr.mxu0 0.0
  %572 = vmatpush1.msra.mxu0 %v24
  %573 = vmatprep.subr.mxu0 0.0
  %574 = vmatpush1.msra.mxu0 %v25
  %575 = vmatprep.subr.mxu0 0.0
  %576 = vmatpush1.msra.mxu0 0.0
  %577 = vmatprep.subr.mxu0 0.0
  %578 = vmatpush1.msra.mxu0 0.0
  %579 = vmatprep.subr.mxu0 0.0
  %580 = vmatpush1.msra.mxu0 0.0
  %581 = vmatprep.subr.mxu0 0.0
  %582 = vmatpush1.msra.mxu0 0.0
  %583 = vmatprep.subr.mxu0 0.0
  %584 = vmatpush1.msra.mxu0 0.0
  %585 = vmatprep.subr.mxu0 0.0
  %586 = vmatpush1.msra.mxu0 0.0
  %587 = vmatprep.subr.mxu0 0.0
  %588 = vmatpush1.msra.mxu0 0.0
  %589 = vmatprep.subr.mxu0 0.0
  %590 = vmatpush1.msra.mxu0 0.0
  %591 = vmatprep.subr.mxu0 0.0
  %592 = vmatpush1.msra.mxu0 0.0
  %593 = vmatprep.subr.mxu0 0.0
  %594 = vmatpush1.msra.mxu0 0.0
  %595 = vmatprep.subr.mxu0 0.0
  %596 = vmatpush1.msra.mxu0 0.0
  %597 = vmatprep.subr.mxu0 0.0
  %598 = vmatpush1.msra.mxu0 0.0
  %599 = vmatprep.subr.mxu0 0.0
  %600 = vmatpush1.msra.mxu0 0.0
  %601 = vmatprep.subr.mxu0 0.0
  %602 = vmatpush1.msra.mxu0 0.0
  %603 = vmatprep.subr.mxu0 0.0
  %604 = vmatpush1.msra.mxu0 0.0
  %605 = vmatprep.subr.mxu0 0.0
  %606 = vmatpush1.msra.mxu0 0.0
  %607 = vmatprep.subr.mxu0 0.0
  %608 = vmatpush1.msra.mxu0 0.0
  %609 = vmatprep.subr.mxu0 0.0
  %610 = vmatpush1.msra.mxu0 0.0
  %611 = vmatprep.subr.mxu0 0.0
  %612 = vmatpush1.msra.mxu0 0.0
  %613 = vmatprep.subr.mxu0 0.0
  %614 = vmatpush1.msra.mxu0 0.0
  %615 = vmatprep.subr.mxu0 0.0
  %616 = vmatpush1.msra.mxu0 0.0
  %617 = vmatprep.subr.mxu0 0.0
  %618 = vmatpush1.msra.mxu0 0.0
  %619 = vmatprep.subr.mxu0 0.0
  %620 = vmatpush1.msra.mxu0 0.0
  %621 = vmatprep.subr.mxu0 0.0
  %622 = vmatpush1.msra.mxu0 0.0
  %623 = vmatprep.subr.mxu0 0.0
  %624 = vmatpush1.msra.mxu0 0.0
  %625 = vmatprep.subr.mxu0 0.0
  %626 = vmatpush1.msra.mxu0 0.0
  %627 = vmatprep.subr.mxu0 0.0
  %628 = vmatpush1.msra.mxu0 0.0
  %629 = vmatprep.subr.mxu0 0.0
  %630 = vmatpush1.msra.mxu0 0.0
  %631 = vmatprep.mubr.f32.mxu0 0.0
  %632 = vmatmul.mubr.f32.gmra.mrb[0].mxu0 %v565
  %v633 = vpop.f32.mrb[0].mxu0
  %v634 = vadd.f32 0.0, %v633
  %v635 = vpop.f32.mrb[0].mxu0
  %636 = vdwg.mxu0
  %v637 = vadd.f32 %v561, %v634
  %638 = vmatprep.subr.mxu0 0.0
  %639 = vmatpush1.msra.mxu0 %v26
  %640 = vmatprep.subr.mxu0 0.0
  %641 = vmatpush1.msra.mxu0 %v27
  %642 = vmatprep.subr.mxu0 0.0
  %643 = vmatpush1.msra.mxu0 %v28
  %644 = vmatprep.subr.mxu0 0.0
  %645 = vmatpush1.msra.mxu0 %v29
  %646 = vmatprep.subr.mxu0 0.0
  %647 = vmatpush1.msra.mxu0 0.0
  %648 = vmatprep.subr.mxu0 0.0
  %649 = vmatpush1.msra.mxu0 0.0
  %650 = vmatprep.subr.mxu0 0.0
  %651 = vmatpush1.msra.mxu0 0.0
  %652 = vmatprep.subr.mxu0 0.0
  %653 = vmatpush1.msra.mxu0 0.0
  %654 = vmatprep.subr.mxu0 0.0
  %655 = vmatpush1.msra.mxu0 0.0
  %656 = vmatprep.subr.mxu0 0.0
  %657 = vmatpush1.msra.mxu0 0.0
  %658 = vmatprep.subr.mxu0 0.0
  %659 = vmatpush1.msra.mxu0 0.0
  %660 = vmatprep.subr.mxu0 0.0
  %661 = vmatpush1.msra.mxu0 0.0
  %662 = vmatprep.subr.mxu0 0.0
  %663 = vmatpush1.msra.mxu0 0.0
  %664 = vmatprep.subr.mxu0 0.0
  %665 = vmatpush1.msra.mxu0 0.0
  %666 = vmatprep.subr.mxu0 0.0
  %667 = vmatpush1.msra.mxu0 0.0
  %668 = vmatprep.subr.mxu0 0.0
  %669 = vmatpush1.msra.mxu0 0.0
  %670 = vmatprep.subr.mxu0 0.0
  %671 = vmatpush1.msra.mxu0 0.0
  %672 = vmatprep.subr.mxu0 0.0
  %673 = vmatpush1.msra.mxu0 0.0
  %674 = vmatprep.subr.mxu0 0.0
  %675 = vmatpush1.msra.mxu0 0.0
  %676 = vmatprep.subr.mxu0 0.0
  %677 = vmatpush1.msra.mxu0 0.0
  %678 = vmatprep.subr.mxu0 0.0
  %679 = vmatpush1.msra.mxu0 0.0
  %680 = vmatprep.subr.mxu0 0.0
  %681 = vmatpush1.msra.mxu0 0.0
  %682 = vmatprep.subr.mxu0 0.0
  %683 = vmatpush1.msra.mxu0 0.0
  %684 = vmatprep.subr.mxu0 0.0
  %685 = vmatpush1.msra.mxu0 0.0
  %686 = vmatprep.subr.mxu0 0.0
  %687 = vmatpush1.msra.mxu0 0.0
  %688 = vmatprep.subr.mxu0 0.0
  %689 = vmatpush1.msra.mxu0 0.0
  %690 = vmatprep.subr.mxu0 0.0
  %691 = vmatpush1.msra.mxu0 0.0
  %692 = vmatprep.subr.mxu0 0.0
  %693 = vmatpush1.msra.mxu0 0.0
  %694 = vmatprep.subr.mxu0 0.0
  %695 = vmatpush1.msra.mxu0 0.0
  %696 = vmatprep.subr.mxu0 0.0
  %697 = vmatpush1.msra.mxu0 0.0
  %698 = vmatprep.subr.mxu0 0.0
  %699 = vmatpush1.msra.mxu0 0.0
  %700 = vmatprep.subr.mxu0 0.0
  %701 = vmatpush1.msra.mxu0 0.0
  %702 = vmatprep.mubr.f32.mxu0 0.0
  %703 = vmatmul.mubr.f32.gmra.mrb[0].mxu0 %v565
  %v704 = vpop.f32.mrb[0].mxu0
  %v705 = vadd.f32 0.0, %v704
  %v706 = vpop.f32.mrb[0].mxu0
  %707 = vdwg.mxu0
  %v708 = vadd.f32 %v43, %v705
  %710 = vrot.lane.b32.xlu0 %v559, 64
  %v711 = vpop.permute.xlu0 %710
  %v712 = vsel %vm193, %v711, 0
  %714 = vmatprep.subr.mxu0 0.0
  %715 = vmatpush1.msra.mxu0 %v30
  %716 = vmatprep.subr.mxu0 0.0
  %717 = vmatpush1.msra.mxu0 %v31
  %718 = vmatprep.subr.mxu0 0.0
  %719 = vmatpush1.msra.mxu0 %v32
  %720 = vmatprep.subr.mxu0 0.0
  %721 = vmatpush1.msra.mxu0 %v33
  %722 = vmatprep.subr.mxu0 0.0
  %723 = vmatpush1.msra.mxu0 0.0
  %724 = vmatprep.subr.mxu0 0.0
  %725 = vmatpush1.msra.mxu0 0.0
  %726 = vmatprep.subr.mxu0 0.0
  %727 = vmatpush1.msra.mxu0 0.0
  %728 = vmatprep.subr.mxu0 0.0
  %729 = vmatpush1.msra.mxu0 0.0
  %730 = vmatprep.subr.mxu0 0.0
  %731 = vmatpush1.msra.mxu0 0.0
  %732 = vmatprep.subr.mxu0 0.0
  %733 = vmatpush1.msra.mxu0 0.0
  %734 = vmatprep.subr.mxu0 0.0
  %735 = vmatpush1.msra.mxu0 0.0
  %736 = vmatprep.subr.mxu0 0.0
  %737 = vmatpush1.msra.mxu0 0.0
  %738 = vmatprep.subr.mxu0 0.0
  %739 = vmatpush1.msra.mxu0 0.0
  %740 = vmatprep.subr.mxu0 0.0
  %741 = vmatpush1.msra.mxu0 0.0
  %742 = vmatprep.subr.mxu0 0.0
  %743 = vmatpush1.msra.mxu0 0.0
  %744 = vmatprep.subr.mxu0 0.0
  %745 = vmatpush1.msra.mxu0 0.0
  %746 = vmatprep.subr.mxu0 0.0
  %747 = vmatpush1.msra.mxu0 0.0
  %748 = vmatprep.subr.mxu0 0.0
  %749 = vmatpush1.msra.mxu0 0.0
  %750 = vmatprep.subr.mxu0 0.0
  %751 = vmatpush1.msra.mxu0 0.0
  %752 = vmatprep.subr.mxu0 0.0
  %753 = vmatpush1.msra.mxu0 0.0
  %754 = vmatprep.subr.mxu0 0.0
  %755 = vmatpush1.msra.mxu0 0.0
  %756 = vmatprep.subr.mxu0 0.0
  %757 = vmatpush1.msra.mxu0 0.0
  %758 = vmatprep.subr.mxu0 0.0
  %759 = vmatpush1.msra.mxu0 0.0
  %760 = vmatprep.subr.mxu0 0.0
  %761 = vmatpush1.msra.mxu0 0.0
  %762 = vmatprep.subr.mxu0 0.0
  %763 = vmatpush1.msra.mxu0 0.0
  %764 = vmatprep.subr.mxu0 0.0
  %765 = vmatpush1.msra.mxu0 0.0
  %766 = vmatprep.subr.mxu0 0.0
  %767 = vmatpush1.msra.mxu0 0.0
  %768 = vmatprep.subr.mxu0 0.0
  %769 = vmatpush1.msra.mxu0 0.0
  %770 = vmatprep.subr.mxu0 0.0
  %771 = vmatpush1.msra.mxu0 0.0
  %772 = vmatprep.subr.mxu0 0.0
  %773 = vmatpush1.msra.mxu0 0.0
  %774 = vmatprep.subr.mxu0 0.0
  %775 = vmatpush1.msra.mxu0 0.0
  %776 = vmatprep.subr.mxu0 0.0
  %777 = vmatpush1.msra.mxu0 0.0
  %778 = vmatprep.mubr.f32.mxu0 0.0
  %779 = vmatmul.mubr.f32.gmra.mrb[0].mxu0 %v712
  %v780 = vpop.f32.mrb[0].mxu0
  %v781 = vadd.f32 0.0, %v780
  %v782 = vpop.f32.mrb[0].mxu0
  %783 = vdwg.mxu0
  %v784 = vadd.f32 %v708, %v781
  %785 = vmatprep.subr.mxu0 0.0
  %786 = vmatpush1.msra.mxu0 %v34
  %787 = vmatprep.subr.mxu0 0.0
  %788 = vmatpush1.msra.mxu0 %v35
  %789 = vmatprep.subr.mxu0 0.0
  %790 = vmatpush1.msra.mxu0 %v36
  %791 = vmatprep.subr.mxu0 0.0
  %792 = vmatpush1.msra.mxu0 %v37
  %793 = vmatprep.subr.mxu0 0.0
  %794 = vmatpush1.msra.mxu0 0.0
  %795 = vmatprep.subr.mxu0 0.0
  %796 = vmatpush1.msra.mxu0 0.0
  %797 = vmatprep.subr.mxu0 0.0
  %798 = vmatpush1.msra.mxu0 0.0
  %799 = vmatprep.subr.mxu0 0.0
  %800 = vmatpush1.msra.mxu0 0.0
  %801 = vmatprep.subr.mxu0 0.0
  %802 = vmatpush1.msra.mxu0 0.0
  %803 = vmatprep.subr.mxu0 0.0
  %804 = vmatpush1.msra.mxu0 0.0
  %805 = vmatprep.subr.mxu0 0.0
  %806 = vmatpush1.msra.mxu0 0.0
  %807 = vmatprep.subr.mxu0 0.0
  %808 = vmatpush1.msra.mxu0 0.0
  %809 = vmatprep.subr.mxu0 0.0
  %810 = vmatpush1.msra.mxu0 0.0
  %811 = vmatprep.subr.mxu0 0.0
  %812 = vmatpush1.msra.mxu0 0.0
  %813 = vmatprep.subr.mxu0 0.0
  %814 = vmatpush1.msra.mxu0 0.0
  %815 = vmatprep.subr.mxu0 0.0
  %816 = vmatpush1.msra.mxu0 0.0
  %817 = vmatprep.subr.mxu0 0.0
  %818 = vmatpush1.msra.mxu0 0.0
  %819 = vmatprep.subr.mxu0 0.0
  %820 = vmatpush1.msra.mxu0 0.0
  %821 = vmatprep.subr.mxu0 0.0
  %822 = vmatpush1.msra.mxu0 0.0
  %823 = vmatprep.subr.mxu0 0.0
  %824 = vmatpush1.msra.mxu0 0.0
  %825 = vmatprep.subr.mxu0 0.0
  %826 = vmatpush1.msra.mxu0 0.0
  %827 = vmatprep.subr.mxu0 0.0
  %828 = vmatpush1.msra.mxu0 0.0
  %829 = vmatprep.subr.mxu0 0.0
  %830 = vmatpush1.msra.mxu0 0.0
  %831 = vmatprep.subr.mxu0 0.0
  %832 = vmatpush1.msra.mxu0 0.0
  %833 = vmatprep.subr.mxu0 0.0
  %834 = vmatpush1.msra.mxu0 0.0
  %835 = vmatprep.subr.mxu0 0.0
  %836 = vmatpush1.msra.mxu0 0.0
  %837 = vmatprep.subr.mxu0 0.0
  %838 = vmatpush1.msra.mxu0 0.0
  %839 = vmatprep.subr.mxu0 0.0
  %840 = vmatpush1.msra.mxu0 0.0
  %841 = vmatprep.subr.mxu0 0.0
  %842 = vmatpush1.msra.mxu0 0.0
  %843 = vmatprep.subr.mxu0 0.0
  %844 = vmatpush1.msra.mxu0 0.0
  %845 = vmatprep.subr.mxu0 0.0
  %846 = vmatpush1.msra.mxu0 0.0
  %847 = vmatprep.subr.mxu0 0.0
  %848 = vmatpush1.msra.mxu0 0.0
  %849 = vmatprep.mubr.f32.mxu0 0.0
  %850 = vmatmul.mubr.f32.gmra.mrb[0].mxu0 %v712
  %v851 = vpop.f32.mrb[0].mxu0
  %v852 = vadd.f32 0.0, %v851
  %v853 = vpop.f32.mrb[0].mxu0
  %854 = vdwg.mxu0
  %v855 = vadd.f32 %v44, %v852
  %856 = vmatprep.subr.mxu0 0.0
  %857 = vmatpush1.msra.mxu0 %v38
  %858 = vmatprep.subr.mxu0 0.0
  %859 = vmatpush1.msra.mxu0 %v39
  %860 = vmatprep.subr.mxu0 0.0
  %861 = vmatpush1.msra.mxu0 %v40
  %862 = vmatprep.subr.mxu0 0.0
  %863 = vmatpush1.msra.mxu0 %v41
  %864 = vmatprep.subr.mxu0 0.0
  %865 = vmatpush1.msra.mxu0 0.0
  %866 = vmatprep.subr.mxu0 0.0
  %867 = vmatpush1.msra.mxu0 0.0
  %868 = vmatprep.subr.mxu0 0.0
  %869 = vmatpush1.msra.mxu0 0.0
  %870 = vmatprep.subr.mxu0 0.0
  %871 = vmatpush1.msra.mxu0 0.0
  %872 = vmatprep.subr.mxu0 0.0
  %873 = vmatpush1.msra.mxu0 0.0
  %874 = vmatprep.subr.mxu0 0.0
  %875 = vmatpush1.msra.mxu0 0.0
  %876 = vmatprep.subr.mxu0 0.0
  %877 = vmatpush1.msra.mxu0 0.0
  %878 = vmatprep.subr.mxu0 0.0
  %879 = vmatpush1.msra.mxu0 0.0
  %880 = vmatprep.subr.mxu0 0.0
  %881 = vmatpush1.msra.mxu0 0.0
  %882 = vmatprep.subr.mxu0 0.0
  %883 = vmatpush1.msra.mxu0 0.0
  %884 = vmatprep.subr.mxu0 0.0
  %885 = vmatpush1.msra.mxu0 0.0
  %886 = vmatprep.subr.mxu0 0.0
  %887 = vmatpush1.msra.mxu0 0.0
  %888 = vmatprep.subr.mxu0 0.0
  %889 = vmatpush1.msra.mxu0 0.0
  %890 = vmatprep.subr.mxu0 0.0
  %891 = vmatpush1.msra.mxu0 0.0
  %892 = vmatprep.subr.mxu0 0.0
  %893 = vmatpush1.msra.mxu0 0.0
  %894 = vmatprep.subr.mxu0 0.0
  %895 = vmatpush1.msra.mxu0 0.0
  %896 = vmatprep.subr.mxu0 0.0
  %897 = vmatpush1.msra.mxu0 0.0
  %898 = vmatprep.subr.mxu0 0.0
  %899 = vmatpush1.msra.mxu0 0.0
  %900 = vmatprep.subr.mxu0 0.0
  %901 = vmatpush1.msra.mxu0 0.0
  %902 = vmatprep.subr.mxu0 0.0
  %903 = vmatpush1.msra.mxu0 0.0
  %904 = vmatprep.subr.mxu0 0.0
  %905 = vmatpush1.msra.mxu0 0.0
  %906 = vmatprep.subr.mxu0 0.0
  %907 = vmatpush1.msra.mxu0 0.0
  %908 = vmatprep.subr.mxu0 0.0
  %909 = vmatpush1.msra.mxu0 0.0
  %910 = vmatprep.subr.mxu0 0.0
  %911 = vmatpush1.msra.mxu0 0.0
  %912 = vmatprep.subr.mxu0 0.0
  %913 = vmatpush1.msra.mxu0 0.0
  %914 = vmatprep.subr.mxu0 0.0
  %915 = vmatpush1.msra.mxu0 0.0
  %916 = vmatprep.subr.mxu0 0.0
  %917 = vmatpush1.msra.mxu0 0.0
  %918 = vmatprep.subr.mxu0 0.0
  %919 = vmatpush1.msra.mxu0 0.0
  %920 = vmatprep.mubr.f32.mxu0 0.0
  %921 = vmatmul.mubr.f32.gmra.mrb[0].mxu0 %v195
  %v922 = vpop.f32.mrb[0].mxu0
  %v923 = vadd.f32 0.0, %v922
  %v924 = vpop.f32.mrb[0].mxu0
  %925 = vdwg.mxu0
  %v926 = vadd.f32 %v855, %v923
  %v927 = vxor.u32 %v637, 2147483648
  %v928 = vmul.f32 %v927, 1.442695
  %v929 = vpow.pop %v928
  %v930 = vadd.f32 %v929, 1.0
  %v931 = vrcp.pop %v930
  %v932 = vmul.f32 1.0, %v931
  %v933 = vtanh.pop %v637
  %v934 = vmul.f32 %v932, %v529
  %936 = vrot.lane.b32.xlu0 %v933, 32
  %v937 = vpop.permute.xlu0 %936
  %v939 = vmul.f32 %v932, %v937
  %941 = vrot.lane.b32.xlu0 %v939, 32
  %v942 = vpop.permute.xlu0 %941
  %v944 = vadd.f32 %v934, %v942
  %v945 = vtanh.pop %v944
  %947 = vrot.lane.b32.xlu0 %v945, 32
  %v948 = vpop.permute.xlu0 %947
  %v950 = vmul.f32 %v932, %v948
  %v951 = vxor.u32 %v784, 2147483648
  %v952 = vmul.f32 %v951, 1.442695
  %v953 = vpow.pop %v952
  %v954 = vadd.f32 %v953, 1.0
  %v955 = vrcp.pop %v954
  %v956 = vmul.f32 1.0, %v955
  %v957 = vtanh.pop %v784
  %v958 = vmul.f32 %v956, %v553
  %960 = vrot.lane.b32.xlu0 %v957, 32
  %v961 = vpop.permute.xlu0 %960
  %v963 = vmul.f32 %v956, %v961
  %965 = vrot.lane.b32.xlu0 %v963, 32
  %v966 = vpop.permute.xlu0 %965
  %v968 = vadd.f32 %v958, %v966
  %v969 = vtanh.pop %v968
  %971 = vrot.lane.b32.xlu0 %v969, 32
  %v972 = vpop.permute.xlu0 %971
  %v974 = vmul.f32 %v956, %v972
  %v975 = vxor.u32 %v926, 2147483648
  %v976 = vmul.f32 %v975, 1.442695
  %v977 = vpow.pop %v976
  %v978 = vadd.f32 %v977, 1.0
  %v979 = vrcp.pop %v978
  %v980 = vmul.f32 1.0, %v979
  %v981 = vtanh.pop %v926
  %v982 = vmul.f32 %v980, 0.0
  %984 = vrot.lane.b32.xlu0 %v981, 32
  %v985 = vpop.permute.xlu0 %984
  %v987 = vmul.f32 %v980, %v985
  %989 = vrot.lane.b32.xlu0 %v987, 32
  %v990 = vpop.permute.xlu0 %989
  %v992 = vadd.f32 %v982, %v990
  %v993 = vtanh.pop %v992
  %995 = vrot.lane.b32.xlu0 %v993, 32
  %v996 = vpop.permute.xlu0 %995
  %v998 = vmul.f32 %v980, %v996
  %v999 = vld [vmem:[#allocation2 + $0x18] sm:$0xff]
  %v1000 = vadd.f32 %v999, %v42
  %1002 = vrot.lane.b32.xlu0 %v950, 64
  %v1003 = vpop.permute.xlu0 %1002
  %v1004 = vsel %vm193, %v1003, 0
  %1006 = vmatprep.subr.mxu0 0.0
  %1007 = vmatpush1.msra.mxu0 %v22
  %1008 = vmatprep.subr.mxu0 0.0
  %1009 = vmatpush1.msra.mxu0 %v23
  %1010 = vmatprep.subr.mxu0 0.0
  %1011 = vmatpush1.msra.mxu0 %v24
  %1012 = vmatprep.subr.mxu0 0.0
  %1013 = vmatpush1.msra.mxu0 %v25
  %1014 = vmatprep.subr.mxu0 0.0
  %1015 = vmatpush1.msra.mxu0 0.0
  %1016 = vmatprep.subr.mxu0 0.0
  %1017 = vmatpush1.msra.mxu0 0.0
  %1018 = vmatprep.subr.mxu0 0.0
  %1019 = vmatpush1.msra.mxu0 0.0
  %1020 = vmatprep.subr.mxu0 0.0
  %1021 = vmatpush1.msra.mxu0 0.0
  %1022 = vmatprep.subr.mxu0 0.0
  %1023 = vmatpush1.msra.mxu0 0.0
  %1024 = vmatprep.subr.mxu0 0.0
  %1025 = vmatpush1.msra.mxu0 0.0
  %1026 = vmatprep.subr.mxu0 0.0
  %1027 = vmatpush1.msra.mxu0 0.0
  %1028 = vmatprep.subr.mxu0 0.0
  %1029 = vmatpush1.msra.mxu0 0.0
  %1030 = vmatprep.subr.mxu0 0.0
  %1031 = vmatpush1.msra.mxu0 0.0
  %1032 = vmatprep.subr.mxu0 0.0
  %1033 = vmatpush1.msra.mxu0 0.0
  %1034 = vmatprep.subr.mxu0 0.0
  %1035 = vmatpush1.msra.mxu0 0.0
  %1036 = vmatprep.subr.mxu0 0.0
  %1037 = vmatpush1.msra.mxu0 0.0
  %1038 = vmatprep.subr.mxu0 0.0
  %1039 = vmatpush1.msra.mxu0 0.0
  %1040 = vmatprep.subr.mxu0 0.0
  %1041 = vmatpush1.msra.mxu0 0.0
  %1042 = vmatprep.subr.mxu0 0.0
  %1043 = vmatpush1.msra.mxu0 0.0
  %1044 = vmatprep.subr.mxu0 0.0
  %1045 = vmatpush1.msra.mxu0 0.0
  %1046 = vmatprep.subr.mxu0 0.0
  %1047 = vmatpush1.msra.mxu0 0.0
  %1048 = vmatprep.subr.mxu0 0.0
  %1049 = vmatpush1.msra.mxu0 0.0
  %1050 = vmatprep.subr.mxu0 0.0
  %1051 = vmatpush1.msra.mxu0 0.0
  %1052 = vmatprep.subr.mxu0 0.0
  %1053 = vmatpush1.msra.mxu0 0.0
  %1054 = vmatprep.subr.mxu0 0.0
  %1055 = vmatpush1.msra.mxu0 0.0
  %1056 = vmatprep.subr.mxu0 0.0
  %1057 = vmatpush1.msra.mxu0 0.0
  %1058 = vmatprep.subr.mxu0 0.0
  %1059 = vmatpush1.msra.mxu0 0.0
  %1060 = vmatprep.subr.mxu0 0.0
  %1061 = vmatpush1.msra.mxu0 0.0
  %1062 = vmatprep.subr.mxu0 0.0
  %1063 = vmatpush1.msra.mxu0 0.0
  %1064 = vmatprep.subr.mxu0 0.0
  %1065 = vmatpush1.msra.mxu0 0.0
  %1066 = vmatprep.subr.mxu0 0.0
  %1067 = vmatpush1.msra.mxu0 0.0
  %1068 = vmatprep.subr.mxu0 0.0
  %1069 = vmatpush1.msra.mxu0 0.0
  %1070 = vmatprep.mubr.f32.mxu0 0.0
  %1071 = vmatmul.mubr.f32.gmra.mrb[0].mxu0 %v1004
  %v1072 = vpop.f32.mrb[0].mxu0
  %v1073 = vadd.f32 0.0, %v1072
  %v1074 = vpop.f32.mrb[0].mxu0
  %1075 = vdwg.mxu0
  %v1076 = vadd.f32 %v1000, %v1073
  %1077 = vmatprep.subr.mxu0 0.0
  %1078 = vmatpush1.msra.mxu0 %v26
  %1079 = vmatprep.subr.mxu0 0.0
  %1080 = vmatpush1.msra.mxu0 %v27
  %1081 = vmatprep.subr.mxu0 0.0
  %1082 = vmatpush1.msra.mxu0 %v28
  %1083 = vmatprep.subr.mxu0 0.0
  %1084 = vmatpush1.msra.mxu0 %v29
  %1085 = vmatprep.subr.mxu0 0.0
  %1086 = vmatpush1.msra.mxu0 0.0
  %1087 = vmatprep.subr.mxu0 0.0
  %1088 = vmatpush1.msra.mxu0 0.0
  %1089 = vmatprep.subr.mxu0 0.0
  %1090 = vmatpush1.msra.mxu0 0.0
  %1091 = vmatprep.subr.mxu0 0.0
  %1092 = vmatpush1.msra.mxu0 0.0
  %1093 = vmatprep.subr.mxu0 0.0
  %1094 = vmatpush1.msra.mxu0 0.0
  %1095 = vmatprep.subr.mxu0 0.0
  %1096 = vmatpush1.msra.mxu0 0.0
  %1097 = vmatprep.subr.mxu0 0.0
  %1098 = vmatpush1.msra.mxu0 0.0
  %1099 = vmatprep.subr.mxu0 0.0
  %1100 = vmatpush1.msra.mxu0 0.0
  %1101 = vmatprep.subr.mxu0 0.0
  %1102 = vmatpush1.msra.mxu0 0.0
  %1103 = vmatprep.subr.mxu0 0.0
  %1104 = vmatpush1.msra.mxu0 0.0
  %1105 = vmatprep.subr.mxu0 0.0
  %1106 = vmatpush1.msra.mxu0 0.0
  %1107 = vmatprep.subr.mxu0 0.0
  %1108 = vmatpush1.msra.mxu0 0.0
  %1109 = vmatprep.subr.mxu0 0.0
  %1110 = vmatpush1.msra.mxu0 0.0
  %1111 = vmatprep.subr.mxu0 0.0
  %1112 = vmatpush1.msra.mxu0 0.0
  %1113 = vmatprep.subr.mxu0 0.0
  %1114 = vmatpush1.msra.mxu0 0.0
  %1115 = vmatprep.subr.mxu0 0.0
  %1116 = vmatpush1.msra.mxu0 0.0
  %1117 = vmatprep.subr.mxu0 0.0
  %1118 = vmatpush1.msra.mxu0 0.0
  %1119 = vmatprep.subr.mxu0 0.0
  %1120 = vmatpush1.msra.mxu0 0.0
  %1121 = vmatprep.subr.mxu0 0.0
  %1122 = vmatpush1.msra.mxu0 0.0
  %1123 = vmatprep.subr.mxu0 0.0
  %1124 = vmatpush1.msra.mxu0 0.0
  %1125 = vmatprep.subr.mxu0 0.0
  %1126 = vmatpush1.msra.mxu0 0.0
  %1127 = vmatprep.subr.mxu0 0.0
  %1128 = vmatpush1.msra.mxu0 0.0
  %1129 = vmatprep.subr.mxu0 0.0
  %1130 = vmatpush1.msra.mxu0 0.0
  %1131 = vmatprep.subr.mxu0 0.0
  %1132 = vmatpush1.msra.mxu0 0.0
  %1133 = vmatprep.subr.mxu0 0.0
  %1134 = vmatpush1.msra.mxu0 0.0
  %1135 = vmatprep.subr.mxu0 0.0
  %1136 = vmatpush1.msra.mxu0 0.0
  %1137 = vmatprep.subr.mxu0 0.0
  %1138 = vmatpush1.msra.mxu0 0.0
  %1139 = vmatprep.subr.mxu0 0.0
  %1140 = vmatpush1.msra.mxu0 0.0
  %1141 = vmatprep.mubr.f32.mxu0 0.0
  %1142 = vmatmul.mubr.f32.gmra.mrb[0].mxu0 %v1004
  %v1143 = vpop.f32.mrb[0].mxu0
  %v1144 = vadd.f32 0.0, %v1143
  %v1145 = vpop.f32.mrb[0].mxu0
  %1146 = vdwg.mxu0
  %v1147 = vadd.f32 %v43, %v1144
  %1149 = vrot.lane.b32.xlu0 %v974, 64
  %v1150 = vpop.permute.xlu0 %1149
  %v1151 = vsel %vm193, %v1150, 0
  %1153 = vmatprep.subr.mxu0 0.0
  %1154 = vmatpush1.msra.mxu0 %v30
  %1155 = vmatprep.subr.mxu0 0.0
  %1156 = vmatpush1.msra.mxu0 %v31
  %1157 = vmatprep.subr.mxu0 0.0
  %1158 = vmatpush1.msra.mxu0 %v32
  %1159 = vmatprep.subr.mxu0 0.0
  %1160 = vmatpush1.msra.mxu0 %v33
  %1161 = vmatprep.subr.mxu0 0.0
  %1162 = vmatpush1.msra.mxu0 0.0
  %1163 = vmatprep.subr.mxu0 0.0
  %1164 = vmatpush1.msra.mxu0 0.0
  %1165 = vmatprep.subr.mxu0 0.0
  %1166 = vmatpush1.msra.mxu0 0.0
  %1167 = vmatprep.subr.mxu0 0.0
  %1168 = vmatpush1.msra.mxu0 0.0
  %1169 = vmatprep.subr.mxu0 0.0
  %1170 = vmatpush1.msra.mxu0 0.0
  %1171 = vmatprep.subr.mxu0 0.0
  %1172 = vmatpush1.msra.mxu0 0.0
  %1173 = vmatprep.subr.mxu0 0.0
  %1174 = vmatpush1.msra.mxu0 0.0
  %1175 = vmatprep.subr.mxu0 0.0
  %1176 = vmatpush1.msra.mxu0 0.0
  %1177 = vmatprep.subr.mxu0 0.0
  %1178 = vmatpush1.msra.mxu0 0.0
  %1179 = vmatprep.subr.mxu0 0.0
  %1180 = vmatpush1.msra.mxu0 0.0
  %1181 = vmatprep.subr.mxu0 0.0
  %1182 = vmatpush1.msra.mxu0 0.0
  %1183 = vmatprep.subr.mxu0 0.0
  %1184 = vmatpush1.msra.mxu0 0.0
  %1185 = vmatprep.subr.mxu0 0.0
  %1186 = vmatpush1.msra.mxu0 0.0
  %1187 = vmatprep.subr.mxu0 0.0
  %1188 = vmatpush1.msra.mxu0 0.0
  %1189 = vmatprep.subr.mxu0 0.0
  %1190 = vmatpush1.msra.mxu0 0.0
  %1191 = vmatprep.subr.mxu0 0.0
  %1192 = vmatpush1.msra.mxu0 0.0
  %1193 = vmatprep.subr.mxu0 0.0
  %1194 = vmatpush1.msra.mxu0 0.0
  %1195 = vmatprep.subr.mxu0 0.0
  %1196 = vmatpush1.msra.mxu0 0.0
  %1197 = vmatprep.subr.mxu0 0.0
  %1198 = vmatpush1.msra.mxu0 0.0
  %1199 = vmatprep.subr.mxu0 0.0
  %1200 = vmatpush1.msra.mxu0 0.0
  %1201 = vmatprep.subr.mxu0 0.0
  %1202 = vmatpush1.msra.mxu0 0.0
  %1203 = vmatprep.subr.mxu0 0.0
  %1204 = vmatpush1.msra.mxu0 0.0
  %1205 = vmatprep.subr.mxu0 0.0
  %1206 = vmatpush1.msra.mxu0 0.0
  %1207 = vmatprep.subr.mxu0 0.0
  %1208 = vmatpush1.msra.mxu0 0.0
  %1209 = vmatprep.subr.mxu0 0.0
  %1210 = vmatpush1.msra.mxu0 0.0
  %1211 = vmatprep.subr.mxu0 0.0
  %1212 = vmatpush1.msra.mxu0 0.0
  %1213 = vmatprep.subr.mxu0 0.0
  %1214 = vmatpush1.msra.mxu0 0.0
  %1215 = vmatprep.subr.mxu0 0.0
  %1216 = vmatpush1.msra.mxu0 0.0
  %1217 = vmatprep.mubr.f32.mxu0 0.0
  %1218 = vmatmul.mubr.f32.gmra.mrb[0].mxu0 %v1151
  %v1219 = vpop.f32.mrb[0].mxu0
  %v1220 = vadd.f32 0.0, %v1219
  %v1221 = vpop.f32.mrb[0].mxu0
  %1222 = vdwg.mxu0
  %v1223 = vadd.f32 %v1147, %v1220
  %1224 = vmatprep.subr.mxu0 0.0
  %1225 = vmatpush1.msra.mxu0 %v34
  %1226 = vmatprep.subr.mxu0 0.0
  %1227 = vmatpush1.msra.mxu0 %v35
  %1228 = vmatprep.subr.mxu0 0.0
  %1229 = vmatpush1.msra.mxu0 %v36
  %1230 = vmatprep.subr.mxu0 0.0
  %1231 = vmatpush1.msra.mxu0 %v37
  %1232 = vmatprep.subr.mxu0 0.0
  %1233 = vmatpush1.msra.mxu0 0.0
  %1234 = vmatprep.subr.mxu0 0.0
  %1235 = vmatpush1.msra.mxu0 0.0
  %1236 = vmatprep.subr.mxu0 0.0
  %1237 = vmatpush1.msra.mxu0 0.0
  %1238 = vmatprep.subr.mxu0 0.0
  %1239 = vmatpush1.msra.mxu0 0.0
  %1240 = vmatprep.subr.mxu0 0.0
  %1241 = vmatpush1.msra.mxu0 0.0
  %1242 = vmatprep.subr.mxu0 0.0
  %1243 = vmatpush1.msra.mxu0 0.0
  %1244 = vmatprep.subr.mxu0 0.0
  %1245 = vmatpush1.msra.mxu0 0.0
  %1246 = vmatprep.subr.mxu0 0.0
  %1247 = vmatpush1.msra.mxu0 0.0
  %1248 = vmatprep.subr.mxu0 0.0
  %1249 = vmatpush1.msra.mxu0 0.0
  %1250 = vmatprep.subr.mxu0 0.0
  %1251 = vmatpush1.msra.mxu0 0.0
  %1252 = vmatprep.subr.mxu0 0.0
  %1253 = vmatpush1.msra.mxu0 0.0
  %1254 = vmatprep.subr.mxu0 0.0
  %1255 = vmatpush1.msra.mxu0 0.0
  %1256 = vmatprep.subr.mxu0 0.0
  %1257 = vmatpush1.msra.mxu0 0.0
  %1258 = vmatprep.subr.mxu0 0.0
  %1259 = vmatpush1.msra.mxu0 0.0
  %1260 = vmatprep.subr.mxu0 0.0
  %1261 = vmatpush1.msra.mxu0 0.0
  %1262 = vmatprep.subr.mxu0 0.0
  %1263 = vmatpush1.msra.mxu0 0.0
  %1264 = vmatprep.subr.mxu0 0.0
  %1265 = vmatpush1.msra.mxu0 0.0
  %1266 = vmatprep.subr.mxu0 0.0
  %1267 = vmatpush1.msra.mxu0 0.0
  %1268 = vmatprep.subr.mxu0 0.0
  %1269 = vmatpush1.msra.mxu0 0.0
  %1270 = vmatprep.subr.mxu0 0.0
  %1271 = vmatpush1.msra.mxu0 0.0
  %1272 = vmatprep.subr.mxu0 0.0
  %1273 = vmatpush1.msra.mxu0 0.0
  %1274 = vmatprep.subr.mxu0 0.0
  %1275 = vmatpush1.msra.mxu0 0.0
  %1276 = vmatprep.subr.mxu0 0.0
  %1277 = vmatpush1.msra.mxu0 0.0
  %1278 = vmatprep.subr.mxu0 0.0
  %1279 = vmatpush1.msra.mxu0 0.0
  %1280 = vmatprep.subr.mxu0 0.0
  %1281 = vmatpush1.msra.mxu0 0.0
  %1282 = vmatprep.subr.mxu0 0.0
  %1283 = vmatpush1.msra.mxu0 0.0
  %1284 = vmatprep.subr.mxu0 0.0
  %1285 = vmatpush1.msra.mxu0 0.0
  %1286 = vmatprep.subr.mxu0 0.0
  %1287 = vmatpush1.msra.mxu0 0.0
  %1288 = vmatprep.mubr.f32.mxu0 0.0
  %1289 = vmatmul.mubr.f32.gmra.mrb[0].mxu0 %v1151
  %v1290 = vpop.f32.mrb[0].mxu0
  %v1291 = vadd.f32 0.0, %v1290
  %v1292 = vpop.f32.mrb[0].mxu0
  %1293 = vdwg.mxu0
  %v1294 = vadd.f32 %v44, %v1291
  %1296 = vrot.lane.b32.xlu0 %v998, 64
  %v1297 = vpop.permute.xlu0 %1296
  %v1298 = vsel %vm193, %v1297, 0
  %1300 = vmatprep.subr.mxu0 0.0
  %1301 = vmatpush1.msra.mxu0 %v38
  %1302 = vmatprep.subr.mxu0 0.0
  %1303 = vmatpush1.msra.mxu0 %v39
  %1304 = vmatprep.subr.mxu0 0.0
  %1305 = vmatpush1.msra.mxu0 %v40
  %1306 = vmatprep.subr.mxu0 0.0
  %1307 = vmatpush1.msra.mxu0 %v41
  %1308 = vmatprep.subr.mxu0 0.0
  %1309 = vmatpush1.msra.mxu0 0.0
  %1310 = vmatprep.subr.mxu0 0.0
  %1311 = vmatpush1.msra.mxu0 0.0
  %1312 = vmatprep.subr.mxu0 0.0
  %1313 = vmatpush1.msra.mxu0 0.0
  %1314 = vmatprep.subr.mxu0 0.0
  %1315 = vmatpush1.msra.mxu0 0.0
  %1316 = vmatprep.subr.mxu0 0.0
  %1317 = vmatpush1.msra.mxu0 0.0
  %1318 = vmatprep.subr.mxu0 0.0
  %1319 = vmatpush1.msra.mxu0 0.0
  %1320 = vmatprep.subr.mxu0 0.0
  %1321 = vmatpush1.msra.mxu0 0.0
  %1322 = vmatprep.subr.mxu0 0.0
  %1323 = vmatpush1.msra.mxu0 0.0
  %1324 = vmatprep.subr.mxu0 0.0
  %1325 = vmatpush1.msra.mxu0 0.0
  %1326 = vmatprep.subr.mxu0 0.0
  %1327 = vmatpush1.msra.mxu0 0.0
  %1328 = vmatprep.subr.mxu0 0.0
  %1329 = vmatpush1.msra.mxu0 0.0
  %1330 = vmatprep.subr.mxu0 0.0
  %1331 = vmatpush1.msra.mxu0 0.0
  %1332 = vmatprep.subr.mxu0 0.0
  %1333 = vmatpush1.msra.mxu0 0.0
  %1334 = vmatprep.subr.mxu0 0.0
  %1335 = vmatpush1.msra.mxu0 0.0
  %1336 = vmatprep.subr.mxu0 0.0
  %1337 = vmatpush1.msra.mxu0 0.0
  %1338 = vmatprep.subr.mxu0 0.0
  %1339 = vmatpush1.msra.mxu0 0.0
  %1340 = vmatprep.subr.mxu0 0.0
  %1341 = vmatpush1.msra.mxu0 0.0
  %1342 = vmatprep.subr.mxu0 0.0
  %1343 = vmatpush1.msra.mxu0 0.0
  %1344 = vmatprep.subr.mxu0 0.0
  %1345 = vmatpush1.msra.mxu0 0.0
  %1346 = vmatprep.subr.mxu0 0.0
  %1347 = vmatpush1.msra.mxu0 0.0
  %1348 = vmatprep.subr.mxu0 0.0
  %1349 = vmatpush1.msra.mxu0 0.0
  %1350 = vmatprep.subr.mxu0 0.0
  %1351 = vmatpush1.msra.mxu0 0.0
  %1352 = vmatprep.subr.mxu0 0.0
  %1353 = vmatpush1.msra.mxu0 0.0
  %1354 = vmatprep.subr.mxu0 0.0
  %1355 = vmatpush1.msra.mxu0 0.0
  %1356 = vmatprep.subr.mxu0 0.0
  %1357 = vmatpush1.msra.mxu0 0.0
  %1358 = vmatprep.subr.mxu0 0.0
  %1359 = vmatpush1.msra.mxu0 0.0
  %1360 = vmatprep.subr.mxu0 0.0
  %1361 = vmatpush1.msra.mxu0 0.0
  %1362 = vmatprep.subr.mxu0 0.0
  %1363 = vmatpush1.msra.mxu0 0.0
  %1364 = vmatprep.mubr.f32.mxu0 0.0
  %1365 = vmatmul.mubr.f32.gmra.mrb[0].mxu0 %v1298
  %v1366 = vpop.f32.mrb[0].mxu0
  %v1367 = vadd.f32 0.0, %v1366
  %v1368 = vpop.f32.mrb[0].mxu0
  %1369 = vdwg.mxu0
  %v1370 = vadd.f32 %v1294, %v1367
  %v1371 = vxor.u32 %v1076, 2147483648
  %v1372 = vmul.f32 %v1371, 1.442695
  %v1373 = vpow.pop %v1372
  %v1374 = vadd.f32 %v1373, 1.0
  %v1375 = vrcp.pop %v1374
  %v1376 = vmul.f32 1.0, %v1375
  %v1377 = vtanh.pop %v1076
  %v1378 = vmul.f32 %v1376, %v944
  %1380 = vrot.lane.b32.xlu0 %v1377, 32
  %v1381 = vpop.permute.xlu0 %1380
  %v1383 = vmul.f32 %v1376, %v1381
  %1385 = vrot.lane.b32.xlu0 %v1383, 32
  %v1386 = vpop.permute.xlu0 %1385
  %v1388 = vadd.f32 %v1378, %v1386
  %v1389 = vtanh.pop %v1388
  %1391 = vrot.lane.b32.xlu0 %v1389, 32
  %v1392 = vpop.permute.xlu0 %1391
  %v1394 = vmul.f32 %v1376, %v1392
  %v1395 = vxor.u32 %v1223, 2147483648
  %v1396 = vmul.f32 %v1395, 1.442695
  %v1397 = vpow.pop %v1396
  %v1398 = vadd.f32 %v1397, 1.0
  %v1399 = vrcp.pop %v1398
  %v1400 = vmul.f32 1.0, %v1399
  %v1401 = vtanh.pop %v1223
  %v1402 = vmul.f32 %v1400, %v968
  %1404 = vrot.lane.b32.xlu0 %v1401, 32
  %v1405 = vpop.permute.xlu0 %1404
  %v1407 = vmul.f32 %v1400, %v1405
  %1409 = vrot.lane.b32.xlu0 %v1407, 32
  %v1410 = vpop.permute.xlu0 %1409
  %v1412 = vadd.f32 %v1402, %v1410
  %v1413 = vtanh.pop %v1412
  %1415 = vrot.lane.b32.xlu0 %v1413, 32
  %v1416 = vpop.permute.xlu0 %1415
  %v1418 = vmul.f32 %v1400, %v1416
  %v1419 = vxor.u32 %v1370, 2147483648
  %v1420 = vmul.f32 %v1419, 1.442695
  %v1421 = vpow.pop %v1420
  %v1422 = vadd.f32 %v1421, 1.0
  %v1423 = vrcp.pop %v1422
  %v1424 = vmul.f32 1.0, %v1423
  %v1425 = vtanh.pop %v1370
  %v1426 = vmul.f32 %v1424, %v992
  %1428 = vrot.lane.b32.xlu0 %v1425, 32
  %v1429 = vpop.permute.xlu0 %1428
  %v1431 = vmul.f32 %v1424, %v1429
  %1433 = vrot.lane.b32.xlu0 %v1431, 32
  %v1434 = vpop.permute.xlu0 %1433
  %v1436 = vadd.f32 %v1426, %v1434
  %v1437 = vtanh.pop %v1436
  %1439 = vrot.lane.b32.xlu0 %v1437, 32
  %v1440 = vpop.permute.xlu0 %1439
  %v1442 = vmul.f32 %v1424, %v1440
  %v1443 = vld [vmem:[#allocation2 + $0x20] sm:$0xff]
  %v1444 = vadd.f32 %v1443, %v42
  %1446 = vrot.lane.b32.xlu0 %v1394, 64
  %v1447 = vpop.permute.xlu0 %1446
  %v1448 = vsel %vm193, %v1447, 0
  %1450 = vmatprep.subr.mxu0 0.0
  %1451 = vmatpush1.msra.mxu0 %v22
  %1452 = vmatprep.subr.mxu0 0.0
  %1453 = vmatpush1.msra.mxu0 %v23
  %1454 = vmatprep.subr.mxu0 0.0
  %1455 = vmatpush1.msra.mxu0 %v24
  %1456 = vmatprep.subr.mxu0 0.0
  %1457 = vmatpush1.msra.mxu0 %v25
  %1458 = vmatprep.subr.mxu0 0.0
  %1459 = vmatpush1.msra.mxu0 0.0
  %1460 = vmatprep.subr.mxu0 0.0
  %1461 = vmatpush1.msra.mxu0 0.0
  %1462 = vmatprep.subr.mxu0 0.0
  %1463 = vmatpush1.msra.mxu0 0.0
  %1464 = vmatprep.subr.mxu0 0.0
  %1465 = vmatpush1.msra.mxu0 0.0
  %1466 = vmatprep.subr.mxu0 0.0
  %1467 = vmatpush1.msra.mxu0 0.0
  %1468 = vmatprep.subr.mxu0 0.0
  %1469 = vmatpush1.msra.mxu0 0.0
  %1470 = vmatprep.subr.mxu0 0.0
  %1471 = vmatpush1.msra.mxu0 0.0
  %1472 = vmatprep.subr.mxu0 0.0
  %1473 = vmatpush1.msra.mxu0 0.0
  %1474 = vmatprep.subr.mxu0 0.0
  %1475 = vmatpush1.msra.mxu0 0.0
  %1476 = vmatprep.subr.mxu0 0.0
  %1477 = vmatpush1.msra.mxu0 0.0
  %1478 = vmatprep.subr.mxu0 0.0
  %1479 = vmatpush1.msra.mxu0 0.0
  %1480 = vmatprep.subr.mxu0 0.0
  %1481 = vmatpush1.msra.mxu0 0.0
  %1482 = vmatprep.subr.mxu0 0.0
  %1483 = vmatpush1.msra.mxu0 0.0
  %1484 = vmatprep.subr.mxu0 0.0
  %1485 = vmatpush1.msra.mxu0 0.0
  %1486 = vmatprep.subr.mxu0 0.0
  %1487 = vmatpush1.msra.mxu0 0.0
  %1488 = vmatprep.subr.mxu0 0.0
  %1489 = vmatpush1.msra.mxu0 0.0
  %1490 = vmatprep.subr.mxu0 0.0
  %1491 = vmatpush1.msra.mxu0 0.0
  %1492 = vmatprep.subr.mxu0 0.0
  %1493 = vmatpush1.msra.mxu0 0.0
  %1494 = vmatprep.subr.mxu0 0.0
  %1495 = vmatpush1.msra.mxu0 0.0
  %1496 = vmatprep.subr.mxu0 0.0
  %1497 = vmatpush1.msra.mxu0 0.0
  %1498 = vmatprep.subr.mxu0 0.0
  %1499 = vmatpush1.msra.mxu0 0.0
  %1500 = vmatprep.subr.mxu0 0.0
  %1501 = vmatpush1.msra.mxu0 0.0
  %1502 = vmatprep.subr.mxu0 0.0
  %1503 = vmatpush1.msra.mxu0 0.0
  %1504 = vmatprep.subr.mxu0 0.0
  %1505 = vmatpush1.msra.mxu0 0.0
  %1506 = vmatprep.subr.mxu0 0.0
  %1507 = vmatpush1.msra.mxu0 0.0
  %1508 = vmatprep.subr.mxu0 0.0
  %1509 = vmatpush1.msra.mxu0 0.0
  %1510 = vmatprep.subr.mxu0 0.0
  %1511 = vmatpush1.msra.mxu0 0.0
  %1512 = vmatprep.subr.mxu0 0.0
  %1513 = vmatpush1.msra.mxu0 0.0
  %1514 = vmatprep.mubr.f32.mxu0 0.0
  %1515 = vmatmul.mubr.f32.gmra.mrb[0].mxu0 %v1448
  %v1516 = vpop.f32.mrb[0].mxu0
  %v1517 = vadd.f32 0.0, %v1516
  %v1518 = vpop.f32.mrb[0].mxu0
  %1519 = vdwg.mxu0
  %v1520 = vadd.f32 %v1444, %v1517
  %1521 = vmatprep.subr.mxu0 0.0
  %1522 = vmatpush1.msra.mxu0 %v26
  %1523 = vmatprep.subr.mxu0 0.0
  %1524 = vmatpush1.msra.mxu0 %v27
  %1525 = vmatprep.subr.mxu0 0.0
  %1526 = vmatpush1.msra.mxu0 %v28
  %1527 = vmatprep.subr.mxu0 0.0
  %1528 = vmatpush1.msra.mxu0 %v29
  %1529 = vmatprep.subr.mxu0 0.0
  %1530 = vmatpush1.msra.mxu0 0.0
  %1531 = vmatprep.subr.mxu0 0.0
  %1532 = vmatpush1.msra.mxu0 0.0
  %1533 = vmatprep.subr.mxu0 0.0
  %1534 = vmatpush1.msra.mxu0 0.0
  %1535 = vmatprep.subr.mxu0 0.0
  %1536 = vmatpush1.msra.mxu0 0.0
  %1537 = vmatprep.subr.mxu0 0.0
  %1538 = vmatpush1.msra.mxu0 0.0
  %1539 = vmatprep.subr.mxu0 0.0
  %1540 = vmatpush1.msra.mxu0 0.0
  %1541 = vmatprep.subr.mxu0 0.0
  %1542 = vmatpush1.msra.mxu0 0.0
  %1543 = vmatprep.subr.mxu0 0.0
  %1544 = vmatpush1.msra.mxu0 0.0
  %1545 = vmatprep.subr.mxu0 0.0
  %1546 = vmatpush1.msra.mxu0 0.0
  %1547 = vmatprep.subr.mxu0 0.0
  %1548 = vmatpush1.msra.mxu0 0.0
  %1549 = vmatprep.subr.mxu0 0.0
  %1550 = vmatpush1.msra.mxu0 0.0
  %1551 = vmatprep.subr.mxu0 0.0
  %1552 = vmatpush1.msra.mxu0 0.0
  %1553 = vmatprep.subr.mxu0 0.0
  %1554 = vmatpush1.msra.mxu0 0.0
  %1555 = vmatprep.subr.mxu0 0.0
  %1556 = vmatpush1.msra.mxu0 0.0
  %1557 = vmatprep.subr.mxu0 0.0
  %1558 = vmatpush1.msra.mxu0 0.0
  %1559 = vmatprep.subr.mxu0 0.0
  %1560 = vmatpush1.msra.mxu0 0.0
  %1561 = vmatprep.subr.mxu0 0.0
  %1562 = vmatpush1.msra.mxu0 0.0
  %1563 = vmatprep.subr.mxu0 0.0
  %1564 = vmatpush1.msra.mxu0 0.0
  %1565 = vmatprep.subr.mxu0 0.0
  %1566 = vmatpush1.msra.mxu0 0.0
  %1567 = vmatprep.subr.mxu0 0.0
  %1568 = vmatpush1.msra.mxu0 0.0
  %1569 = vmatprep.subr.mxu0 0.0
  %1570 = vmatpush1.msra.mxu0 0.0
  %1571 = vmatprep.subr.mxu0 0.0
  %1572 = vmatpush1.msra.mxu0 0.0
  %1573 = vmatprep.subr.mxu0 0.0
  %1574 = vmatpush1.msra.mxu0 0.0
  %1575 = vmatprep.subr.mxu0 0.0
  %1576 = vmatpush1.msra.mxu0 0.0
  %1577 = vmatprep.subr.mxu0 0.0
  %1578 = vmatpush1.msra.mxu0 0.0
  %1579 = vmatprep.subr.mxu0 0.0
  %1580 = vmatpush1.msra.mxu0 0.0
  %1581 = vmatprep.subr.mxu0 0.0
  %1582 = vmatpush1.msra.mxu0 0.0
  %1583 = vmatprep.subr.mxu0 0.0
  %1584 = vmatpush1.msra.mxu0 0.0
  %1585 = vmatprep.mubr.f32.mxu0 0.0
  %1586 = vmatmul.mubr.f32.gmra.mrb[0].mxu0 %v1448
  %v1587 = vpop.f32.mrb[0].mxu0
  %v1588 = vadd.f32 0.0, %v1587
  %v1589 = vpop.f32.mrb[0].mxu0
  %1590 = vdwg.mxu0
  %v1591 = vadd.f32 %v43, %v1588
  %1593 = vrot.lane.b32.xlu0 %v1418, 64
  %v1594 = vpop.permute.xlu0 %1593
  %v1595 = vsel %vm193, %v1594, 0
  %1597 = vmatprep.subr.mxu0 0.0
  %1598 = vmatpush1.msra.mxu0 %v30
  %1599 = vmatprep.subr.mxu0 0.0
  %1600 = vmatpush1.msra.mxu0 %v31
  %1601 = vmatprep.subr.mxu0 0.0
  %1602 = vmatpush1.msra.mxu0 %v32
  %1603 = vmatprep.subr.mxu0 0.0
  %1604 = vmatpush1.msra.mxu0 %v33
  %1605 = vmatprep.subr.mxu0 0.0
  %1606 = vmatpush1.msra.mxu0 0.0
  %1607 = vmatprep.subr.mxu0 0.0
  %1608 = vmatpush1.msra.mxu0 0.0
  %1609 = vmatprep.subr.mxu0 0.0
  %1610 = vmatpush1.msra.mxu0 0.0
  %1611 = vmatprep.subr.mxu0 0.0
  %1612 = vmatpush1.msra.mxu0 0.0
  %1613 = vmatprep.subr.mxu0 0.0
  %1614 = vmatpush1.msra.mxu0 0.0
  %1615 = vmatprep.subr.mxu0 0.0
  %1616 = vmatpush1.msra.mxu0 0.0
  %1617 = vmatprep.subr.mxu0 0.0
  %1618 = vmatpush1.msra.mxu0 0.0
  %1619 = vmatprep.subr.mxu0 0.0
  %1620 = vmatpush1.msra.mxu0 0.0
  %1621 = vmatprep.subr.mxu0 0.0
  %1622 = vmatpush1.msra.mxu0 0.0
  %1623 = vmatprep.subr.mxu0 0.0
  %1624 = vmatpush1.msra.mxu0 0.0
  %1625 = vmatprep.subr.mxu0 0.0
  %1626 = vmatpush1.msra.mxu0 0.0
  %1627 = vmatprep.subr.mxu0 0.0
  %1628 = vmatpush1.msra.mxu0 0.0
  %1629 = vmatprep.subr.mxu0 0.0
  %1630 = vmatpush1.msra.mxu0 0.0
  %1631 = vmatprep.subr.mxu0 0.0
  %1632 = vmatpush1.msra.mxu0 0.0
  %1633 = vmatprep.subr.mxu0 0.0
  %1634 = vmatpush1.msra.mxu0 0.0
  %1635 = vmatprep.subr.mxu0 0.0
  %1636 = vmatpush1.msra.mxu0 0.0
  %1637 = vmatprep.subr.mxu0 0.0
  %1638 = vmatpush1.msra.mxu0 0.0
  %1639 = vmatprep.subr.mxu0 0.0
  %1640 = vmatpush1.msra.mxu0 0.0
  %1641 = vmatprep.subr.mxu0 0.0
  %1642 = vmatpush1.msra.mxu0 0.0
  %1643 = vmatprep.subr.mxu0 0.0
  %1644 = vmatpush1.msra.mxu0 0.0
  %1645 = vmatprep.subr.mxu0 0.0
  %1646 = vmatpush1.msra.mxu0 0.0
  %1647 = vmatprep.subr.mxu0 0.0
  %1648 = vmatpush1.msra.mxu0 0.0
  %1649 = vmatprep.subr.mxu0 0.0
  %1650 = vmatpush1.msra.mxu0 0.0
  %1651 = vmatprep.subr.mxu0 0.0
  %1652 = vmatpush1.msra.mxu0 0.0
  %1653 = vmatprep.subr.mxu0 0.0
  %1654 = vmatpush1.msra.mxu0 0.0
  %1655 = vmatprep.subr.mxu0 0.0
  %1656 = vmatpush1.msra.mxu0 0.0
  %1657 = vmatprep.subr.mxu0 0.0
  %1658 = vmatpush1.msra.mxu0 0.0
  %1659 = vmatprep.subr.mxu0 0.0
  %1660 = vmatpush1.msra.mxu0 0.0
  %1661 = vmatprep.mubr.f32.mxu0 0.0
  %1662 = vmatmul.mubr.f32.gmra.mrb[0].mxu0 %v1595
  %v1663 = vpop.f32.mrb[0].mxu0
  %v1664 = vadd.f32 0.0, %v1663
  %v1665 = vpop.f32.mrb[0].mxu0
  %1666 = vdwg.mxu0
  %v1667 = vadd.f32 %v1591, %v1664
  %1668 = vmatprep.subr.mxu0 0.0
  %1669 = vmatpush1.msra.mxu0 %v34
  %1670 = vmatprep.subr.mxu0 0.0
  %1671 = vmatpush1.msra.mxu0 %v35
  %1672 = vmatprep.subr.mxu0 0.0
  %1673 = vmatpush1.msra.mxu0 %v36
  %1674 = vmatprep.subr.mxu0 0.0
  %1675 = vmatpush1.msra.mxu0 %v37
  %1676 = vmatprep.subr.mxu0 0.0
  %1677 = vmatpush1.msra.mxu0 0.0
  %1678 = vmatprep.subr.mxu0 0.0
  %1679 = vmatpush1.msra.mxu0 0.0
  %1680 = vmatprep.subr.mxu0 0.0
  %1681 = vmatpush1.msra.mxu0 0.0
  %1682 = vmatprep.subr.mxu0 0.0
  %1683 = vmatpush1.msra.mxu0 0.0
  %1684 = vmatprep.subr.mxu0 0.0
  %1685 = vmatpush1.msra.mxu0 0.0
  %1686 = vmatprep.subr.mxu0 0.0
  %1687 = vmatpush1.msra.mxu0 0.0
  %1688 = vmatprep.subr.mxu0 0.0
  %1689 = vmatpush1.msra.mxu0 0.0
  %1690 = vmatprep.subr.mxu0 0.0
  %1691 = vmatpush1.msra.mxu0 0.0
  %1692 = vmatprep.subr.mxu0 0.0
  %1693 = vmatpush1.msra.mxu0 0.0
  %1694 = vmatprep.subr.mxu0 0.0
  %1695 = vmatpush1.msra.mxu0 0.0
  %1696 = vmatprep.subr.mxu0 0.0
  %1697 = vmatpush1.msra.mxu0 0.0
  %1698 = vmatprep.subr.mxu0 0.0
  %1699 = vmatpush1.msra.mxu0 0.0
  %1700 = vmatprep.subr.mxu0 0.0
  %1701 = vmatpush1.msra.mxu0 0.0
  %1702 = vmatprep.subr.mxu0 0.0
  %1703 = vmatpush1.msra.mxu0 0.0
  %1704 = vmatprep.subr.mxu0 0.0
  %1705 = vmatpush1.msra.mxu0 0.0
  %1706 = vmatprep.subr.mxu0 0.0
  %1707 = vmatpush1.msra.mxu0 0.0
  %1708 = vmatprep.subr.mxu0 0.0
  %1709 = vmatpush1.msra.mxu0 0.0
  %1710 = vmatprep.subr.mxu0 0.0
  %1711 = vmatpush1.msra.mxu0 0.0
  %1712 = vmatprep.subr.mxu0 0.0
  %1713 = vmatpush1.msra.mxu0 0.0
  %1714 = vmatprep.subr.mxu0 0.0
  %1715 = vmatpush1.msra.mxu0 0.0
  %1716 = vmatprep.subr.mxu0 0.0
  %1717 = vmatpush1.msra.mxu0 0.0
  %1718 = vmatprep.subr.mxu0 0.0
  %1719 = vmatpush1.msra.mxu0 0.0
  %1720 = vmatprep.subr.mxu0 0.0
  %1721 = vmatpush1.msra.mxu0 0.0
  %1722 = vmatprep.subr.mxu0 0.0
  %1723 = vmatpush1.msra.mxu0 0.0
  %1724 = vmatprep.subr.mxu0 0.0
  %1725 = vmatpush1.msra.mxu0 0.0
  %1726 = vmatprep.subr.mxu0 0.0
  %1727 = vmatpush1.msra.mxu0 0.0
  %1728 = vmatprep.subr.mxu0 0.0
  %1729 = vmatpush1.msra.mxu0 0.0
  %1730 = vmatprep.subr.mxu0 0.0
  %1731 = vmatpush1.msra.mxu0 0.0
  %1732 = vmatprep.mubr.f32.mxu0 0.0
  %1733 = vmatmul.mubr.f32.gmra.mrb[0].mxu0 %v1595
  %v1734 = vpop.f32.mrb[0].mxu0
  %v1735 = vadd.f32 0.0, %v1734
  %v1736 = vpop.f32.mrb[0].mxu0
  %1737 = vdwg.mxu0
  %v1738 = vadd.f32 %v44, %v1735
  %1740 = vrot.lane.b32.xlu0 %v1442, 64
  %v1741 = vpop.permute.xlu0 %1740
  %v1742 = vsel %vm193, %v1741, 0
  %1744 = vmatprep.subr.mxu0 0.0
  %1745 = vmatpush1.msra.mxu0 %v38
  %1746 = vmatprep.subr.mxu0 0.0
  %1747 = vmatpush1.msra.mxu0 %v39
  %1748 = vmatprep.subr.mxu0 0.0
  %1749 = vmatpush1.msra.mxu0 %v40
  %1750 = vmatprep.subr.mxu0 0.0
  %1751 = vmatpush1.msra.mxu0 %v41
  %1752 = vmatprep.subr.mxu0 0.0
  %1753 = vmatpush1.msra.mxu0 0.0
  %1754 = vmatprep.subr.mxu0 0.0
  %1755 = vmatpush1.msra.mxu0 0.0
  %1756 = vmatprep.subr.mxu0 0.0
  %1757 = vmatpush1.msra.mxu0 0.0
  %1758 = vmatprep.subr.mxu0 0.0
  %1759 = vmatpush1.msra.mxu0 0.0
  %1760 = vmatprep.subr.mxu0 0.0
  %1761 = vmatpush1.msra.mxu0 0.0
  %1762 = vmatprep.subr.mxu0 0.0
  %1763 = vmatpush1.msra.mxu0 0.0
  %1764 = vmatprep.subr.mxu0 0.0
  %1765 = vmatpush1.msra.mxu0 0.0
  %1766 = vmatprep.subr.mxu0 0.0
  %1767 = vmatpush1.msra.mxu0 0.0
  %1768 = vmatprep.subr.mxu0 0.0
  %1769 = vmatpush1.msra.mxu0 0.0
  %1770 = vmatprep.subr.mxu0 0.0
  %1771 = vmatpush1.msra.mxu0 0.0
  %1772 = vmatprep.subr.mxu0 0.0
  %1773 = vmatpush1.msra.mxu0 0.0
  %1774 = vmatprep.subr.mxu0 0.0
  %1775 = vmatpush1.msra.mxu0 0.0
  %1776 = vmatprep.subr.mxu0 0.0
  %1777 = vmatpush1.msra.mxu0 0.0
  %1778 = vmatprep.subr.mxu0 0.0
  %1779 = vmatpush1.msra.mxu0 0.0
  %1780 = vmatprep.subr.mxu0 0.0
  %1781 = vmatpush1.msra.mxu0 0.0
  %1782 = vmatprep.subr.mxu0 0.0
  %1783 = vmatpush1.msra.mxu0 0.0
  %1784 = vmatprep.subr.mxu0 0.0
  %1785 = vmatpush1.msra.mxu0 0.0
  %1786 = vmatprep.subr.mxu0 0.0
  %1787 = vmatpush1.msra.mxu0 0.0
  %1788 = vmatprep.subr.mxu0 0.0
  %1789 = vmatpush1.msra.mxu0 0.0
  %1790 = vmatprep.subr.mxu0 0.0
  %1791 = vmatpush1.msra.mxu0 0.0
  %1792 = vmatprep.subr.mxu0 0.0
  %1793 = vmatpush1.msra.mxu0 0.0
  %1794 = vmatprep.subr.mxu0 0.0
  %1795 = vmatpush1.msra.mxu0 0.0
  %1796 = vmatprep.subr.mxu0 0.0
  %1797 = vmatpush1.msra.mxu0 0.0
  %1798 = vmatprep.subr.mxu0 0.0
  %1799 = vmatpush1.msra.mxu0 0.0
  %1800 = vmatprep.subr.mxu0 0.0
  %1801 = vmatpush1.msra.mxu0 0.0
  %1802 = vmatprep.subr.mxu0 0.0
  %1803 = vmatpush1.msra.mxu0 0.0
  %1804 = vmatprep.subr.mxu0 0.0
  %1805 = vmatpush1.msra.mxu0 0.0
  %1806 = vmatprep.subr.mxu0 0.0
  %1807 = vmatpush1.msra.mxu0 0.0
  %1808 = vmatprep.mubr.f32.mxu0 0.0
  %1809 = vmatmul.mubr.f32.gmra.mrb[0].mxu0 %v1742
  %v1810 = vpop.f32.mrb[0].mxu0
  %v1811 = vadd.f32 0.0, %v1810
  %v1812 = vpop.f32.mrb[0].mxu0
  %1813 = vdwg.mxu0
  %v1814 = vadd.f32 %v1738, %v1811
  %v1815 = vxor.u32 %v1520, 2147483648
  %v1816 = vmul.f32 %v1815, 1.442695
  %v1817 = vpow.pop %v1816
  %v1818 = vadd.f32 %v1817, 1.0
  %v1819 = vrcp.pop %v1818
  %v1820 = vmul.f32 1.0, %v1819
  %v1821 = vtanh.pop %v1520
  %v1822 = vmul.f32 %v1820, %v1388
  %1824 = vrot.lane.b32.xlu0 %v1821, 32
  %v1825 = vpop.permute.xlu0 %1824
  %v1827 = vmul.f32 %v1820, %v1825
  %1829 = vrot.lane.b32.xlu0 %v1827, 32
  %v1830 = vpop.permute.xlu0 %1829
  %v1832 = vadd.f32 %v1822, %v1830
  %v1833 = vtanh.pop %v1832
  %1835 = vrot.lane.b32.xlu0 %v1833, 32
  %v1836 = vpop.permute.xlu0 %1835
  %v1838 = vmul.f32 %v1820, %v1836
  %v1839 = vxor.u32 %v1667, 2147483648
  %v1840 = vmul.f32 %v1839, 1.442695
  %v1841 = vpow.pop %v1840
  %v1842 = vadd.f32 %v1841, 1.0
  %v1843 = vrcp.pop %v1842
  %v1844 = vmul.f32 1.0, %v1843
  %v1845 = vtanh.pop %v1667
  %v1846 = vmul.f32 %v1844, %v1412
  %1848 = vrot.lane.b32.xlu0 %v1845, 32
  %v1849 = vpop.permute.xlu0 %1848
  %v1851 = vmul.f32 %v1844, %v1849
  %1853 = vrot.lane.b32.xlu0 %v1851, 32
  %v1854 = vpop.permute.xlu0 %1853
  %v1856 = vadd.f32 %v1846, %v1854
  %v1857 = vtanh.pop %v1856
  %1859 = vrot.lane.b32.xlu0 %v1857, 32
  %v1860 = vpop.permute.xlu0 %1859
  %v1862 = vmul.f32 %v1844, %v1860
  %v1863 = vxor.u32 %v1814, 2147483648
  %v1864 = vmul.f32 %v1863, 1.442695
  %v1865 = vpow.pop %v1864
  %v1866 = vadd.f32 %v1865, 1.0
  %v1867 = vrcp.pop %v1866
  %v1868 = vmul.f32 1.0, %v1867
  %v1869 = vtanh.pop %v1814
  %v1870 = vmul.f32 %v1868, %v1436
  %1872 = vrot.lane.b32.xlu0 %v1869, 32
  %v1873 = vpop.permute.xlu0 %1872
  %v1875 = vmul.f32 %v1868, %v1873
  %1877 = vrot.lane.b32.xlu0 %v1875, 32
  %v1878 = vpop.permute.xlu0 %1877
  %v1880 = vadd.f32 %v1870, %v1878
  %v1881 = vtanh.pop %v1880
  %1883 = vrot.lane.b32.xlu0 %v1881, 32
  %v1884 = vpop.permute.xlu0 %1883
  %v1886 = vmul.f32 %v1868, %v1884
  %v1887 = vld [vmem:[#allocation2 + $0x28] sm:$0xff]
  %v1888 = vadd.f32 %v1887, %v42
  %1890 = vrot.lane.b32.xlu0 %v1838, 64
  %v1891 = vpop.permute.xlu0 %1890
  %v1892 = vsel %vm193, %v1891, 0
  %1894 = vmatprep.subr.mxu0 0.0
  %1895 = vmatpush1.msra.mxu0 %v22
  %1896 = vmatprep.subr.mxu0 0.0
  %1897 = vmatpush1.msra.mxu0 %v23
  %1898 = vmatprep.subr.mxu0 0.0
  %1899 = vmatpush1.msra.mxu0 %v24
  %1900 = vmatprep.subr.mxu0 0.0
  %1901 = vmatpush1.msra.mxu0 %v25
  %1902 = vmatprep.subr.mxu0 0.0
  %1903 = vmatpush1.msra.mxu0 0.0
  %1904 = vmatprep.subr.mxu0 0.0
  %1905 = vmatpush1.msra.mxu0 0.0
  %1906 = vmatprep.subr.mxu0 0.0
  %1907 = vmatpush1.msra.mxu0 0.0
  %1908 = vmatprep.subr.mxu0 0.0
  %1909 = vmatpush1.msra.mxu0 0.0
  %1910 = vmatprep.subr.mxu0 0.0
  %1911 = vmatpush1.msra.mxu0 0.0
  %1912 = vmatprep.subr.mxu0 0.0
  %1913 = vmatpush1.msra.mxu0 0.0
  %1914 = vmatprep.subr.mxu0 0.0
  %1915 = vmatpush1.msra.mxu0 0.0
  %1916 = vmatprep.subr.mxu0 0.0
  %1917 = vmatpush1.msra.mxu0 0.0
  %1918 = vmatprep.subr.mxu0 0.0
  %1919 = vmatpush1.msra.mxu0 0.0
  %1920 = vmatprep.subr.mxu0 0.0
  %1921 = vmatpush1.msra.mxu0 0.0
  %1922 = vmatprep.subr.mxu0 0.0
  %1923 = vmatpush1.msra.mxu0 0.0
  %1924 = vmatprep.subr.mxu0 0.0
  %1925 = vmatpush1.msra.mxu0 0.0
  %1926 = vmatprep.subr.mxu0 0.0
  %1927 = vmatpush1.msra.mxu0 0.0
  %1928 = vmatprep.subr.mxu0 0.0
  %1929 = vmatpush1.msra.mxu0 0.0
  %1930 = vmatprep.subr.mxu0 0.0
  %1931 = vmatpush1.msra.mxu0 0.0
  %1932 = vmatprep.subr.mxu0 0.0
  %1933 = vmatpush1.msra.mxu0 0.0
  %1934 = vmatprep.subr.mxu0 0.0
  %1935 = vmatpush1.msra.mxu0 0.0
  %1936 = vmatprep.subr.mxu0 0.0
  %1937 = vmatpush1.msra.mxu0 0.0
  %1938 = vmatprep.subr.mxu0 0.0
  %1939 = vmatpush1.msra.mxu0 0.0
  %1940 = vmatprep.subr.mxu0 0.0
  %1941 = vmatpush1.msra.mxu0 0.0
  %1942 = vmatprep.subr.mxu0 0.0
  %1943 = vmatpush1.msra.mxu0 0.0
  %1944 = vmatprep.subr.mxu0 0.0
  %1945 = vmatpush1.msra.mxu0 0.0
  %1946 = vmatprep.subr.mxu0 0.0
  %1947 = vmatpush1.msra.mxu0 0.0
  %1948 = vmatprep.subr.mxu0 0.0
  %1949 = vmatpush1.msra.mxu0 0.0
  %1950 = vmatprep.subr.mxu0 0.0
  %1951 = vmatpush1.msra.mxu0 0.0
  %1952 = vmatprep.subr.mxu0 0.0
  %1953 = vmatpush1.msra.mxu0 0.0
  %1954 = vmatprep.subr.mxu0 0.0
  %1955 = vmatpush1.msra.mxu0 0.0
  %1956 = vmatprep.subr.mxu0 0.0
  %1957 = vmatpush1.msra.mxu0 0.0
  %1958 = vmatprep.mubr.f32.mxu0 0.0
  %1959 = vmatmul.mubr.f32.gmra.mrb[0].mxu0 %v1892
  %v1960 = vpop.f32.mrb[0].mxu0
  %v1961 = vadd.f32 0.0, %v1960
  %v1962 = vpop.f32.mrb[0].mxu0
  %1963 = vdwg.mxu0
  %v1964 = vadd.f32 %v1888, %v1961
  %1965 = vmatprep.subr.mxu0 0.0
  %1966 = vmatpush1.msra.mxu0 %v26
  %1967 = vmatprep.subr.mxu0 0.0
  %1968 = vmatpush1.msra.mxu0 %v27
  %1969 = vmatprep.subr.mxu0 0.0
  %1970 = vmatpush1.msra.mxu0 %v28
  %1971 = vmatprep.subr.mxu0 0.0
  %1972 = vmatpush1.msra.mxu0 %v29
  %1973 = vmatprep.subr.mxu0 0.0
  %1974 = vmatpush1.msra.mxu0 0.0
  %1975 = vmatprep.subr.mxu0 0.0
  %1976 = vmatpush1.msra.mxu0 0.0
  %1977 = vmatprep.subr.mxu0 0.0
  %1978 = vmatpush1.msra.mxu0 0.0
  %1979 = vmatprep.subr.mxu0 0.0
  %1980 = vmatpush1.msra.mxu0 0.0
  %1981 = vmatprep.subr.mxu0 0.0
  %1982 = vmatpush1.msra.mxu0 0.0
  %1983 = vmatprep.subr.mxu0 0.0
  %1984 = vmatpush1.msra.mxu0 0.0
  %1985 = vmatprep.subr.mxu0 0.0
  %1986 = vmatpush1.msra.mxu0 0.0
  %1987 = vmatprep.subr.mxu0 0.0
  %1988 = vmatpush1.msra.mxu0 0.0
  %1989 = vmatprep.subr.mxu0 0.0
  %1990 = vmatpush1.msra.mxu0 0.0
  %1991 = vmatprep.subr.mxu0 0.0
  %1992 = vmatpush1.msra.mxu0 0.0
  %1993 = vmatprep.subr.mxu0 0.0
  %1994 = vmatpush1.msra.mxu0 0.0
  %1995 = vmatprep.subr.mxu0 0.0
  %1996 = vmatpush1.msra.mxu0 0.0
  %1997 = vmatprep.subr.mxu0 0.0
  %1998 = vmatpush1.msra.mxu0 0.0
  %1999 = vmatprep.subr.mxu0 0.0
  %2000 = vmatpush1.msra.mxu0 0.0
  %2001 = vmatprep.subr.mxu0 0.0
  %2002 = vmatpush1.msra.mxu0 0.0
  %2003 = vmatprep.subr.mxu0 0.0
  %2004 = vmatpush1.msra.mxu0 0.0
  %2005 = vmatprep.subr.mxu0 0.0
  %2006 = vmatpush1.msra.mxu0 0.0
  %2007 = vmatprep.subr.mxu0 0.0
  %2008 = vmatpush1.msra.mxu0 0.0
  %2009 = vmatprep.subr.mxu0 0.0
  %2010 = vmatpush1.msra.mxu0 0.0
  %2011 = vmatprep.subr.mxu0 0.0
  %2012 = vmatpush1.msra.mxu0 0.0
  %2013 = vmatprep.subr.mxu0 0.0
  %2014 = vmatpush1.msra.mxu0 0.0
  %2015 = vmatprep.subr.mxu0 0.0
  %2016 = vmatpush1.msra.mxu0 0.0
  %2017 = vmatprep.subr.mxu0 0.0
  %2018 = vmatpush1.msra.mxu0 0.0
  %2019 = vmatprep.subr.mxu0 0.0
  %2020 = vmatpush1.msra.mxu0 0.0
  %2021 = vmatprep.subr.mxu0 0.0
  %2022 = vmatpush1.msra.mxu0 0.0
  %2023 = vmatprep.subr.mxu0 0.0
  %2024 = vmatpush1.msra.mxu0 0.0
  %2025 = vmatprep.subr.mxu0 0.0
  %2026 = vmatpush1.msra.mxu0 0.0
  %2027 = vmatprep.subr.mxu0 0.0
  %2028 = vmatpush1.msra.mxu0 0.0
  %2029 = vmatprep.mubr.f32.mxu0 0.0
  %2030 = vmatmul.mubr.f32.gmra.mrb[0].mxu0 %v1892
  %v2031 = vpop.f32.mrb[0].mxu0
  %v2032 = vadd.f32 0.0, %v2031
  %v2033 = vpop.f32.mrb[0].mxu0
  %2034 = vdwg.mxu0
  %v2035 = vadd.f32 %v43, %v2032
  %2037 = vrot.lane.b32.xlu0 %v1862, 64
  %v2038 = vpop.permute.xlu0 %2037
  %v2039 = vsel %vm193, %v2038, 0
  %2041 = vmatprep.subr.mxu0 0.0
  %2042 = vmatpush1.msra.mxu0 %v30
  %2043 = vmatprep.subr.mxu0 0.0
  %2044 = vmatpush1.msra.mxu0 %v31
  %2045 = vmatprep.subr.mxu0 0.0
  %2046 = vmatpush1.msra.mxu0 %v32
  %2047 = vmatprep.subr.mxu0 0.0
  %2048 = vmatpush1.msra.mxu0 %v33
  %2049 = vmatprep.subr.mxu0 0.0
  %2050 = vmatpush1.msra.mxu0 0.0
  %2051 = vmatprep.subr.mxu0 0.0
  %2052 = vmatpush1.msra.mxu0 0.0
  %2053 = vmatprep.subr.mxu0 0.0
  %2054 = vmatpush1.msra.mxu0 0.0
  %2055 = vmatprep.subr.mxu0 0.0
  %2056 = vmatpush1.msra.mxu0 0.0
  %2057 = vmatprep.subr.mxu0 0.0
  %2058 = vmatpush1.msra.mxu0 0.0
  %2059 = vmatprep.subr.mxu0 0.0
  %2060 = vmatpush1.msra.mxu0 0.0
  %2061 = vmatprep.subr.mxu0 0.0
  %2062 = vmatpush1.msra.mxu0 0.0
  %2063 = vmatprep.subr.mxu0 0.0
  %2064 = vmatpush1.msra.mxu0 0.0
  %2065 = vmatprep.subr.mxu0 0.0
  %2066 = vmatpush1.msra.mxu0 0.0
  %2067 = vmatprep.subr.mxu0 0.0
  %2068 = vmatpush1.msra.mxu0 0.0
  %2069 = vmatprep.subr.mxu0 0.0
  %2070 = vmatpush1.msra.mxu0 0.0
  %2071 = vmatprep.subr.mxu0 0.0
  %2072 = vmatpush1.msra.mxu0 0.0
  %2073 = vmatprep.subr.mxu0 0.0
  %2074 = vmatpush1.msra.mxu0 0.0
  %2075 = vmatprep.subr.mxu0 0.0
  %2076 = vmatpush1.msra.mxu0 0.0
  %2077 = vmatprep.subr.mxu0 0.0
  %2078 = vmatpush1.msra.mxu0 0.0
  %2079 = vmatprep.subr.mxu0 0.0
  %2080 = vmatpush1.msra.mxu0 0.0
  %2081 = vmatprep.subr.mxu0 0.0
  %2082 = vmatpush1.msra.mxu0 0.0
  %2083 = vmatprep.subr.mxu0 0.0
  %2084 = vmatpush1.msra.mxu0 0.0
  %2085 = vmatprep.subr.mxu0 0.0
  %2086 = vmatpush1.msra.mxu0 0.0
  %2087 = vmatprep.subr.mxu0 0.0
  %2088 = vmatpush1.msra.mxu0 0.0
  %2089 = vmatprep.subr.mxu0 0.0
  %2090 = vmatpush1.msra.mxu0 0.0
  %2091 = vmatprep.subr.mxu0 0.0
  %2092 = vmatpush1.msra.mxu0 0.0
  %2093 = vmatprep.subr.mxu0 0.0
  %2094 = vmatpush1.msra.mxu0 0.0
  %2095 = vmatprep.subr.mxu0 0.0
  %2096 = vmatpush1.msra.mxu0 0.0
  %2097 = vmatprep.subr.mxu0 0.0
  %2098 = vmatpush1.msra.mxu0 0.0
  %2099 = vmatprep.subr.mxu0 0.0
  %2100 = vmatpush1.msra.mxu0 0.0
  %2101 = vmatprep.subr.mxu0 0.0
  %2102 = vmatpush1.msra.mxu0 0.0
  %2103 = vmatprep.subr.mxu0 0.0
  %2104 = vmatpush1.msra.mxu0 0.0
  %2105 = vmatprep.mubr.f32.mxu0 0.0
  %2106 = vmatmul.mubr.f32.gmra.mrb[0].mxu0 %v2039
  %v2107 = vpop.f32.mrb[0].mxu0
  %v2108 = vadd.f32 0.0, %v2107
  %v2109 = vpop.f32.mrb[0].mxu0
  %2110 = vdwg.mxu0
  %v2111 = vadd.f32 %v2035, %v2108
  %2112 = vmatprep.subr.mxu0 0.0
  %2113 = vmatpush1.msra.mxu0 %v34
  %2114 = vmatprep.subr.mxu0 0.0
  %2115 = vmatpush1.msra.mxu0 %v35
  %2116 = vmatprep.subr.mxu0 0.0
  %2117 = vmatpush1.msra.mxu0 %v36
  %2118 = vmatprep.subr.mxu0 0.0
  %2119 = vmatpush1.msra.mxu0 %v37
  %2120 = vmatprep.subr.mxu0 0.0
  %2121 = vmatpush1.msra.mxu0 0.0
  %2122 = vmatprep.subr.mxu0 0.0
  %2123 = vmatpush1.msra.mxu0 0.0
  %2124 = vmatprep.subr.mxu0 0.0
  %2125 = vmatpush1.msra.mxu0 0.0
  %2126 = vmatprep.subr.mxu0 0.0
  %2127 = vmatpush1.msra.mxu0 0.0
  %2128 = vmatprep.subr.mxu0 0.0
  %2129 = vmatpush1.msra.mxu0 0.0
  %2130 = vmatprep.subr.mxu0 0.0
  %2131 = vmatpush1.msra.mxu0 0.0
  %2132 = vmatprep.subr.mxu0 0.0
  %2133 = vmatpush1.msra.mxu0 0.0
  %2134 = vmatprep.subr.mxu0 0.0
  %2135 = vmatpush1.msra.mxu0 0.0
  %2136 = vmatprep.subr.mxu0 0.0
  %2137 = vmatpush1.msra.mxu0 0.0
  %2138 = vmatprep.subr.mxu0 0.0
  %2139 = vmatpush1.msra.mxu0 0.0
  %2140 = vmatprep.subr.mxu0 0.0
  %2141 = vmatpush1.msra.mxu0 0.0
  %2142 = vmatprep.subr.mxu0 0.0
  %2143 = vmatpush1.msra.mxu0 0.0
  %2144 = vmatprep.subr.mxu0 0.0
  %2145 = vmatpush1.msra.mxu0 0.0
  %2146 = vmatprep.subr.mxu0 0.0
  %2147 = vmatpush1.msra.mxu0 0.0
  %2148 = vmatprep.subr.mxu0 0.0
  %2149 = vmatpush1.msra.mxu0 0.0
  %2150 = vmatprep.subr.mxu0 0.0
  %2151 = vmatpush1.msra.mxu0 0.0
  %2152 = vmatprep.subr.mxu0 0.0
  %2153 = vmatpush1.msra.mxu0 0.0
  %2154 = vmatprep.subr.mxu0 0.0
  %2155 = vmatpush1.msra.mxu0 0.0
  %2156 = vmatprep.subr.mxu0 0.0
  %2157 = vmatpush1.msra.mxu0 0.0
  %2158 = vmatprep.subr.mxu0 0.0
  %2159 = vmatpush1.msra.mxu0 0.0
  %2160 = vmatprep.subr.mxu0 0.0
  %2161 = vmatpush1.msra.mxu0 0.0
  %2162 = vmatprep.subr.mxu0 0.0
  %2163 = vmatpush1.msra.mxu0 0.0
  %2164 = vmatprep.subr.mxu0 0.0
  %2165 = vmatpush1.msra.mxu0 0.0
  %2166 = vmatprep.subr.mxu0 0.0
  %2167 = vmatpush1.msra.mxu0 0.0
  %2168 = vmatprep.subr.mxu0 0.0
  %2169 = vmatpush1.msra.mxu0 0.0
  %2170 = vmatprep.subr.mxu0 0.0
  %2171 = vmatpush1.msra.mxu0 0.0
  %2172 = vmatprep.subr.mxu0 0.0
  %2173 = vmatpush1.msra.mxu0 0.0
  %2174 = vmatprep.subr.mxu0 0.0
  %2175 = vmatpush1.msra.mxu0 0.0
  %2176 = vmatprep.mubr.f32.mxu0 0.0
  %2177 = vmatmul.mubr.f32.gmra.mrb[0].mxu0 %v2039
  %v2178 = vpop.f32.mrb[0].mxu0
  %v2179 = vadd.f32 0.0, %v2178
  %v2180 = vpop.f32.mrb[0].mxu0
  %2181 = vdwg.mxu0
  %v2182 = vadd.f32 %v44, %v2179
  %2184 = vrot.lane.b32.xlu0 %v1886, 64
  %v2185 = vpop.permute.xlu0 %2184
  %v2186 = vsel %vm193, %v2185, 0
  %2188 = vmatprep.subr.mxu0 0.0
  %2189 = vmatpush1.msra.mxu0 %v38
  %2190 = vmatprep.subr.mxu0 0.0
  %2191 = vmatpush1.msra.mxu0 %v39
  %2192 = vmatprep.subr.mxu0 0.0
  %2193 = vmatpush1.msra.mxu0 %v40
  %2194 = vmatprep.subr.mxu0 0.0
  %2195 = vmatpush1.msra.mxu0 %v41
  %2196 = vmatprep.subr.mxu0 0.0
  %2197 = vmatpush1.msra.mxu0 0.0
  %2198 = vmatprep.subr.mxu0 0.0
  %2199 = vmatpush1.msra.mxu0 0.0
  %2200 = vmatprep.subr.mxu0 0.0
  %2201 = vmatpush1.msra.mxu0 0.0
  %2202 = vmatprep.subr.mxu0 0.0
  %2203 = vmatpush1.msra.mxu0 0.0
  %2204 = vmatprep.subr.mxu0 0.0
  %2205 = vmatpush1.msra.mxu0 0.0
  %2206 = vmatprep.subr.mxu0 0.0
  %2207 = vmatpush1.msra.mxu0 0.0
  %2208 = vmatprep.subr.mxu0 0.0
  %2209 = vmatpush1.msra.mxu0 0.0
  %2210 = vmatprep.subr.mxu0 0.0
  %2211 = vmatpush1.msra.mxu0 0.0
  %2212 = vmatprep.subr.mxu0 0.0
  %2213 = vmatpush1.msra.mxu0 0.0
  %2214 = vmatprep.subr.mxu0 0.0
  %2215 = vmatpush1.msra.mxu0 0.0
  %2216 = vmatprep.subr.mxu0 0.0
  %2217 = vmatpush1.msra.mxu0 0.0
  %2218 = vmatprep.subr.mxu0 0.0
  %2219 = vmatpush1.msra.mxu0 0.0
  %2220 = vmatprep.subr.mxu0 0.0
  %2221 = vmatpush1.msra.mxu0 0.0
  %2222 = vmatprep.subr.mxu0 0.0
  %2223 = vmatpush1.msra.mxu0 0.0
  %2224 = vmatprep.subr.mxu0 0.0
  %2225 = vmatpush1.msra.mxu0 0.0
  %2226 = vmatprep.subr.mxu0 0.0
  %2227 = vmatpush1.msra.mxu0 0.0
  %2228 = vmatprep.subr.mxu0 0.0
  %2229 = vmatpush1.msra.mxu0 0.0
  %2230 = vmatprep.subr.mxu0 0.0
  %2231 = vmatpush1.msra.mxu0 0.0
  %2232 = vmatprep.subr.mxu0 0.0
  %2233 = vmatpush1.msra.mxu0 0.0
  %2234 = vmatprep.subr.mxu0 0.0
  %2235 = vmatpush1.msra.mxu0 0.0
  %2236 = vmatprep.subr.mxu0 0.0
  %2237 = vmatpush1.msra.mxu0 0.0
  %2238 = vmatprep.subr.mxu0 0.0
  %2239 = vmatpush1.msra.mxu0 0.0
  %2240 = vmatprep.subr.mxu0 0.0
  %2241 = vmatpush1.msra.mxu0 0.0
  %2242 = vmatprep.subr.mxu0 0.0
  %2243 = vmatpush1.msra.mxu0 0.0
  %2244 = vmatprep.subr.mxu0 0.0
  %2245 = vmatpush1.msra.mxu0 0.0
  %2246 = vmatprep.subr.mxu0 0.0
  %2247 = vmatpush1.msra.mxu0 0.0
  %2248 = vmatprep.subr.mxu0 0.0
  %2249 = vmatpush1.msra.mxu0 0.0
  %2250 = vmatprep.subr.mxu0 0.0
  %2251 = vmatpush1.msra.mxu0 0.0
  %2252 = vmatprep.mubr.f32.mxu0 0.0
  %2253 = vmatmul.mubr.f32.gmra.mrb[0].mxu0 %v2186
  %v2254 = vpop.f32.mrb[0].mxu0
  %v2255 = vadd.f32 0.0, %v2254
  %v2256 = vpop.f32.mrb[0].mxu0
  %2257 = vdwg.mxu0
  %v2258 = vadd.f32 %v2182, %v2255
  %v2259 = vxor.u32 %v1964, 2147483648
  %v2260 = vmul.f32 %v2259, 1.442695
  %v2261 = vpow.pop %v2260
  %v2262 = vadd.f32 %v2261, 1.0
  %v2263 = vrcp.pop %v2262
  %v2264 = vmul.f32 1.0, %v2263
  %v2265 = vtanh.pop %v1964
  %v2266 = vmul.f32 %v2264, %v1832
  %2268 = vrot.lane.b32.xlu0 %v2265, 32
  %v2269 = vpop.permute.xlu0 %2268
  %v2271 = vmul.f32 %v2264, %v2269
  %2273 = vrot.lane.b32.xlu0 %v2271, 32
  %v2274 = vpop.permute.xlu0 %2273
  %v2276 = vadd.f32 %v2266, %v2274
  %v2277 = vtanh.pop %v2276
  %2279 = vrot.lane.b32.xlu0 %v2277, 32
  %v2280 = vpop.permute.xlu0 %2279
  %v2282 = vmul.f32 %v2264, %v2280
  %v2283 = vxor.u32 %v2111, 2147483648
  %v2284 = vmul.f32 %v2283, 1.442695
  %v2285 = vpow.pop %v2284
  %v2286 = vadd.f32 %v2285, 1.0
  %v2287 = vrcp.pop %v2286
  %v2288 = vmul.f32 1.0, %v2287
  %v2289 = vtanh.pop %v2111
  %v2290 = vmul.f32 %v2288, %v1856
  %2292 = vrot.lane.b32.xlu0 %v2289, 32
  %v2293 = vpop.permute.xlu0 %2292
  %v2295 = vmul.f32 %v2288, %v2293
  %2297 = vrot.lane.b32.xlu0 %v2295, 32
  %v2298 = vpop.permute.xlu0 %2297
  %v2300 = vadd.f32 %v2290, %v2298
  %v2301 = vtanh.pop %v2300
  %2303 = vrot.lane.b32.xlu0 %v2301, 32
  %v2304 = vpop.permute.xlu0 %2303
  %v2306 = vmul.f32 %v2288, %v2304
  %v2307 = vxor.u32 %v2258, 2147483648
  %v2308 = vmul.f32 %v2307, 1.442695
  %v2309 = vpow.pop %v2308
  %v2310 = vadd.f32 %v2309, 1.0
  %v2311 = vrcp.pop %v2310
  %v2312 = vmul.f32 1.0, %v2311
  %v2313 = vtanh.pop %v2258
  %v2314 = vmul.f32 %v2312, %v1880
  %2316 = vrot.lane.b32.xlu0 %v2313, 32
  %v2317 = vpop.permute.xlu0 %2316
  %v2319 = vmul.f32 %v2312, %v2317
  %2321 = vrot.lane.b32.xlu0 %v2319, 32
  %v2322 = vpop.permute.xlu0 %2321
  %v2324 = vadd.f32 %v2314, %v2322
  %v2325 = vtanh.pop %v2324
  %2327 = vrot.lane.b32.xlu0 %v2325, 32
  %v2328 = vpop.permute.xlu0 %2327
  %v2330 = vmul.f32 %v2312, %v2328
  %v2331 = vld [vmem:[#allocation2 + $0x30] sm:$0xff]
  %v2332 = vadd.f32 %v2331, %v42
  %2334 = vrot.lane.b32.xlu0 %v2282, 64
  %v2335 = vpop.permute.xlu0 %2334
  %v2336 = vsel %vm193, %v2335, 0
  %2338 = vmatprep.subr.mxu0 0.0
  %2339 = vmatpush1.msra.mxu0 %v22
  %2340 = vmatprep.subr.mxu0 0.0
  %2341 = vmatpush1.msra.mxu0 %v23
  %2342 = vmatprep.subr.mxu0 0.0
  %2343 = vmatpush1.msra.mxu0 %v24
  %2344 = vmatprep.subr.mxu0 0.0
  %2345 = vmatpush1.msra.mxu0 %v25
  %2346 = vmatprep.subr.mxu0 0.0
  %2347 = vmatpush1.msra.mxu0 0.0
  %2348 = vmatprep.subr.mxu0 0.0
  %2349 = vmatpush1.msra.mxu0 0.0
  %2350 = vmatprep.subr.mxu0 0.0
  %2351 = vmatpush1.msra.mxu0 0.0
  %2352 = vmatprep.subr.mxu0 0.0
  %2353 = vmatpush1.msra.mxu0 0.0
  %2354 = vmatprep.subr.mxu0 0.0
  %2355 = vmatpush1.msra.mxu0 0.0
  %2356 = vmatprep.subr.mxu0 0.0
  %2357 = vmatpush1.msra.mxu0 0.0
  %2358 = vmatprep.subr.mxu0 0.0
  %2359 = vmatpush1.msra.mxu0 0.0
  %2360 = vmatprep.subr.mxu0 0.0
  %2361 = vmatpush1.msra.mxu0 0.0
  %2362 = vmatprep.subr.mxu0 0.0
  %2363 = vmatpush1.msra.mxu0 0.0
  %2364 = vmatprep.subr.mxu0 0.0
  %2365 = vmatpush1.msra.mxu0 0.0
  %2366 = vmatprep.subr.mxu0 0.0
  %2367 = vmatpush1.msra.mxu0 0.0
  %2368 = vmatprep.subr.mxu0 0.0
  %2369 = vmatpush1.msra.mxu0 0.0
  %2370 = vmatprep.subr.mxu0 0.0
  %2371 = vmatpush1.msra.mxu0 0.0
  %2372 = vmatprep.subr.mxu0 0.0
  %2373 = vmatpush1.msra.mxu0 0.0
  %2374 = vmatprep.subr.mxu0 0.0
  %2375 = vmatpush1.msra.mxu0 0.0
  %2376 = vmatprep.subr.mxu0 0.0
  %2377 = vmatpush1.msra.mxu0 0.0
  %2378 = vmatprep.subr.mxu0 0.0
  %2379 = vmatpush1.msra.mxu0 0.0
  %2380 = vmatprep.subr.mxu0 0.0
  %2381 = vmatpush1.msra.mxu0 0.0
  %2382 = vmatprep.subr.mxu0 0.0
  %2383 = vmatpush1.msra.mxu0 0.0
  %2384 = vmatprep.subr.mxu0 0.0
  %2385 = vmatpush1.msra.mxu0 0.0
  %2386 = vmatprep.subr.mxu0 0.0
  %2387 = vmatpush1.msra.mxu0 0.0
  %2388 = vmatprep.subr.mxu0 0.0
  %2389 = vmatpush1.msra.mxu0 0.0
  %2390 = vmatprep.subr.mxu0 0.0
  %2391 = vmatpush1.msra.mxu0 0.0
  %2392 = vmatprep.subr.mxu0 0.0
  %2393 = vmatpush1.msra.mxu0 0.0
  %2394 = vmatprep.subr.mxu0 0.0
  %2395 = vmatpush1.msra.mxu0 0.0
  %2396 = vmatprep.subr.mxu0 0.0
  %2397 = vmatpush1.msra.mxu0 0.0
  %2398 = vmatprep.subr.mxu0 0.0
  %2399 = vmatpush1.msra.mxu0 0.0
  %2400 = vmatprep.subr.mxu0 0.0
  %2401 = vmatpush1.msra.mxu0 0.0
  %2402 = vmatprep.mubr.f32.mxu0 0.0
  %2403 = vmatmul.mubr.f32.gmra.mrb[0].mxu0 %v2336
  %v2404 = vpop.f32.mrb[0].mxu0
  %v2405 = vadd.f32 0.0, %v2404
  %v2406 = vpop.f32.mrb[0].mxu0
  %2407 = vdwg.mxu0
  %v2408 = vadd.f32 %v2332, %v2405
  %2409 = vmatprep.subr.mxu0 0.0
  %2410 = vmatpush1.msra.mxu0 %v26
  %2411 = vmatprep.subr.mxu0 0.0
  %2412 = vmatpush1.msra.mxu0 %v27
  %2413 = vmatprep.subr.mxu0 0.0
  %2414 = vmatpush1.msra.mxu0 %v28
  %2415 = vmatprep.subr.mxu0 0.0
  %2416 = vmatpush1.msra.mxu0 %v29
  %2417 = vmatprep.subr.mxu0 0.0
  %2418 = vmatpush1.msra.mxu0 0.0
  %2419 = vmatprep.subr.mxu0 0.0
  %2420 = vmatpush1.msra.mxu0 0.0
  %2421 = vmatprep.subr.mxu0 0.0
  %2422 = vmatpush1.msra.mxu0 0.0
  %2423 = vmatprep.subr.mxu0 0.0
  %2424 = vmatpush1.msra.mxu0 0.0
  %2425 = vmatprep.subr.mxu0 0.0
  %2426 = vmatpush1.msra.mxu0 0.0
  %2427 = vmatprep.subr.mxu0 0.0
  %2428 = vmatpush1.msra.mxu0 0.0
  %2429 = vmatprep.subr.mxu0 0.0
  %2430 = vmatpush1.msra.mxu0 0.0
  %2431 = vmatprep.subr.mxu0 0.0
  %2432 = vmatpush1.msra.mxu0 0.0
  %2433 = vmatprep.subr.mxu0 0.0
  %2434 = vmatpush1.msra.mxu0 0.0
  %2435 = vmatprep.subr.mxu0 0.0
  %2436 = vmatpush1.msra.mxu0 0.0
  %2437 = vmatprep.subr.mxu0 0.0
  %2438 = vmatpush1.msra.mxu0 0.0
  %2439 = vmatprep.subr.mxu0 0.0
  %2440 = vmatpush1.msra.mxu0 0.0
  %2441 = vmatprep.subr.mxu0 0.0
  %2442 = vmatpush1.msra.mxu0 0.0
  %2443 = vmatprep.subr.mxu0 0.0
  %2444 = vmatpush1.msra.mxu0 0.0
  %2445 = vmatprep.subr.mxu0 0.0
  %2446 = vmatpush1.msra.mxu0 0.0
  %2447 = vmatprep.subr.mxu0 0.0
  %2448 = vmatpush1.msra.mxu0 0.0
  %2449 = vmatprep.subr.mxu0 0.0
  %2450 = vmatpush1.msra.mxu0 0.0
  %2451 = vmatprep.subr.mxu0 0.0
  %2452 = vmatpush1.msra.mxu0 0.0
  %2453 = vmatprep.subr.mxu0 0.0
  %2454 = vmatpush1.msra.mxu0 0.0
  %2455 = vmatprep.subr.mxu0 0.0
  %2456 = vmatpush1.msra.mxu0 0.0
  %2457 = vmatprep.subr.mxu0 0.0
  %2458 = vmatpush1.msra.mxu0 0.0
  %2459 = vmatprep.subr.mxu0 0.0
  %2460 = vmatpush1.msra.mxu0 0.0
  %2461 = vmatprep.subr.mxu0 0.0
  %2462 = vmatpush1.msra.mxu0 0.0
  %2463 = vmatprep.subr.mxu0 0.0
  %2464 = vmatpush1.msra.mxu0 0.0
  %2465 = vmatprep.subr.mxu0 0.0
  %2466 = vmatpush1.msra.mxu0 0.0
  %2467 = vmatprep.subr.mxu0 0.0
  %2468 = vmatpush1.msra.mxu0 0.0
  %2469 = vmatprep.subr.mxu0 0.0
  %2470 = vmatpush1.msra.mxu0 0.0
  %2471 = vmatprep.subr.mxu0 0.0
  %2472 = vmatpush1.msra.mxu0 0.0
  %2473 = vmatprep.mubr.f32.mxu0 0.0
  %2474 = vmatmul.mubr.f32.gmra.mrb[0].mxu0 %v2336
  %v2475 = vpop.f32.mrb[0].mxu0
  %v2476 = vadd.f32 0.0, %v2475
  %v2477 = vpop.f32.mrb[0].mxu0
  %2478 = vdwg.mxu0
  %v2479 = vadd.f32 %v43, %v2476
  %2481 = vrot.lane.b32.xlu0 %v2306, 64
  %v2482 = vpop.permute.xlu0 %2481
  %v2483 = vsel %vm193, %v2482, 0
  %2485 = vmatprep.subr.mxu0 0.0
  %2486 = vmatpush1.msra.mxu0 %v30
  %2487 = vmatprep.subr.mxu0 0.0
  %2488 = vmatpush1.msra.mxu0 %v31
  %2489 = vmatprep.subr.mxu0 0.0
  %2490 = vmatpush1.msra.mxu0 %v32
  %2491 = vmatprep.subr.mxu0 0.0
  %2492 = vmatpush1.msra.mxu0 %v33
  %2493 = vmatprep.subr.mxu0 0.0
  %2494 = vmatpush1.msra.mxu0 0.0
  %2495 = vmatprep.subr.mxu0 0.0
  %2496 = vmatpush1.msra.mxu0 0.0
  %2497 = vmatprep.subr.mxu0 0.0
  %2498 = vmatpush1.msra.mxu0 0.0
  %2499 = vmatprep.subr.mxu0 0.0
  %2500 = vmatpush1.msra.mxu0 0.0
  %2501 = vmatprep.subr.mxu0 0.0
  %2502 = vmatpush1.msra.mxu0 0.0
  %2503 = vmatprep.subr.mxu0 0.0
  %2504 = vmatpush1.msra.mxu0 0.0
  %2505 = vmatprep.subr.mxu0 0.0
  %2506 = vmatpush1.msra.mxu0 0.0
  %2507 = vmatprep.subr.mxu0 0.0
  %2508 = vmatpush1.msra.mxu0 0.0
  %2509 = vmatprep.subr.mxu0 0.0
  %2510 = vmatpush1.msra.mxu0 0.0
  %2511 = vmatprep.subr.mxu0 0.0
  %2512 = vmatpush1.msra.mxu0 0.0
  %2513 = vmatprep.subr.mxu0 0.0
  %2514 = vmatpush1.msra.mxu0 0.0
  %2515 = vmatprep.subr.mxu0 0.0
  %2516 = vmatpush1.msra.mxu0 0.0
  %2517 = vmatprep.subr.mxu0 0.0
  %2518 = vmatpush1.msra.mxu0 0.0
  %2519 = vmatprep.subr.mxu0 0.0
  %2520 = vmatpush1.msra.mxu0 0.0
  %2521 = vmatprep.subr.mxu0 0.0
  %2522 = vmatpush1.msra.mxu0 0.0
  %2523 = vmatprep.subr.mxu0 0.0
  %2524 = vmatpush1.msra.mxu0 0.0
  %2525 = vmatprep.subr.mxu0 0.0
  %2526 = vmatpush1.msra.mxu0 0.0
  %2527 = vmatprep.subr.mxu0 0.0
  %2528 = vmatpush1.msra.mxu0 0.0
  %2529 = vmatprep.subr.mxu0 0.0
  %2530 = vmatpush1.msra.mxu0 0.0
  %2531 = vmatprep.subr.mxu0 0.0
  %2532 = vmatpush1.msra.mxu0 0.0
  %2533 = vmatprep.subr.mxu0 0.0
  %2534 = vmatpush1.msra.mxu0 0.0
  %2535 = vmatprep.subr.mxu0 0.0
  %2536 = vmatpush1.msra.mxu0 0.0
  %2537 = vmatprep.subr.mxu0 0.0
  %2538 = vmatpush1.msra.mxu0 0.0
  %2539 = vmatprep.subr.mxu0 0.0
  %2540 = vmatpush1.msra.mxu0 0.0
  %2541 = vmatprep.subr.mxu0 0.0
  %2542 = vmatpush1.msra.mxu0 0.0
  %2543 = vmatprep.subr.mxu0 0.0
  %2544 = vmatpush1.msra.mxu0 0.0
  %2545 = vmatprep.subr.mxu0 0.0
  %2546 = vmatpush1.msra.mxu0 0.0
  %2547 = vmatprep.subr.mxu0 0.0
  %2548 = vmatpush1.msra.mxu0 0.0
  %2549 = vmatprep.mubr.f32.mxu0 0.0
  %2550 = vmatmul.mubr.f32.gmra.mrb[0].mxu0 %v2483
  %v2551 = vpop.f32.mrb[0].mxu0
  %v2552 = vadd.f32 0.0, %v2551
  %v2553 = vpop.f32.mrb[0].mxu0
  %2554 = vdwg.mxu0
  %v2555 = vadd.f32 %v2479, %v2552
  %2556 = vmatprep.subr.mxu0 0.0
  %2557 = vmatpush1.msra.mxu0 %v34
  %2558 = vmatprep.subr.mxu0 0.0
  %2559 = vmatpush1.msra.mxu0 %v35
  %2560 = vmatprep.subr.mxu0 0.0
  %2561 = vmatpush1.msra.mxu0 %v36
  %2562 = vmatprep.subr.mxu0 0.0
  %2563 = vmatpush1.msra.mxu0 %v37
  %2564 = vmatprep.subr.mxu0 0.0
  %2565 = vmatpush1.msra.mxu0 0.0
  %2566 = vmatprep.subr.mxu0 0.0
  %2567 = vmatpush1.msra.mxu0 0.0
  %2568 = vmatprep.subr.mxu0 0.0
  %2569 = vmatpush1.msra.mxu0 0.0
  %2570 = vmatprep.subr.mxu0 0.0
  %2571 = vmatpush1.msra.mxu0 0.0
  %2572 = vmatprep.subr.mxu0 0.0
  %2573 = vmatpush1.msra.mxu0 0.0
  %2574 = vmatprep.subr.mxu0 0.0
  %2575 = vmatpush1.msra.mxu0 0.0
  %2576 = vmatprep.subr.mxu0 0.0
  %2577 = vmatpush1.msra.mxu0 0.0
  %2578 = vmatprep.subr.mxu0 0.0
  %2579 = vmatpush1.msra.mxu0 0.0
  %2580 = vmatprep.subr.mxu0 0.0
  %2581 = vmatpush1.msra.mxu0 0.0
  %2582 = vmatprep.subr.mxu0 0.0
  %2583 = vmatpush1.msra.mxu0 0.0
  %2584 = vmatprep.subr.mxu0 0.0
  %2585 = vmatpush1.msra.mxu0 0.0
  %2586 = vmatprep.subr.mxu0 0.0
  %2587 = vmatpush1.msra.mxu0 0.0
  %2588 = vmatprep.subr.mxu0 0.0
  %2589 = vmatpush1.msra.mxu0 0.0
  %2590 = vmatprep.subr.mxu0 0.0
  %2591 = vmatpush1.msra.mxu0 0.0
  %2592 = vmatprep.subr.mxu0 0.0
  %2593 = vmatpush1.msra.mxu0 0.0
  %2594 = vmatprep.subr.mxu0 0.0
  %2595 = vmatpush1.msra.mxu0 0.0
  %2596 = vmatprep.subr.mxu0 0.0
  %2597 = vmatpush1.msra.mxu0 0.0
  %2598 = vmatprep.subr.mxu0 0.0
  %2599 = vmatpush1.msra.mxu0 0.0
  %2600 = vmatprep.subr.mxu0 0.0
  %2601 = vmatpush1.msra.mxu0 0.0
  %2602 = vmatprep.subr.mxu0 0.0
  %2603 = vmatpush1.msra.mxu0 0.0
  %2604 = vmatprep.subr.mxu0 0.0
  %2605 = vmatpush1.msra.mxu0 0.0
  %2606 = vmatprep.subr.mxu0 0.0
  %2607 = vmatpush1.msra.mxu0 0.0
  %2608 = vmatprep.subr.mxu0 0.0
  %2609 = vmatpush1.msra.mxu0 0.0
  %2610 = vmatprep.subr.mxu0 0.0
  %2611 = vmatpush1.msra.mxu0 0.0
  %2612 = vmatprep.subr.mxu0 0.0
  %2613 = vmatpush1.msra.mxu0 0.0
  %2614 = vmatprep.subr.mxu0 0.0
  %2615 = vmatpush1.msra.mxu0 0.0
  %2616 = vmatprep.subr.mxu0 0.0
  %2617 = vmatpush1.msra.mxu0 0.0
  %2618 = vmatprep.subr.mxu0 0.0
  %2619 = vmatpush1.msra.mxu0 0.0
  %2620 = vmatprep.mubr.f32.mxu0 0.0
  %2621 = vmatmul.mubr.f32.gmra.mrb[0].mxu0 %v2483
  %v2622 = vpop.f32.mrb[0].mxu0
  %v2623 = vadd.f32 0.0, %v2622
  %v2624 = vpop.f32.mrb[0].mxu0
  %2625 = vdwg.mxu0
  %v2626 = vadd.f32 %v44, %v2623
  %2628 = vrot.lane.b32.xlu0 %v2330, 64
  %v2629 = vpop.permute.xlu0 %2628
  %v2630 = vsel %vm193, %v2629, 0
  %2632 = vmatprep.subr.mxu0 0.0
  %2633 = vmatpush1.msra.mxu0 %v38
  %2634 = vmatprep.subr.mxu0 0.0
  %2635 = vmatpush1.msra.mxu0 %v39
  %2636 = vmatprep.subr.mxu0 0.0
  %2637 = vmatpush1.msra.mxu0 %v40
  %2638 = vmatprep.subr.mxu0 0.0
  %2639 = vmatpush1.msra.mxu0 %v41
  %2640 = vmatprep.subr.mxu0 0.0
  %2641 = vmatpush1.msra.mxu0 0.0
  %2642 = vmatprep.subr.mxu0 0.0
  %2643 = vmatpush1.msra.mxu0 0.0
  %2644 = vmatprep.subr.mxu0 0.0
  %2645 = vmatpush1.msra.mxu0 0.0
  %2646 = vmatprep.subr.mxu0 0.0
  %2647 = vmatpush1.msra.mxu0 0.0
  %2648 = vmatprep.subr.mxu0 0.0
  %2649 = vmatpush1.msra.mxu0 0.0
  %2650 = vmatprep.subr.mxu0 0.0
  %2651 = vmatpush1.msra.mxu0 0.0
  %2652 = vmatprep.subr.mxu0 0.0
  %2653 = vmatpush1.msra.mxu0 0.0
  %2654 = vmatprep.subr.mxu0 0.0
  %2655 = vmatpush1.msra.mxu0 0.0
  %2656 = vmatprep.subr.mxu0 0.0
  %2657 = vmatpush1.msra.mxu0 0.0
  %2658 = vmatprep.subr.mxu0 0.0
  %2659 = vmatpush1.msra.mxu0 0.0
  %2660 = vmatprep.subr.mxu0 0.0
  %2661 = vmatpush1.msra.mxu0 0.0
  %2662 = vmatprep.subr.mxu0 0.0
  %2663 = vmatpush1.msra.mxu0 0.0
  %2664 = vmatprep.subr.mxu0 0.0
  %2665 = vmatpush1.msra.mxu0 0.0
  %2666 = vmatprep.subr.mxu0 0.0
  %2667 = vmatpush1.msra.mxu0 0.0
  %2668 = vmatprep.subr.mxu0 0.0
  %2669 = vmatpush1.msra.mxu0 0.0
  %2670 = vmatprep.subr.mxu0 0.0
  %2671 = vmatpush1.msra.mxu0 0.0
  %2672 = vmatprep.subr.mxu0 0.0
  %2673 = vmatpush1.msra.mxu0 0.0
  %2674 = vmatprep.subr.mxu0 0.0
  %2675 = vmatpush1.msra.mxu0 0.0
  %2676 = vmatprep.subr.mxu0 0.0
  %2677 = vmatpush1.msra.mxu0 0.0
  %2678 = vmatprep.subr.mxu0 0.0
  %2679 = vmatpush1.msra.mxu0 0.0
  %2680 = vmatprep.subr.mxu0 0.0
  %2681 = vmatpush1.msra.mxu0 0.0
  %2682 = vmatprep.subr.mxu0 0.0
  %2683 = vmatpush1.msra.mxu0 0.0
  %2684 = vmatprep.subr.mxu0 0.0
  %2685 = vmatpush1.msra.mxu0 0.0
  %2686 = vmatprep.subr.mxu0 0.0
  %2687 = vmatpush1.msra.mxu0 0.0
  %2688 = vmatprep.subr.mxu0 0.0
  %2689 = vmatpush1.msra.mxu0 0.0
  %2690 = vmatprep.subr.mxu0 0.0
  %2691 = vmatpush1.msra.mxu0 0.0
  %2692 = vmatprep.subr.mxu0 0.0
  %2693 = vmatpush1.msra.mxu0 0.0
  %2694 = vmatprep.subr.mxu0 0.0
  %2695 = vmatpush1.msra.mxu0 0.0
  %2696 = vmatprep.mubr.f32.mxu0 0.0
  %2697 = vmatmul.mubr.f32.gmra.mrb[0].mxu0 %v2630
  %v2698 = vpop.f32.mrb[0].mxu0
  %v2699 = vadd.f32 0.0, %v2698
  %v2700 = vpop.f32.mrb[0].mxu0
  %2701 = vdwg.mxu0
  %v2702 = vadd.f32 %v2626, %v2699
  %v2703 = vxor.u32 %v2408, 2147483648
  %v2704 = vmul.f32 %v2703, 1.442695
  %v2705 = vpow.pop %v2704
  %v2706 = vadd.f32 %v2705, 1.0
  %v2707 = vrcp.pop %v2706
  %v2708 = vmul.f32 1.0, %v2707
  %v2709 = vtanh.pop %v2408
  %v2710 = vmul.f32 %v2708, %v2276
  %2712 = vrot.lane.b32.xlu0 %v2709, 32
  %v2713 = vpop.permute.xlu0 %2712
  %v2715 = vmul.f32 %v2708, %v2713
  %2717 = vrot.lane.b32.xlu0 %v2715, 32
  %v2718 = vpop.permute.xlu0 %2717
  %v2720 = vadd.f32 %v2710, %v2718
  %v2721 = vtanh.pop %v2720
  %2723 = vrot.lane.b32.xlu0 %v2721, 32
  %v2724 = vpop.permute.xlu0 %2723
  %v2726 = vmul.f32 %v2708, %v2724
  %v2727 = vxor.u32 %v2555, 2147483648
  %v2728 = vmul.f32 %v2727, 1.442695
  %v2729 = vpow.pop %v2728
  %v2730 = vadd.f32 %v2729, 1.0
  %v2731 = vrcp.pop %v2730
  %v2732 = vmul.f32 1.0, %v2731
  %v2733 = vtanh.pop %v2555
  %v2734 = vmul.f32 %v2732, %v2300
  %2736 = vrot.lane.b32.xlu0 %v2733, 32
  %v2737 = vpop.permute.xlu0 %2736
  %v2739 = vmul.f32 %v2732, %v2737
  %2741 = vrot.lane.b32.xlu0 %v2739, 32
  %v2742 = vpop.permute.xlu0 %2741
  %v2744 = vadd.f32 %v2734, %v2742
  %v2745 = vtanh.pop %v2744
  %2747 = vrot.lane.b32.xlu0 %v2745, 32
  %v2748 = vpop.permute.xlu0 %2747
  %v2750 = vmul.f32 %v2732, %v2748
  %v2751 = vxor.u32 %v2702, 2147483648
  %v2752 = vmul.f32 %v2751, 1.442695
  %v2753 = vpow.pop %v2752
  %v2754 = vadd.f32 %v2753, 1.0
  %v2755 = vrcp.pop %v2754
  %v2756 = vmul.f32 1.0, %v2755
  %v2757 = vtanh.pop %v2702
  %v2758 = vmul.f32 %v2756, %v2324
  %2760 = vrot.lane.b32.xlu0 %v2757, 32
  %v2761 = vpop.permute.xlu0 %2760
  %v2763 = vmul.f32 %v2756, %v2761
  %2765 = vrot.lane.b32.xlu0 %v2763, 32
  %v2766 = vpop.permute.xlu0 %2765
  %v2768 = vadd.f32 %v2758, %v2766
  %v2769 = vtanh.pop %v2768
  %2771 = vrot.lane.b32.xlu0 %v2769, 32
  %v2772 = vpop.permute.xlu0 %2771
  %v2774 = vmul.f32 %v2756, %v2772
  %v2775 = vld [vmem:[#allocation2 + $0x38] sm:$0xff]
  %v2776 = vadd.f32 %v2775, %v42
  %2778 = vrot.lane.b32.xlu0 %v2726, 64
  %v2779 = vpop.permute.xlu0 %2778
  %v2780 = vsel %vm193, %v2779, 0
  %2782 = vmatprep.subr.mxu0 0.0
  %2783 = vmatpush1.msra.mxu0 %v22
  %2784 = vmatprep.subr.mxu0 0.0
  %2785 = vmatpush1.msra.mxu0 %v23
  %2786 = vmatprep.subr.mxu0 0.0
  %2787 = vmatpush1.msra.mxu0 %v24
  %2788 = vmatprep.subr.mxu0 0.0
  %2789 = vmatpush1.msra.mxu0 %v25
  %2790 = vmatprep.subr.mxu0 0.0
  %2791 = vmatpush1.msra.mxu0 0.0
  %2792 = vmatprep.subr.mxu0 0.0
  %2793 = vmatpush1.msra.mxu0 0.0
  %2794 = vmatprep.subr.mxu0 0.0
  %2795 = vmatpush1.msra.mxu0 0.0
  %2796 = vmatprep.subr.mxu0 0.0
  %2797 = vmatpush1.msra.mxu0 0.0
  %2798 = vmatprep.subr.mxu0 0.0
  %2799 = vmatpush1.msra.mxu0 0.0
  %2800 = vmatprep.subr.mxu0 0.0
  %2801 = vmatpush1.msra.mxu0 0.0
  %2802 = vmatprep.subr.mxu0 0.0
  %2803 = vmatpush1.msra.mxu0 0.0
  %2804 = vmatprep.subr.mxu0 0.0
  %2805 = vmatpush1.msra.mxu0 0.0
  %2806 = vmatprep.subr.mxu0 0.0
  %2807 = vmatpush1.msra.mxu0 0.0
  %2808 = vmatprep.subr.mxu0 0.0
  %2809 = vmatpush1.msra.mxu0 0.0
  %2810 = vmatprep.subr.mxu0 0.0
  %2811 = vmatpush1.msra.mxu0 0.0
  %2812 = vmatprep.subr.mxu0 0.0
  %2813 = vmatpush1.msra.mxu0 0.0
  %2814 = vmatprep.subr.mxu0 0.0
  %2815 = vmatpush1.msra.mxu0 0.0
  %2816 = vmatprep.subr.mxu0 0.0
  %2817 = vmatpush1.msra.mxu0 0.0
  %2818 = vmatprep.subr.mxu0 0.0
  %2819 = vmatpush1.msra.mxu0 0.0
  %2820 = vmatprep.subr.mxu0 0.0
  %2821 = vmatpush1.msra.mxu0 0.0
  %2822 = vmatprep.subr.mxu0 0.0
  %2823 = vmatpush1.msra.mxu0 0.0
  %2824 = vmatprep.subr.mxu0 0.0
  %2825 = vmatpush1.msra.mxu0 0.0
  %2826 = vmatprep.subr.mxu0 0.0
  %2827 = vmatpush1.msra.mxu0 0.0
  %2828 = vmatprep.subr.mxu0 0.0
  %2829 = vmatpush1.msra.mxu0 0.0
  %2830 = vmatprep.subr.mxu0 0.0
  %2831 = vmatpush1.msra.mxu0 0.0
  %2832 = vmatprep.subr.mxu0 0.0
  %2833 = vmatpush1.msra.mxu0 0.0
  %2834 = vmatprep.subr.mxu0 0.0
  %2835 = vmatpush1.msra.mxu0 0.0
  %2836 = vmatprep.subr.mxu0 0.0
  %2837 = vmatpush1.msra.mxu0 0.0
  %2838 = vmatprep.subr.mxu0 0.0
  %2839 = vmatpush1.msra.mxu0 0.0
  %2840 = vmatprep.subr.mxu0 0.0
  %2841 = vmatpush1.msra.mxu0 0.0
  %2842 = vmatprep.subr.mxu0 0.0
  %2843 = vmatpush1.msra.mxu0 0.0
  %2844 = vmatprep.subr.mxu0 0.0
  %2845 = vmatpush1.msra.mxu0 0.0
  %2846 = vmatprep.mubr.f32.mxu0 0.0
  %2847 = vmatmul.mubr.f32.gmra.mrb[0].mxu0 %v2780
  %v2848 = vpop.f32.mrb[0].mxu0
  %v2849 = vadd.f32 0.0, %v2848
  %v2850 = vpop.f32.mrb[0].mxu0
  %2851 = vdwg.mxu0
  %v2852 = vadd.f32 %v2776, %v2849
  %2853 = vmatprep.subr.mxu0 0.0
  %2854 = vmatpush1.msra.mxu0 %v26
  %2855 = vmatprep.subr.mxu0 0.0
  %2856 = vmatpush1.msra.mxu0 %v27
  %2857 = vmatprep.subr.mxu0 0.0
  %2858 = vmatpush1.msra.mxu0 %v28
  %2859 = vmatprep.subr.mxu0 0.0
  %2860 = vmatpush1.msra.mxu0 %v29
  %2861 = vmatprep.subr.mxu0 0.0
  %2862 = vmatpush1.msra.mxu0 0.0
  %2863 = vmatprep.subr.mxu0 0.0
  %2864 = vmatpush1.msra.mxu0 0.0
  %2865 = vmatprep.subr.mxu0 0.0
  %2866 = vmatpush1.msra.mxu0 0.0
  %2867 = vmatprep.subr.mxu0 0.0
  %2868 = vmatpush1.msra.mxu0 0.0
  %2869 = vmatprep.subr.mxu0 0.0
  %2870 = vmatpush1.msra.mxu0 0.0
  %2871 = vmatprep.subr.mxu0 0.0
  %2872 = vmatpush1.msra.mxu0 0.0
  %2873 = vmatprep.subr.mxu0 0.0
  %2874 = vmatpush1.msra.mxu0 0.0
  %2875 = vmatprep.subr.mxu0 0.0
  %2876 = vmatpush1.msra.mxu0 0.0
  %2877 = vmatprep.subr.mxu0 0.0
  %2878 = vmatpush1.msra.mxu0 0.0
  %2879 = vmatprep.subr.mxu0 0.0
  %2880 = vmatpush1.msra.mxu0 0.0
  %2881 = vmatprep.subr.mxu0 0.0
  %2882 = vmatpush1.msra.mxu0 0.0
  %2883 = vmatprep.subr.mxu0 0.0
  %2884 = vmatpush1.msra.mxu0 0.0
  %2885 = vmatprep.subr.mxu0 0.0
  %2886 = vmatpush1.msra.mxu0 0.0
  %2887 = vmatprep.subr.mxu0 0.0
  %2888 = vmatpush1.msra.mxu0 0.0
  %2889 = vmatprep.subr.mxu0 0.0
  %2890 = vmatpush1.msra.mxu0 0.0
  %2891 = vmatprep.subr.mxu0 0.0
  %2892 = vmatpush1.msra.mxu0 0.0
  %2893 = vmatprep.subr.mxu0 0.0
  %2894 = vmatpush1.msra.mxu0 0.0
  %2895 = vmatprep.subr.mxu0 0.0
  %2896 = vmatpush1.msra.mxu0 0.0
  %2897 = vmatprep.subr.mxu0 0.0
  %2898 = vmatpush1.msra.mxu0 0.0
  %2899 = vmatprep.subr.mxu0 0.0
  %2900 = vmatpush1.msra.mxu0 0.0
  %2901 = vmatprep.subr.mxu0 0.0
  %2902 = vmatpush1.msra.mxu0 0.0
  %2903 = vmatprep.subr.mxu0 0.0
  %2904 = vmatpush1.msra.mxu0 0.0
  %2905 = vmatprep.subr.mxu0 0.0
  %2906 = vmatpush1.msra.mxu0 0.0
  %2907 = vmatprep.subr.mxu0 0.0
  %2908 = vmatpush1.msra.mxu0 0.0
  %2909 = vmatprep.subr.mxu0 0.0
  %2910 = vmatpush1.msra.mxu0 0.0
  %2911 = vmatprep.subr.mxu0 0.0
  %2912 = vmatpush1.msra.mxu0 0.0
  %2913 = vmatprep.subr.mxu0 0.0
  %2914 = vmatpush1.msra.mxu0 0.0
  %2915 = vmatprep.subr.mxu0 0.0
  %2916 = vmatpush1.msra.mxu0 0.0
  %2917 = vmatprep.mubr.f32.mxu0 0.0
  %2918 = vmatmul.mubr.f32.gmra.mrb[0].mxu0 %v2780
  %v2919 = vpop.f32.mrb[0].mxu0
  %v2920 = vadd.f32 0.0, %v2919
  %v2921 = vpop.f32.mrb[0].mxu0
  %2922 = vdwg.mxu0
  %v2923 = vadd.f32 %v43, %v2920
  %2925 = vrot.lane.b32.xlu0 %v2750, 64
  %v2926 = vpop.permute.xlu0 %2925
  %v2927 = vsel %vm193, %v2926, 0
  %2929 = vmatprep.subr.mxu0 0.0
  %2930 = vmatpush1.msra.mxu0 %v30
  %2931 = vmatprep.subr.mxu0 0.0
  %2932 = vmatpush1.msra.mxu0 %v31
  %2933 = vmatprep.subr.mxu0 0.0
  %2934 = vmatpush1.msra.mxu0 %v32
  %2935 = vmatprep.subr.mxu0 0.0
  %2936 = vmatpush1.msra.mxu0 %v33
  %2937 = vmatprep.subr.mxu0 0.0
  %2938 = vmatpush1.msra.mxu0 0.0
  %2939 = vmatprep.subr.mxu0 0.0
  %2940 = vmatpush1.msra.mxu0 0.0
  %2941 = vmatprep.subr.mxu0 0.0
  %2942 = vmatpush1.msra.mxu0 0.0
  %2943 = vmatprep.subr.mxu0 0.0
  %2944 = vmatpush1.msra.mxu0 0.0
  %2945 = vmatprep.subr.mxu0 0.0
  %2946 = vmatpush1.msra.mxu0 0.0
  %2947 = vmatprep.subr.mxu0 0.0
  %2948 = vmatpush1.msra.mxu0 0.0
  %2949 = vmatprep.subr.mxu0 0.0
  %2950 = vmatpush1.msra.mxu0 0.0
  %2951 = vmatprep.subr.mxu0 0.0
  %2952 = vmatpush1.msra.mxu0 0.0
  %2953 = vmatprep.subr.mxu0 0.0
  %2954 = vmatpush1.msra.mxu0 0.0
  %2955 = vmatprep.subr.mxu0 0.0
  %2956 = vmatpush1.msra.mxu0 0.0
  %2957 = vmatprep.subr.mxu0 0.0
  %2958 = vmatpush1.msra.mxu0 0.0
  %2959 = vmatprep.subr.mxu0 0.0
  %2960 = vmatpush1.msra.mxu0 0.0
  %2961 = vmatprep.subr.mxu0 0.0
  %2962 = vmatpush1.msra.mxu0 0.0
  %2963 = vmatprep.subr.mxu0 0.0
  %2964 = vmatpush1.msra.mxu0 0.0
  %2965 = vmatprep.subr.mxu0 0.0
  %2966 = vmatpush1.msra.mxu0 0.0
  %2967 = vmatprep.subr.mxu0 0.0
  %2968 = vmatpush1.msra.mxu0 0.0
  %2969 = vmatprep.subr.mxu0 0.0
  %2970 = vmatpush1.msra.mxu0 0.0
  %2971 = vmatprep.subr.mxu0 0.0
  %2972 = vmatpush1.msra.mxu0 0.0
  %2973 = vmatprep.subr.mxu0 0.0
  %2974 = vmatpush1.msra.mxu0 0.0
  %2975 = vmatprep.subr.mxu0 0.0
  %2976 = vmatpush1.msra.mxu0 0.0
  %2977 = vmatprep.subr.mxu0 0.0
  %2978 = vmatpush1.msra.mxu0 0.0
  %2979 = vmatprep.subr.mxu0 0.0
  %2980 = vmatpush1.msra.mxu0 0.0
  %2981 = vmatprep.subr.mxu0 0.0
  %2982 = vmatpush1.msra.mxu0 0.0
  %2983 = vmatprep.subr.mxu0 0.0
  %2984 = vmatpush1.msra.mxu0 0.0
  %2985 = vmatprep.subr.mxu0 0.0
  %2986 = vmatpush1.msra.mxu0 0.0
  %2987 = vmatprep.subr.mxu0 0.0
  %2988 = vmatpush1.msra.mxu0 0.0
  %2989 = vmatprep.subr.mxu0 0.0
  %2990 = vmatpush1.msra.mxu0 0.0
  %2991 = vmatprep.subr.mxu0 0.0
  %2992 = vmatpush1.msra.mxu0 0.0
  %2993 = vmatprep.mubr.f32.mxu0 0.0
  %2994 = vmatmul.mubr.f32.gmra.mrb[0].mxu0 %v2927
  %v2995 = vpop.f32.mrb[0].mxu0
  %v2996 = vadd.f32 0.0, %v2995
  %v2997 = vpop.f32.mrb[0].mxu0
  %2998 = vdwg.mxu0
  %v2999 = vadd.f32 %v2923, %v2996
  %3000 = vmatprep.subr.mxu0 0.0
  %3001 = vmatpush1.msra.mxu0 %v34
  %3002 = vmatprep.subr.mxu0 0.0
  %3003 = vmatpush1.msra.mxu0 %v35
  %3004 = vmatprep.subr.mxu0 0.0
  %3005 = vmatpush1.msra.mxu0 %v36
  %3006 = vmatprep.subr.mxu0 0.0
  %3007 = vmatpush1.msra.mxu0 %v37
  %3008 = vmatprep.subr.mxu0 0.0
  %3009 = vmatpush1.msra.mxu0 0.0
  %3010 = vmatprep.subr.mxu0 0.0
  %3011 = vmatpush1.msra.mxu0 0.0
  %3012 = vmatprep.subr.mxu0 0.0
  %3013 = vmatpush1.msra.mxu0 0.0
  %3014 = vmatprep.subr.mxu0 0.0
  %3015 = vmatpush1.msra.mxu0 0.0
  %3016 = vmatprep.subr.mxu0 0.0
  %3017 = vmatpush1.msra.mxu0 0.0
  %3018 = vmatprep.subr.mxu0 0.0
  %3019 = vmatpush1.msra.mxu0 0.0
  %3020 = vmatprep.subr.mxu0 0.0
  %3021 = vmatpush1.msra.mxu0 0.0
  %3022 = vmatprep.subr.mxu0 0.0
  %3023 = vmatpush1.msra.mxu0 0.0
  %3024 = vmatprep.subr.mxu0 0.0
  %3025 = vmatpush1.msra.mxu0 0.0
  %3026 = vmatprep.subr.mxu0 0.0
  %3027 = vmatpush1.msra.mxu0 0.0
  %3028 = vmatprep.subr.mxu0 0.0
  %3029 = vmatpush1.msra.mxu0 0.0
  %3030 = vmatprep.subr.mxu0 0.0
  %3031 = vmatpush1.msra.mxu0 0.0
  %3032 = vmatprep.subr.mxu0 0.0
  %3033 = vmatpush1.msra.mxu0 0.0
  %3034 = vmatprep.subr.mxu0 0.0
  %3035 = vmatpush1.msra.mxu0 0.0
  %3036 = vmatprep.subr.mxu0 0.0
  %3037 = vmatpush1.msra.mxu0 0.0
  %3038 = vmatprep.subr.mxu0 0.0
  %3039 = vmatpush1.msra.mxu0 0.0
  %3040 = vmatprep.subr.mxu0 0.0
  %3041 = vmatpush1.msra.mxu0 0.0
  %3042 = vmatprep.subr.mxu0 0.0
  %3043 = vmatpush1.msra.mxu0 0.0
  %3044 = vmatprep.subr.mxu0 0.0
  %3045 = vmatpush1.msra.mxu0 0.0
  %3046 = vmatprep.subr.mxu0 0.0
  %3047 = vmatpush1.msra.mxu0 0.0
  %3048 = vmatprep.subr.mxu0 0.0
  %3049 = vmatpush1.msra.mxu0 0.0
  %3050 = vmatprep.subr.mxu0 0.0
  %3051 = vmatpush1.msra.mxu0 0.0
  %3052 = vmatprep.subr.mxu0 0.0
  %3053 = vmatpush1.msra.mxu0 0.0
  %3054 = vmatprep.subr.mxu0 0.0
  %3055 = vmatpush1.msra.mxu0 0.0
  %3056 = vmatprep.subr.mxu0 0.0
  %3057 = vmatpush1.msra.mxu0 0.0
  %3058 = vmatprep.subr.mxu0 0.0
  %3059 = vmatpush1.msra.mxu0 0.0
  %3060 = vmatprep.subr.mxu0 0.0
  %3061 = vmatpush1.msra.mxu0 0.0
  %3062 = vmatprep.subr.mxu0 0.0
  %3063 = vmatpush1.msra.mxu0 0.0
  %3064 = vmatprep.mubr.f32.mxu0 0.0
  %3065 = vmatmul.mubr.f32.gmra.mrb[0].mxu0 %v2927
  %v3066 = vpop.f32.mrb[0].mxu0
  %v3067 = vadd.f32 0.0, %v3066
  %v3068 = vpop.f32.mrb[0].mxu0
  %3069 = vdwg.mxu0
  %v3070 = vadd.f32 %v44, %v3067
  %3072 = vrot.lane.b32.xlu0 %v2774, 64
  %v3073 = vpop.permute.xlu0 %3072
  %v3074 = vsel %vm193, %v3073, 0
  %3076 = vmatprep.subr.mxu0 0.0
  %3077 = vmatpush1.msra.mxu0 %v38
  %3078 = vmatprep.subr.mxu0 0.0
  %3079 = vmatpush1.msra.mxu0 %v39
  %3080 = vmatprep.subr.mxu0 0.0
  %3081 = vmatpush1.msra.mxu0 %v40
  %3082 = vmatprep.subr.mxu0 0.0
  %3083 = vmatpush1.msra.mxu0 %v41
  %3084 = vmatprep.subr.mxu0 0.0
  %3085 = vmatpush1.msra.mxu0 0.0
  %3086 = vmatprep.subr.mxu0 0.0
  %3087 = vmatpush1.msra.mxu0 0.0
  %3088 = vmatprep.subr.mxu0 0.0
  %3089 = vmatpush1.msra.mxu0 0.0
  %3090 = vmatprep.subr.mxu0 0.0
  %3091 = vmatpush1.msra.mxu0 0.0
  %3092 = vmatprep.subr.mxu0 0.0
  %3093 = vmatpush1.msra.mxu0 0.0
  %3094 = vmatprep.subr.mxu0 0.0
  %3095 = vmatpush1.msra.mxu0 0.0
  %3096 = vmatprep.subr.mxu0 0.0
  %3097 = vmatpush1.msra.mxu0 0.0
  %3098 = vmatprep.subr.mxu0 0.0
  %3099 = vmatpush1.msra.mxu0 0.0
  %3100 = vmatprep.subr.mxu0 0.0
  %3101 = vmatpush1.msra.mxu0 0.0
  %3102 = vmatprep.subr.mxu0 0.0
  %3103 = vmatpush1.msra.mxu0 0.0
  %3104 = vmatprep.subr.mxu0 0.0
  %3105 = vmatpush1.msra.mxu0 0.0
  %3106 = vmatprep.subr.mxu0 0.0
  %3107 = vmatpush1.msra.mxu0 0.0
  %3108 = vmatprep.subr.mxu0 0.0
  %3109 = vmatpush1.msra.mxu0 0.0
  %3110 = vmatprep.subr.mxu0 0.0
  %3111 = vmatpush1.msra.mxu0 0.0
  %3112 = vmatprep.subr.mxu0 0.0
  %3113 = vmatpush1.msra.mxu0 0.0
  %3114 = vmatprep.subr.mxu0 0.0
  %3115 = vmatpush1.msra.mxu0 0.0
  %3116 = vmatprep.subr.mxu0 0.0
  %3117 = vmatpush1.msra.mxu0 0.0
  %3118 = vmatprep.subr.mxu0 0.0
  %3119 = vmatpush1.msra.mxu0 0.0
  %3120 = vmatprep.subr.mxu0 0.0
  %3121 = vmatpush1.msra.mxu0 0.0
  %3122 = vmatprep.subr.mxu0 0.0
  %3123 = vmatpush1.msra.mxu0 0.0
  %3124 = vmatprep.subr.mxu0 0.0
  %3125 = vmatpush1.msra.mxu0 0.0
  %3126 = vmatprep.subr.mxu0 0.0
  %3127 = vmatpush1.msra.mxu0 0.0
  %3128 = vmatprep.subr.mxu0 0.0
  %3129 = vmatpush1.msra.mxu0 0.0
  %3130 = vmatprep.subr.mxu0 0.0
  %3131 = vmatpush1.msra.mxu0 0.0
  %3132 = vmatprep.subr.mxu0 0.0
  %3133 = vmatpush1.msra.mxu0 0.0
  %3134 = vmatprep.subr.mxu0 0.0
  %3135 = vmatpush1.msra.mxu0 0.0
  %3136 = vmatprep.subr.mxu0 0.0
  %3137 = vmatpush1.msra.mxu0 0.0
  %3138 = vmatprep.subr.mxu0 0.0
  %3139 = vmatpush1.msra.mxu0 0.0
  %3140 = vmatprep.mubr.f32.mxu0 0.0
  %3141 = vmatmul.mubr.f32.gmra.mrb[0].mxu0 %v3074
  %v3142 = vpop.f32.mrb[0].mxu0
  %v3143 = vadd.f32 0.0, %v3142
  %v3144 = vpop.f32.mrb[0].mxu0
  %3145 = vdwg.mxu0
  %v3146 = vadd.f32 %v3070, %v3143
  %v3147 = vxor.u32 %v2852, 2147483648
  %v3148 = vmul.f32 %v3147, 1.442695
  %v3149 = vpow.pop %v3148
  %v3150 = vadd.f32 %v3149, 1.0
  %v3151 = vrcp.pop %v3150
  %v3152 = vmul.f32 1.0, %v3151
  %v3153 = vtanh.pop %v2852
  %v3154 = vmul.f32 %v3152, %v2720
  %3156 = vrot.lane.b32.xlu0 %v3153, 32
  %v3157 = vpop.permute.xlu0 %3156
  %v3159 = vmul.f32 %v3152, %v3157
  %3161 = vrot.lane.b32.xlu0 %v3159, 32
  %v3162 = vpop.permute.xlu0 %3161
  %v3164 = vadd.f32 %v3154, %v3162
  %v3165 = vtanh.pop %v3164
  %3167 = vrot.lane.b32.xlu0 %v3165, 32
  %v3168 = vpop.permute.xlu0 %3167
  %v3170 = vmul.f32 %v3152, %v3168
  %v3171 = vxor.u32 %v2999, 2147483648
  %v3172 = vmul.f32 %v3171, 1.442695
  %v3173 = vpow.pop %v3172
  %v3174 = vadd.f32 %v3173, 1.0
  %v3175 = vrcp.pop %v3174
  %v3176 = vmul.f32 1.0, %v3175
  %v3177 = vtanh.pop %v2999
  %v3178 = vmul.f32 %v3176, %v2744
  %3180 = vrot.lane.b32.xlu0 %v3177, 32
  %v3181 = vpop.permute.xlu0 %3180
  %v3183 = vmul.f32 %v3176, %v3181
  %3185 = vrot.lane.b32.xlu0 %v3183, 32
  %v3186 = vpop.permute.xlu0 %3185
  %v3188 = vadd.f32 %v3178, %v3186
  %v3189 = vtanh.pop %v3188
  %3191 = vrot.lane.b32.xlu0 %v3189, 32
  %v3192 = vpop.permute.xlu0 %3191
  %v3194 = vmul.f32 %v3176, %v3192
  %v3195 = vxor.u32 %v3146, 2147483648
  %v3196 = vmul.f32 %v3195, 1.442695
  %v3197 = vpow.pop %v3196
  %v3198 = vadd.f32 %v3197, 1.0
  %v3199 = vrcp.pop %v3198
  %v3200 = vmul.f32 1.0, %v3199
  %v3201 = vtanh.pop %v3146
  %v3202 = vmul.f32 %v3200, %v2768
  %3204 = vrot.lane.b32.xlu0 %v3201, 32
  %v3205 = vpop.permute.xlu0 %3204
  %v3207 = vmul.f32 %v3200, %v3205
  %3209 = vrot.lane.b32.xlu0 %v3207, 32
  %v3210 = vpop.permute.xlu0 %3209
  %v3212 = vadd.f32 %v3202, %v3210
  %v3213 = vtanh.pop %v3212
  %3215 = vrot.lane.b32.xlu0 %v3213, 32
  %v3216 = vpop.permute.xlu0 %3215
  %v3218 = vmul.f32 %v3200, %v3216
  %3220 = vrot.lane.b32.xlu0 %v3170, 64
  %v3221 = vpop.permute.xlu0 %3220
  %v3222 = vsel %vm193, %v3221, 0
  %3224 = vmatprep.subr.mxu0 0.0
  %3225 = vmatpush1.msra.mxu0 %v26
  %3226 = vmatprep.subr.mxu0 0.0
  %3227 = vmatpush1.msra.mxu0 %v27
  %3228 = vmatprep.subr.mxu0 0.0
  %3229 = vmatpush1.msra.mxu0 %v28
  %3230 = vmatprep.subr.mxu0 0.0
  %3231 = vmatpush1.msra.mxu0 %v29
  %3232 = vmatprep.subr.mxu0 0.0
  %3233 = vmatpush1.msra.mxu0 0.0
  %3234 = vmatprep.subr.mxu0 0.0
  %3235 = vmatpush1.msra.mxu0 0.0
  %3236 = vmatprep.subr.mxu0 0.0
  %3237 = vmatpush1.msra.mxu0 0.0
  %3238 = vmatprep.subr.mxu0 0.0
  %3239 = vmatpush1.msra.mxu0 0.0
  %3240 = vmatprep.subr.mxu0 0.0
  %3241 = vmatpush1.msra.mxu0 0.0
  %3242 = vmatprep.subr.mxu0 0.0
  %3243 = vmatpush1.msra.mxu0 0.0
  %3244 = vmatprep.subr.mxu0 0.0
  %3245 = vmatpush1.msra.mxu0 0.0
  %3246 = vmatprep.subr.mxu0 0.0
  %3247 = vmatpush1.msra.mxu0 0.0
  %3248 = vmatprep.subr.mxu0 0.0
  %3249 = vmatpush1.msra.mxu0 0.0
  %3250 = vmatprep.subr.mxu0 0.0
  %3251 = vmatpush1.msra.mxu0 0.0
  %3252 = vmatprep.subr.mxu0 0.0
  %3253 = vmatpush1.msra.mxu0 0.0
  %3254 = vmatprep.subr.mxu0 0.0
  %3255 = vmatpush1.msra.mxu0 0.0
  %3256 = vmatprep.subr.mxu0 0.0
  %3257 = vmatpush1.msra.mxu0 0.0
  %3258 = vmatprep.subr.mxu0 0.0
  %3259 = vmatpush1.msra.mxu0 0.0
  %3260 = vmatprep.subr.mxu0 0.0
  %3261 = vmatpush1.msra.mxu0 0.0
  %3262 = vmatprep.subr.mxu0 0.0
  %3263 = vmatpush1.msra.mxu0 0.0
  %3264 = vmatprep.subr.mxu0 0.0
  %3265 = vmatpush1.msra.mxu0 0.0
  %3266 = vmatprep.subr.mxu0 0.0
  %3267 = vmatpush1.msra.mxu0 0.0
  %3268 = vmatprep.subr.mxu0 0.0
  %3269 = vmatpush1.msra.mxu0 0.0
  %3270 = vmatprep.subr.mxu0 0.0
  %3271 = vmatpush1.msra.mxu0 0.0
  %3272 = vmatprep.subr.mxu0 0.0
  %3273 = vmatpush1.msra.mxu0 0.0
  %3274 = vmatprep.subr.mxu0 0.0
  %3275 = vmatpush1.msra.mxu0 0.0
  %3276 = vmatprep.subr.mxu0 0.0
  %3277 = vmatpush1.msra.mxu0 0.0
  %3278 = vmatprep.subr.mxu0 0.0
  %3279 = vmatpush1.msra.mxu0 0.0
  %3280 = vmatprep.subr.mxu0 0.0
  %3281 = vmatpush1.msra.mxu0 0.0
  %3282 = vmatprep.subr.mxu0 0.0
  %3283 = vmatpush1.msra.mxu0 0.0
  %3284 = vmatprep.subr.mxu0 0.0
  %3285 = vmatpush1.msra.mxu0 0.0
  %3286 = vmatprep.subr.mxu0 0.0
  %3287 = vmatpush1.msra.mxu0 0.0
  %3288 = vmatprep.mubr.f32.mxu0 0.0
  %3289 = vmatmul.mubr.f32.gmra.mrb[0].mxu0 %v3222
  %v3290 = vpop.f32.mrb[0].mxu0
  %v3291 = vadd.f32 0.0, %v3290
  %v3292 = vpop.f32.mrb[0].mxu0
  %3293 = vdwg.mxu0
  %v3294 = vadd.f32 %v43, %v3291
  %3296 = vrot.lane.b32.xlu0 %v3194, 64
  %v3297 = vpop.permute.xlu0 %3296
  %v3298 = vsel %vm193, %v3297, 0
  %3300 = vmatprep.subr.mxu0 0.0
  %3301 = vmatpush1.msra.mxu0 %v30
  %3302 = vmatprep.subr.mxu0 0.0
  %3303 = vmatpush1.msra.mxu0 %v31
  %3304 = vmatprep.subr.mxu0 0.0
  %3305 = vmatpush1.msra.mxu0 %v32
  %3306 = vmatprep.subr.mxu0 0.0
  %3307 = vmatpush1.msra.mxu0 %v33
  %3308 = vmatprep.subr.mxu0 0.0
  %3309 = vmatpush1.msra.mxu0 0.0
  %3310 = vmatprep.subr.mxu0 0.0
  %3311 = vmatpush1.msra.mxu0 0.0
  %3312 = vmatprep.subr.mxu0 0.0
  %3313 = vmatpush1.msra.mxu0 0.0
  %3314 = vmatprep.subr.mxu0 0.0
  %3315 = vmatpush1.msra.mxu0 0.0
  %3316 = vmatprep.subr.mxu0 0.0
  %3317 = vmatpush1.msra.mxu0 0.0
  %3318 = vmatprep.subr.mxu0 0.0
  %3319 = vmatpush1.msra.mxu0 0.0
  %3320 = vmatprep.subr.mxu0 0.0
  %3321 = vmatpush1.msra.mxu0 0.0
  %3322 = vmatprep.subr.mxu0 0.0
  %3323 = vmatpush1.msra.mxu0 0.0
  %3324 = vmatprep.subr.mxu0 0.0
  %3325 = vmatpush1.msra.mxu0 0.0
  %3326 = vmatprep.subr.mxu0 0.0
  %3327 = vmatpush1.msra.mxu0 0.0
  %3328 = vmatprep.subr.mxu0 0.0
  %3329 = vmatpush1.msra.mxu0 0.0
  %3330 = vmatprep.subr.mxu0 0.0
  %3331 = vmatpush1.msra.mxu0 0.0
  %3332 = vmatprep.subr.mxu0 0.0
  %3333 = vmatpush1.msra.mxu0 0.0
  %3334 = vmatprep.subr.mxu0 0.0
  %3335 = vmatpush1.msra.mxu0 0.0
  %3336 = vmatprep.subr.mxu0 0.0
  %3337 = vmatpush1.msra.mxu0 0.0
  %3338 = vmatprep.subr.mxu0 0.0
  %3339 = vmatpush1.msra.mxu0 0.0
  %3340 = vmatprep.subr.mxu0 0.0
  %3341 = vmatpush1.msra.mxu0 0.0
  %3342 = vmatprep.subr.mxu0 0.0
  %3343 = vmatpush1.msra.mxu0 0.0
  %3344 = vmatprep.subr.mxu0 0.0
  %3345 = vmatpush1.msra.mxu0 0.0
  %3346 = vmatprep.subr.mxu0 0.0
  %3347 = vmatpush1.msra.mxu0 0.0
  %3348 = vmatprep.subr.mxu0 0.0
  %3349 = vmatpush1.msra.mxu0 0.0
  %3350 = vmatprep.subr.mxu0 0.0
  %3351 = vmatpush1.msra.mxu0 0.0
  %3352 = vmatprep.subr.mxu0 0.0
  %3353 = vmatpush1.msra.mxu0 0.0
  %3354 = vmatprep.subr.mxu0 0.0
  %3355 = vmatpush1.msra.mxu0 0.0
  %3356 = vmatprep.subr.mxu0 0.0
  %3357 = vmatpush1.msra.mxu0 0.0
  %3358 = vmatprep.subr.mxu0 0.0
  %3359 = vmatpush1.msra.mxu0 0.0
  %3360 = vmatprep.subr.mxu0 0.0
  %3361 = vmatpush1.msra.mxu0 0.0
  %3362 = vmatprep.subr.mxu0 0.0
  %3363 = vmatpush1.msra.mxu0 0.0
  %3364 = vmatprep.mubr.f32.mxu0 0.0
  %3365 = vmatmul.mubr.f32.gmra.mrb[0].mxu0 %v3298
  %v3366 = vpop.f32.mrb[0].mxu0
  %v3367 = vadd.f32 0.0, %v3366
  %v3368 = vpop.f32.mrb[0].mxu0
  %3369 = vdwg.mxu0
  %v3370 = vadd.f32 %v3294, %v3367
  %3371 = vmatprep.subr.mxu0 0.0
  %3372 = vmatpush1.msra.mxu0 %v34
  %3373 = vmatprep.subr.mxu0 0.0
  %3374 = vmatpush1.msra.mxu0 %v35
  %3375 = vmatprep.subr.mxu0 0.0
  %3376 = vmatpush1.msra.mxu0 %v36
  %3377 = vmatprep.subr.mxu0 0.0
  %3378 = vmatpush1.msra.mxu0 %v37
  %3379 = vmatprep.subr.mxu0 0.0
  %3380 = vmatpush1.msra.mxu0 0.0
  %3381 = vmatprep.subr.mxu0 0.0
  %3382 = vmatpush1.msra.mxu0 0.0
  %3383 = vmatprep.subr.mxu0 0.0
  %3384 = vmatpush1.msra.mxu0 0.0
  %3385 = vmatprep.subr.mxu0 0.0
  %3386 = vmatpush1.msra.mxu0 0.0
  %3387 = vmatprep.subr.mxu0 0.0
  %3388 = vmatpush1.msra.mxu0 0.0
  %3389 = vmatprep.subr.mxu0 0.0
  %3390 = vmatpush1.msra.mxu0 0.0
  %3391 = vmatprep.subr.mxu0 0.0
  %3392 = vmatpush1.msra.mxu0 0.0
  %3393 = vmatprep.subr.mxu0 0.0
  %3394 = vmatpush1.msra.mxu0 0.0
  %3395 = vmatprep.subr.mxu0 0.0
  %3396 = vmatpush1.msra.mxu0 0.0
  %3397 = vmatprep.subr.mxu0 0.0
  %3398 = vmatpush1.msra.mxu0 0.0
  %3399 = vmatprep.subr.mxu0 0.0
  %3400 = vmatpush1.msra.mxu0 0.0
  %3401 = vmatprep.subr.mxu0 0.0
  %3402 = vmatpush1.msra.mxu0 0.0
  %3403 = vmatprep.subr.mxu0 0.0
  %3404 = vmatpush1.msra.mxu0 0.0
  %3405 = vmatprep.subr.mxu0 0.0
  %3406 = vmatpush1.msra.mxu0 0.0
  %3407 = vmatprep.subr.mxu0 0.0
  %3408 = vmatpush1.msra.mxu0 0.0
  %3409 = vmatprep.subr.mxu0 0.0
  %3410 = vmatpush1.msra.mxu0 0.0
  %3411 = vmatprep.subr.mxu0 0.0
  %3412 = vmatpush1.msra.mxu0 0.0
  %3413 = vmatprep.subr.mxu0 0.0
  %3414 = vmatpush1.msra.mxu0 0.0
  %3415 = vmatprep.subr.mxu0 0.0
  %3416 = vmatpush1.msra.mxu0 0.0
  %3417 = vmatprep.subr.mxu0 0.0
  %3418 = vmatpush1.msra.mxu0 0.0
  %3419 = vmatprep.subr.mxu0 0.0
  %3420 = vmatpush1.msra.mxu0 0.0
  %3421 = vmatprep.subr.mxu0 0.0
  %3422 = vmatpush1.msra.mxu0 0.0
  %3423 = vmatprep.subr.mxu0 0.0
  %3424 = vmatpush1.msra.mxu0 0.0
  %3425 = vmatprep.subr.mxu0 0.0
  %3426 = vmatpush1.msra.mxu0 0.0
  %3427 = vmatprep.subr.mxu0 0.0
  %3428 = vmatpush1.msra.mxu0 0.0
  %3429 = vmatprep.subr.mxu0 0.0
  %3430 = vmatpush1.msra.mxu0 0.0
  %3431 = vmatprep.subr.mxu0 0.0
  %3432 = vmatpush1.msra.mxu0 0.0
  %3433 = vmatprep.subr.mxu0 0.0
  %3434 = vmatpush1.msra.mxu0 0.0
  %3435 = vmatprep.mubr.f32.mxu0 0.0
  %3436 = vmatmul.mubr.f32.gmra.mrb[0].mxu0 %v3298
  %v3437 = vpop.f32.mrb[0].mxu0
  %v3438 = vadd.f32 0.0, %v3437
  %v3439 = vpop.f32.mrb[0].mxu0
  %3440 = vdwg.mxu0
  %v3441 = vadd.f32 %v44, %v3438
  %3443 = vrot.lane.b32.xlu0 %v3218, 64
  %v3444 = vpop.permute.xlu0 %3443
  %v3445 = vsel %vm193, %v3444, 0
  %3447 = vmatprep.subr.mxu0 0.0
  %3448 = vmatpush1.msra.mxu0 %v38
  %3449 = vmatprep.subr.mxu0 0.0
  %3450 = vmatpush1.msra.mxu0 %v39
  %3451 = vmatprep.subr.mxu0 0.0
  %3452 = vmatpush1.msra.mxu0 %v40
  %3453 = vmatprep.subr.mxu0 0.0
  %3454 = vmatpush1.msra.mxu0 %v41
  %3455 = vmatprep.subr.mxu0 0.0
  %3456 = vmatpush1.msra.mxu0 0.0
  %3457 = vmatprep.subr.mxu0 0.0
  %3458 = vmatpush1.msra.mxu0 0.0
  %3459 = vmatprep.subr.mxu0 0.0
  %3460 = vmatpush1.msra.mxu0 0.0
  %3461 = vmatprep.subr.mxu0 0.0
  %3462 = vmatpush1.msra.mxu0 0.0
  %3463 = vmatprep.subr.mxu0 0.0
  %3464 = vmatpush1.msra.mxu0 0.0
  %3465 = vmatprep.subr.mxu0 0.0
  %3466 = vmatpush1.msra.mxu0 0.0
  %3467 = vmatprep.subr.mxu0 0.0
  %3468 = vmatpush1.msra.mxu0 0.0
  %3469 = vmatprep.subr.mxu0 0.0
  %3470 = vmatpush1.msra.mxu0 0.0
  %3471 = vmatprep.subr.mxu0 0.0
  %3472 = vmatpush1.msra.mxu0 0.0
  %3473 = vmatprep.subr.mxu0 0.0
  %3474 = vmatpush1.msra.mxu0 0.0
  %3475 = vmatprep.subr.mxu0 0.0
  %3476 = vmatpush1.msra.mxu0 0.0
  %3477 = vmatprep.subr.mxu0 0.0
  %3478 = vmatpush1.msra.mxu0 0.0
  %3479 = vmatprep.subr.mxu0 0.0
  %3480 = vmatpush1.msra.mxu0 0.0
  %3481 = vmatprep.subr.mxu0 0.0
  %3482 = vmatpush1.msra.mxu0 0.0
  %3483 = vmatprep.subr.mxu0 0.0
  %3484 = vmatpush1.msra.mxu0 0.0
  %3485 = vmatprep.subr.mxu0 0.0
  %3486 = vmatpush1.msra.mxu0 0.0
  %3487 = vmatprep.subr.mxu0 0.0
  %3488 = vmatpush1.msra.mxu0 0.0
  %3489 = vmatprep.subr.mxu0 0.0
  %3490 = vmatpush1.msra.mxu0 0.0
  %3491 = vmatprep.subr.mxu0 0.0
  %3492 = vmatpush1.msra.mxu0 0.0
  %3493 = vmatprep.subr.mxu0 0.0
  %3494 = vmatpush1.msra.mxu0 0.0
  %3495 = vmatprep.subr.mxu0 0.0
  %3496 = vmatpush1.msra.mxu0 0.0
  %3497 = vmatprep.subr.mxu0 0.0
  %3498 = vmatpush1.msra.mxu0 0.0
  %3499 = vmatprep.subr.mxu0 0.0
  %3500 = vmatpush1.msra.mxu0 0.0
  %3501 = vmatprep.subr.mxu0 0.0
  %3502 = vmatpush1.msra.mxu0 0.0
  %3503 = vmatprep.subr.mxu0 0.0
  %3504 = vmatpush1.msra.mxu0 0.0
  %3505 = vmatprep.subr.mxu0 0.0
  %3506 = vmatpush1.msra.mxu0 0.0
  %3507 = vmatprep.subr.mxu0 0.0
  %3508 = vmatpush1.msra.mxu0 0.0
  %3509 = vmatprep.subr.mxu0 0.0
  %3510 = vmatpush1.msra.mxu0 0.0
  %3511 = vmatprep.mubr.f32.mxu0 0.0
  %3512 = vmatmul.mubr.f32.gmra.mrb[0].mxu0 %v3445
  %v3513 = vpop.f32.mrb[0].mxu0
  %v3514 = vadd.f32 0.0, %v3513
  %v3515 = vpop.f32.mrb[0].mxu0
  %3516 = vdwg.mxu0
  %v3517 = vadd.f32 %v3441, %v3514
  %v3518 = vxor.u32 %v3370, 2147483648
  %v3519 = vmul.f32 %v3518, 1.442695
  %v3520 = vpow.pop %v3519
  %v3521 = vadd.f32 %v3520, 1.0
  %v3522 = vrcp.pop %v3521
  %v3523 = vmul.f32 1.0, %v3522
  %v3524 = vtanh.pop %v3370
  %v3525 = vmul.f32 %v3523, %v3188
  %3527 = vrot.lane.b32.xlu0 %v3524, 32
  %v3528 = vpop.permute.xlu0 %3527
  %v3530 = vmul.f32 %v3523, %v3528
  %3532 = vrot.lane.b32.xlu0 %v3530, 32
  %v3533 = vpop.permute.xlu0 %3532
  %v3535 = vadd.f32 %v3525, %v3533
  %v3536 = vtanh.pop %v3535
  %3538 = vrot.lane.b32.xlu0 %v3536, 32
  %v3539 = vpop.permute.xlu0 %3538
  %v3541 = vmul.f32 %v3523, %v3539
  %v3542 = vxor.u32 %v3517, 2147483648
  %v3543 = vmul.f32 %v3542, 1.442695
  %v3544 = vpow.pop %v3543
  %v3545 = vadd.f32 %v3544, 1.0
  %v3546 = vrcp.pop %v3545
  %v3547 = vmul.f32 1.0, %v3546
  %v3548 = vtanh.pop %v3517
  %v3549 = vmul.f32 %v3547, %v3212
  %3551 = vrot.lane.b32.xlu0 %v3548, 32
  %v3552 = vpop.permute.xlu0 %3551
  %v3554 = vmul.f32 %v3547, %v3552
  %3556 = vrot.lane.b32.xlu0 %v3554, 32
  %v3557 = vpop.permute.xlu0 %3556
  %v3559 = vadd.f32 %v3549, %v3557
  %v3560 = vtanh.pop %v3559
  %3562 = vrot.lane.b32.xlu0 %v3560, 32
  %v3563 = vpop.permute.xlu0 %3562
  %v3565 = vmul.f32 %v3547, %v3563
  %3567 = vrot.lane.b32.xlu0 %v3541, 64
  %v3568 = vpop.permute.xlu0 %3567
  %v3569 = vsel %vm193, %v3568, 0
  %3571 = vmatprep.subr.mxu0 0.0
  %3572 = vmatpush1.msra.mxu0 %v34
  %3573 = vmatprep.subr.mxu0 0.0
  %3574 = vmatpush1.msra.mxu0 %v35
  %3575 = vmatprep.subr.mxu0 0.0
  %3576 = vmatpush1.msra.mxu0 %v36
  %3577 = vmatprep.subr.mxu0 0.0
  %3578 = vmatpush1.msra.mxu0 %v37
  %3579 = vmatprep.subr.mxu0 0.0
  %3580 = vmatpush1.msra.mxu0 0.0
  %3581 = vmatprep.subr.mxu0 0.0
  %3582 = vmatpush1.msra.mxu0 0.0
  %3583 = vmatprep.subr.mxu0 0.0
  %3584 = vmatpush1.msra.mxu0 0.0
  %3585 = vmatprep.subr.mxu0 0.0
  %3586 = vmatpush1.msra.mxu0 0.0
  %3587 = vmatprep.subr.mxu0 0.0
  %3588 = vmatpush1.msra.mxu0 0.0
  %3589 = vmatprep.subr.mxu0 0.0
  %3590 = vmatpush1.msra.mxu0 0.0
  %3591 = vmatprep.subr.mxu0 0.0
  %3592 = vmatpush1.msra.mxu0 0.0
  %3593 = vmatprep.subr.mxu0 0.0
  %3594 = vmatpush1.msra.mxu0 0.0
  %3595 = vmatprep.subr.mxu0 0.0
  %3596 = vmatpush1.msra.mxu0 0.0
  %3597 = vmatprep.subr.mxu0 0.0
  %3598 = vmatpush1.msra.mxu0 0.0
  %3599 = vmatprep.subr.mxu0 0.0
  %3600 = vmatpush1.msra.mxu0 0.0
  %3601 = vmatprep.subr.mxu0 0.0
  %3602 = vmatpush1.msra.mxu0 0.0
  %3603 = vmatprep.subr.mxu0 0.0
  %3604 = vmatpush1.msra.mxu0 0.0
  %3605 = vmatprep.subr.mxu0 0.0
  %3606 = vmatpush1.msra.mxu0 0.0
  %3607 = vmatprep.subr.mxu0 0.0
  %3608 = vmatpush1.msra.mxu0 0.0
  %3609 = vmatprep.subr.mxu0 0.0
  %3610 = vmatpush1.msra.mxu0 0.0
  %3611 = vmatprep.subr.mxu0 0.0
  %3612 = vmatpush1.msra.mxu0 0.0
  %3613 = vmatprep.subr.mxu0 0.0
  %3614 = vmatpush1.msra.mxu0 0.0
  %3615 = vmatprep.subr.mxu0 0.0
  %3616 = vmatpush1.msra.mxu0 0.0
  %3617 = vmatprep.subr.mxu0 0.0
  %3618 = vmatpush1.msra.mxu0 0.0
  %3619 = vmatprep.subr.mxu0 0.0
  %3620 = vmatpush1.msra.mxu0 0.0
  %3621 = vmatprep.subr.mxu0 0.0
  %3622 = vmatpush1.msra.mxu0 0.0
  %3623 = vmatprep.subr.mxu0 0.0
  %3624 = vmatpush1.msra.mxu0 0.0
  %3625 = vmatprep.subr.mxu0 0.0
  %3626 = vmatpush1.msra.mxu0 0.0
  %3627 = vmatprep.subr.mxu0 0.0
  %3628 = vmatpush1.msra.mxu0 0.0
  %3629 = vmatprep.subr.mxu0 0.0
  %3630 = vmatpush1.msra.mxu0 0.0
  %3631 = vmatprep.subr.mxu0 0.0
  %3632 = vmatpush1.msra.mxu0 0.0
  %3633 = vmatprep.subr.mxu0 0.0
  %3634 = vmatpush1.msra.mxu0 0.0
  %3635 = vmatprep.mubr.f32.mxu0 0.0
  %3636 = vmatmul.mubr.f32.gmra.mrb[0].mxu0 %v3569
  %v3637 = vpop.f32.mrb[0].mxu0
  %v3638 = vadd.f32 0.0, %v3637
  %v3639 = vpop.f32.mrb[0].mxu0
  %3640 = vdwg.mxu0
  %v3641 = vadd.f32 %v44, %v3638
  %3643 = vrot.lane.b32.xlu0 %v3565, 64
  %v3644 = vpop.permute.xlu0 %3643
  %v3645 = vsel %vm193, %v3644, 0
  %3647 = vmatprep.subr.mxu0 0.0
  %3648 = vmatpush1.msra.mxu0 %v38
  %3649 = vmatprep.subr.mxu0 0.0
  %3650 = vmatpush1.msra.mxu0 %v39
  %3651 = vmatprep.subr.mxu0 0.0
  %3652 = vmatpush1.msra.mxu0 %v40
  %3653 = vmatprep.subr.mxu0 0.0
  %3654 = vmatpush1.msra.mxu0 %v41
  %3655 = vmatprep.subr.mxu0 0.0
  %3656 = vmatpush1.msra.mxu0 0.0
  %3657 = vmatprep.subr.mxu0 0.0
  %3658 = vmatpush1.msra.mxu0 0.0
  %3659 = vmatprep.subr.mxu0 0.0
  %3660 = vmatpush1.msra.mxu0 0.0
  %3661 = vmatprep.subr.mxu0 0.0
  %3662 = vmatpush1.msra.mxu0 0.0
  %3663 = vmatprep.subr.mxu0 0.0
  %3664 = vmatpush1.msra.mxu0 0.0
  %3665 = vmatprep.subr.mxu0 0.0
  %3666 = vmatpush1.msra.mxu0 0.0
  %3667 = vmatprep.subr.mxu0 0.0
  %3668 = vmatpush1.msra.mxu0 0.0
  %3669 = vmatprep.subr.mxu0 0.0
  %3670 = vmatpush1.msra.mxu0 0.0
  %3671 = vmatprep.subr.mxu0 0.0
  %3672 = vmatpush1.msra.mxu0 0.0
  %3673 = vmatprep.subr.mxu0 0.0
  %3674 = vmatpush1.msra.mxu0 0.0
  %3675 = vmatprep.subr.mxu0 0.0
  %3676 = vmatpush1.msra.mxu0 0.0
  %3677 = vmatprep.subr.mxu0 0.0
  %3678 = vmatpush1.msra.mxu0 0.0
  %3679 = vmatprep.subr.mxu0 0.0
  %3680 = vmatpush1.msra.mxu0 0.0
  %3681 = vmatprep.subr.mxu0 0.0
  %3682 = vmatpush1.msra.mxu0 0.0
  %3683 = vmatprep.subr.mxu0 0.0
  %3684 = vmatpush1.msra.mxu0 0.0
  %3685 = vmatprep.subr.mxu0 0.0
  %3686 = vmatpush1.msra.mxu0 0.0
  %3687 = vmatprep.subr.mxu0 0.0
  %3688 = vmatpush1.msra.mxu0 0.0
  %3689 = vmatprep.subr.mxu0 0.0
  %3690 = vmatpush1.msra.mxu0 0.0
  %3691 = vmatprep.subr.mxu0 0.0
  %3692 = vmatpush1.msra.mxu0 0.0
  %3693 = vmatprep.subr.mxu0 0.0
  %3694 = vmatpush1.msra.mxu0 0.0
  %3695 = vmatprep.subr.mxu0 0.0
  %3696 = vmatpush1.msra.mxu0 0.0
  %3697 = vmatprep.subr.mxu0 0.0
  %3698 = vmatpush1.msra.mxu0 0.0
  %3699 = vmatprep.subr.mxu0 0.0
  %3700 = vmatpush1.msra.mxu0 0.0
  %3701 = vmatprep.subr.mxu0 0.0
  %3702 = vmatpush1.msra.mxu0 0.0
  %3703 = vmatprep.subr.mxu0 0.0
  %3704 = vmatpush1.msra.mxu0 0.0
  %3705 = vmatprep.subr.mxu0 0.0
  %3706 = vmatpush1.msra.mxu0 0.0
  %3707 = vmatprep.subr.mxu0 0.0
  %3708 = vmatpush1.msra.mxu0 0.0
  %3709 = vmatprep.subr.mxu0 0.0
  %3710 = vmatpush1.msra.mxu0 0.0
  %3711 = vmatprep.mubr.f32.mxu0 0.0
  %3712 = vmatmul.mubr.f32.gmra.mrb[0].mxu0 %v3645
  %v3713 = vpop.f32.mrb[0].mxu0
  %v3714 = vadd.f32 0.0, %v3713
  %v3715 = vpop.f32.mrb[0].mxu0
  %3716 = vdwg.mxu0
  %v3717 = vadd.f32 %v3641, %v3714
  %v3718 = vxor.u32 %v3717, 2147483648
  %v3719 = vmul.f32 %v3718, 1.442695
  %v3720 = vpow.pop %v3719
  %v3721 = vadd.f32 %v3720, 1.0
  %v3722 = vrcp.pop %v3721
  %v3723 = vmul.f32 1.0, %v3722
  %v3724 = vtanh.pop %v3717
  %v3725 = vmul.f32 %v3723, %v3559
  %3727 = vrot.lane.b32.xlu0 %v3724, 32
  %v3728 = vpop.permute.xlu0 %3727
  %v3730 = vmul.f32 %v3723, %v3728
  %3732 = vrot.lane.b32.xlu0 %v3730, 32
  %v3733 = vpop.permute.xlu0 %3732
  %v3735 = vadd.f32 %v3725, %v3733
  %v3736 = vtanh.pop %v3735
  %3738 = vrot.lane.b32.xlu0 %v3736, 32
  %v3739 = vpop.permute.xlu0 %3738
  %v3741 = vmul.f32 %v3723, %v3739
  %v3742 = vld [vmem:[%s3] sm:$0xff]
  %v3743 = vld [vmem:[%s3 + $0x8] sm:$0xff]
  %v3744 = vld [vmem:[%s3 + $0x10] sm:$0xff]
  %v3745 = vld [vmem:[%s3 + $0x18] sm:$0xff]
  %v3746 = vld [vmem:[%s4] sm:$0x1]
  %v3748 = vlaneseq
  %v3749 = vshrl.u32 %v3748, 7
  %v3750 = vsub.s32 0, %v3749
  %v3751 = vrot.slane %v3746, %v3750
  %3754 = vrot.lane.b32.xlu0 %v3741, 64
  %v3755 = vpop.permute.xlu0 %3754
  %v3756 = vsel %vm193, %v3755, 0
  %3758 = vmatprep.subr.mxu0 0.0
  %3759 = vmatpush1.msra.mxu0 %v3742
  %3760 = vmatprep.subr.mxu0 0.0
  %3761 = vmatpush1.msra.mxu0 %v3743
  %3762 = vmatprep.subr.mxu0 0.0
  %3763 = vmatpush1.msra.mxu0 %v3744
  %3764 = vmatprep.subr.mxu0 0.0
  %3765 = vmatpush1.msra.mxu0 %v3745
  %3766 = vmatprep.subr.mxu0 0.0
  %3767 = vmatpush1.msra.mxu0 0.0
  %3768 = vmatprep.subr.mxu0 0.0
  %3769 = vmatpush1.msra.mxu0 0.0
  %3770 = vmatprep.subr.mxu0 0.0
  %3771 = vmatpush1.msra.mxu0 0.0
  %3772 = vmatprep.subr.mxu0 0.0
  %3773 = vmatpush1.msra.mxu0 0.0
  %3774 = vmatprep.subr.mxu0 0.0
  %3775 = vmatpush1.msra.mxu0 0.0
  %3776 = vmatprep.subr.mxu0 0.0
  %3777 = vmatpush1.msra.mxu0 0.0
  %3778 = vmatprep.subr.mxu0 0.0
  %3779 = vmatpush1.msra.mxu0 0.0
  %3780 = vmatprep.subr.mxu0 0.0
  %3781 = vmatpush1.msra.mxu0 0.0
  %3782 = vmatprep.subr.mxu0 0.0
  %3783 = vmatpush1.msra.mxu0 0.0
  %3784 = vmatprep.subr.mxu0 0.0
  %3785 = vmatpush1.msra.mxu0 0.0
  %3786 = vmatprep.subr.mxu0 0.0
  %3787 = vmatpush1.msra.mxu0 0.0
  %3788 = vmatprep.subr.mxu0 0.0
  %3789 = vmatpush1.msra.mxu0 0.0
  %3790 = vmatprep.subr.mxu0 0.0
  %3791 = vmatpush1.msra.mxu0 0.0
  %3792 = vmatprep.subr.mxu0 0.0
  %3793 = vmatpush1.msra.mxu0 0.0
  %3794 = vmatprep.subr.mxu0 0.0
  %3795 = vmatpush1.msra.mxu0 0.0
  %3796 = vmatprep.subr.mxu0 0.0
  %3797 = vmatpush1.msra.mxu0 0.0
  %3798 = vmatprep.subr.mxu0 0.0
  %3799 = vmatpush1.msra.mxu0 0.0
  %3800 = vmatprep.subr.mxu0 0.0
  %3801 = vmatpush1.msra.mxu0 0.0
  %3802 = vmatprep.subr.mxu0 0.0
  %3803 = vmatpush1.msra.mxu0 0.0
  %3804 = vmatprep.subr.mxu0 0.0
  %3805 = vmatpush1.msra.mxu0 0.0
  %3806 = vmatprep.subr.mxu0 0.0
  %3807 = vmatpush1.msra.mxu0 0.0
  %3808 = vmatprep.subr.mxu0 0.0
  %3809 = vmatpush1.msra.mxu0 0.0
  %3810 = vmatprep.subr.mxu0 0.0
  %3811 = vmatpush1.msra.mxu0 0.0
  %3812 = vmatprep.subr.mxu0 0.0
  %3813 = vmatpush1.msra.mxu0 0.0
  %3814 = vmatprep.subr.mxu0 0.0
  %3815 = vmatpush1.msra.mxu0 0.0
  %3816 = vmatprep.subr.mxu0 0.0
  %3817 = vmatpush1.msra.mxu0 0.0
  %3818 = vmatprep.subr.mxu0 0.0
  %3819 = vmatpush1.msra.mxu0 0.0
  %3820 = vmatprep.subr.mxu0 0.0
  %3821 = vmatpush1.msra.mxu0 0.0
  %3822 = vmatprep.mubr.f32.mxu0 0.0
  %3823 = vmatmul.mubr.f32.gmra.mrb[0].mxu0 %v3756
  %v3824 = vpop.f32.mrb[0].mxu0
  %v3825 = vadd.f32 %v3751, %v3824
  %v3826 = vpop.f32.mrb[0].mxu0
  %3827 = vdwg.mxu0
  %vm3828 = vcmask 15360
  %v3829 = vsel %vm3828, %v3825, -inf
  %3830 = vmax.xlane.f32.xlu0 %v3829
  %v3831 = vpop.xlane.xlu0 %3830
  %v3832 = vsub.f32 %v3825, %v3831
  %v3833 = vmul.f32 %v3832, 1.442695
  %v3834 = vpow.pop %v3833
  %v3835 = vsel %vm3828, %v3834, 0.0
  %3836 = vadd.xlane.f32.xlu0 %v3835
  %v3837 = vpop.xlane.xlu0 %3836
  %v3838 = vrcp.pop %v3837
  %v3839 = vmul.f32 %v3834, %v3838
  %3840 = vst.msk [vmem:[%s5] sm:$0xff] %vm3828, %v3839
  // Predicated region
  $region22: #{my_lstm_forward.1} parent=0 // pred_check
    _
  $region23: #{my_lstm_forward.1} parent=0 // pred_check_branch
    %3842 = sbr.rel (0) target = $region25
  $region24: #{my_lstm_forward.1} parent=0 // pred_region
    _
  $region25: #{my_lstm_forward.1} parent=0 // pred_fallthru
    _
  // Predicated region
  $region26: #{my_lstm_forward.1} parent=0 // pred_check
    _
  $region27: #{my_lstm_forward.1} parent=0 // pred_check_branch
    %3844 = sbr.rel (0) target = $region29
  $region28: #{my_lstm_forward.1} parent=0 // pred_region
    _
  $region29: #{my_lstm_forward.1} parent=0 // pred_fallthru
    _

</llo_original>
